<compile_context>
chip_gen: v7x
topology: tpu7x:2x2x1
jax: 0.10.0
libtpu: 0.0.40
codegen_flags: <defaults>
</compile_context>

<pallas_src>
import jax
import jax.numpy as jnp
from jax.experimental import pallas as pl
from jax.experimental.pallas import tpu as pltpu

_LANE = 128
_VMEM_LIMIT = 48 * 1024 * 1024     # fits v7x's 64 MiB physical VMEM with headroom
_BN_EPS = 1e-5


def _round_up(x, m):
    return ((x + m - 1) // m) * m


# ---------------------------------------------------------------------------
# Pallas kernels
# ---------------------------------------------------------------------------
def _matmul_stats_kernel(p_ref, w_ref, y_ref, s_ref):
    """(tm x K) @ (K x Coutp) MXU tile + per-column sum / sum-of-squares."""
    y = jnp.dot(p_ref[0], w_ref[0], preferred_element_type=jnp.float32)
    y_ref[0] = y
    s_ref[0, 0] = jnp.concatenate(
        [jnp.sum(y, axis=0, keepdims=True),
         jnp.sum(y * y, axis=0, keepdims=True)], axis=0)


def _matmul_stats(patches, weights, tm):
    """patches: (G, Mp, K) bf16, weights: (G, K, Coutp) bf16.
    Returns y: (G, Mp, Coutp) f32 and per-tile stats: (G, Mt, 2, Coutp) f32."""
    G, Mp, K = patches.shape
    Coutp = weights.shape[2]
    Mt = Mp // tm

    flops = 2 * G * Mp * K * Coutp
    bytes_accessed = (patches.size * 2 + weights.size * 2
                      + G * Mp * Coutp * 4 + G * Mt * 2 * Coutp * 4)

    return pl.pallas_call(
        _matmul_stats_kernel,
        grid=(G, Mt),
        in_specs=[
            pl.BlockSpec((1, tm, K), lambda g, m: (g, m, 0)),
            # weight block index depends only on g -> resident across M tiles
            pl.BlockSpec((1, K, Coutp), lambda g, m: (g, 0, 0)),
        ],
        out_specs=(
            pl.BlockSpec((1, tm, Coutp), lambda g, m: (g, m, 0)),
            pl.BlockSpec((1, 1, 2, Coutp), lambda g, m: (g, m, 0, 0)),
        ),
        out_shape=(
            jax.ShapeDtypeStruct((G, Mp, Coutp), jnp.float32),
            jax.ShapeDtypeStruct((G, Mt, 2, Coutp), jnp.float32),
        ),
        compiler_params=pltpu.CompilerParams(
            dimension_semantics=("parallel", "parallel"),
            vmem_limit_bytes=_VMEM_LIMIT),
        cost_estimate=pl.CostEstimate(flops=flops, transcendentals=0,
                                      bytes_accessed=bytes_accessed),
    )(patches, weights)


def _make_affine_act_kernel(act):
    def kernel(y_ref, s_ref, b_ref, o_ref):
        z = y_ref[0] * s_ref[...] + b_ref[...]
        if act == "relu":
            z = jnp.maximum(z, 0.0)
        else:
            z = jnp.tanh(z)
        o_ref[0] = z.astype(o_ref.dtype)
    return kernel


def _affine_act(y, scale, shift, tm, act, out_dtype):
    """Tiled per-column affine + activation: out = act(y * scale + shift)."""
    G, Mp, Coutp = y.shape
    Mt = Mp // tm
    return pl.pallas_call(
        _make_affine_act_kernel(act),
        grid=(G, Mt),
        in_specs=[
            pl.BlockSpec((1, tm, Coutp), lambda g, m: (g, m, 0)),
            pl.BlockSpec((1, Coutp), lambda g, m: (0, 0)),
            pl.BlockSpec((1, Coutp), lambda g, m: (0, 0)),
        ],
        out_specs=pl.BlockSpec((1, tm, Coutp), lambda g, m: (g, m, 0)),
        out_shape=jax.ShapeDtypeStruct((G, Mp, Coutp), out_dtype),
        compiler_params=pltpu.CompilerParams(
            dimension_semantics=("parallel", "parallel"),
            vmem_limit_bytes=_VMEM_LIMIT),
    )(y, scale.reshape(1, Coutp).astype(jnp.float32),
      shift.reshape(1, Coutp).astype(jnp.float32))


# ---------------------------------------------------------------------------
# Generic "patch GEMM + BN/act" driver (wrapper glue; hot loops are in Pallas)
# ---------------------------------------------------------------------------
def _run_conv_core(patches_g, wmats_g, act, scale_shift_fn, out_dtype):
    """patches_g: (G, M, K); wmats_g: (G, K, Ccols) -> (G, M, Ccols)."""
    G, M, K = patches_g.shape
    Ccols = wmats_g.shape[2]
    Coutp = _round_up(max(Ccols, _LANE), _LANE)          # lane-dense output
    tm = 512 if M >= 512 else _round_up(M, 8)            # M-tile (512 rows max)
    Mp = _round_up(M, tm)

    patches = patches_g.astype(jnp.bfloat16)
    if Mp > M:
        patches = jnp.pad(patches, ((0, 0), (0, Mp - M), (0, 0)))
    wm = wmats_g.astype(jnp.bfloat16)
    if Coutp > Ccols:
        wm = jnp.pad(wm, ((0, 0), (0, 0), (0, Coutp - Ccols)))

    y, stats = _matmul_stats(patches, wm, tm)
    scale, shift = scale_shift_fn(stats, Ccols, Coutp)   # f32 (Coutp,) each
    out = _affine_act(y, scale, shift, tm, act, out_dtype)
    return out[:, :M, :Ccols]


def _bn_scale_shift_fn(gamma, beta, count):
    """Per-column == per-channel BN (training-mode batch stats, biased var)."""
    def fn(stats, ccols, coutp):
        s = jnp.sum(stats, axis=(0, 1))                  # (2, Coutp)
        mean = s[0, :ccols] / count
        var = s[1, :ccols] / count - mean * mean
        scale_c = gamma.astype(jnp.float32) * jax.lax.rsqrt(var + _BN_EPS)
        shift_c = beta.astype(jnp.float32) - mean * scale_c
        return (jnp.pad(scale_c, (0, coutp - ccols)),
                jnp.pad(shift_c, (0, coutp - ccols)))
    return fn


def _identity_scale_shift_fn(stats, ccols, coutp):
    del stats, ccols
    return jnp.ones((coutp,), jnp.float32), jnp.zeros((coutp,), jnp.float32)


def _im2col_nhwc(xp, kh, kw, ho, wo):
    """xp: (N, Hp, Wp, C) -> (N*ho*wo, kh*kw*C); column order (kh, kw, C)."""
    n, _, _, c = xp.shape
    cols = [xp[:, p:p + ho, q:q + wo, :] for p in range(kh) for q in range(kw)]
    pat = jnp.concatenate(cols, axis=-1)
    return pat.reshape(n * ho * wo, kh * kw * c)


# ---------------------------------------------------------------------------
# Layers (all NHWC)
# ---------------------------------------------------------------------------
def _layer_initial_convt(p, x):
    """ConvTranspose2d(nz, cngf, 4, 1, 0) on a 1x1 input == dense matmul,
    fused with BN (batch stats) + ReLU."""
    n = x.shape[0]
    w_t = p["w"]                                         # (nz, cngf, 4, 4)
    nz, cngf, kh, kw = w_t.shape
    spatial = kh * kw
    xflat = x.reshape(n, nz)
    # columns ordered (oy, ox, co)
    wfc = w_t.transpose(0, 2, 3, 1).reshape(nz, spatial * cngf)

    count = n * spatial
    gamma = p["gamma"].astype(jnp.float32)
    beta = p["beta"].astype(jnp.float32)

    def scale_shift_fn(stats, ccols, coutp):
        s = jnp.sum(stats, axis=(0, 1))                  # (2, Coutp)
        cs = s[:, :ccols].reshape(2, spatial, cngf).sum(axis=1)
        mean = cs[0] / count
        var = cs[1] / count - mean * mean
        scale_c = gamma * jax.lax.rsqrt(var + _BN_EPS)
        shift_c = beta - mean * scale_c
        return (jnp.pad(jnp.tile(scale_c, spatial), (0, coutp - ccols)),
                jnp.pad(jnp.tile(shift_c, spatial), (0, coutp - ccols)))

    out = _run_conv_core(xflat[None], wfc[None], "relu", scale_shift_fn,
                         jnp.bfloat16)
    return out[0].reshape(n, kh, kw, cngf)


def _layer_convt_s2(p, x, act):
    """ConvTranspose2d(Cin, Cout, 4, 2, 1) via exact sub-pixel (4-phase)
    decomposition (no zero-insertion), fused with BN+ReLU or Tanh."""
    n, h, w, cin = x.shape
    w_t = p["w"]                                         # (Cin, Cout, 4, 4)
    cout = w_t.shape[1]
    # forward-correlation weight: wf[co, ci, p, q] = W_t[ci, co, 3-p, 3-q]
    wf = jnp.flip(w_t, axis=(2, 3)).transpose(1, 0, 2, 3)
    xp = jnp.pad(x, ((0, 0), (1, 1), (1, 1), (0, 0)))

    patches, wmats = [], []
    for r in range(2):
        for c in range(2):
            win = xp[:, r:r + h + 1, c:c + w + 1, :]
            patches.append(_im2col_nhwc(win, 2, 2, h, w))        # (M, 4*Cin)
            wsub = wf[:, :, r::2, c::2]                          # (Cout,Cin,2,2)
            wmats.append(wsub.transpose(2, 3, 1, 0).reshape(4 * cin, cout))
    patches = jnp.stack(patches, axis=0)                         # (4, M, 4*Cin)
    wmats = jnp.stack(wmats, axis=0)                             # (4, 4*Cin, Cout)

    m = n * h * w
    if act == "relu":
        scale_shift_fn = _bn_scale_shift_fn(p["gamma"], p["beta"], 4 * m)
        out_dtype = jnp.bfloat16
    else:  # tanh (final layer, no BN)
        scale_shift_fn = _identity_scale_shift_fn
        out_dtype = jnp.float32

    out = _run_conv_core(patches, wmats, act, scale_shift_fn, out_dtype)
    # interleave the 4 phases into the 2x-upsampled grid
    out = out.reshape(2, 2, n, h, w, cout).transpose(2, 3, 0, 4, 1, 5)
    return out.reshape(n, 2 * h, 2 * w, cout)


def _layer_conv3(p, x):
    """Conv2d(C, C, 3, 1, 1) + BN + ReLU (extra layers)."""
    n, h, w, cin = x.shape
    wc = p["w"]                                          # (Cout, Cin, 3, 3)
    cout, _, kh, kw = wc.shape
    xp = jnp.pad(x, ((0, 0), (1, 1), (1, 1), (0, 0)))
    patches = _im2col_nhwc(xp, kh, kw, h, w)[None]                # (1, M, 9*Cin)
    wmat = wc.transpose(2, 3, 1, 0).reshape(kh * kw * cin, cout)[None]
    scale_shift_fn = _bn_scale_shift_fn(p["gamma"], p["beta"], n * h * w)
    out = _run_conv_core(patches, wmat, "relu", scale_shift_fn, jnp.bfloat16)
    return out[0].reshape(n, h, w, cout)


# ---------------------------------------------------------------------------
# Decoder: static config + array params (jit-friendly)
# ---------------------------------------------------------------------------
def build_decoder(key, imageSize, nz, nc, ngf, n_extra_layers=0):
    assert imageSize % 16 == 0, "imageSize has to be a multiple of 16"
    cngf, tsize = ngf // 2, 4
    while tsize != imageSize:
        cngf *= 2
        tsize *= 2

    keys = iter(jax.random.split(key, 128))

    def rnd(shape, scale=0.05):
        return scale * jax.random.normal(next(keys), shape, jnp.float32)

    cfg, params = [], []
    # initial ConvTranspose2d(nz, cngf, 4, 1, 0) + BN + ReLU
    cfg.append({"kind": "initial", "act": "relu"})
    params.append({"w": rnd((nz, cngf, 4, 4)),
                   "gamma": 1.0 + rnd((cngf,), 0.1),
                   "beta": rnd((cngf,), 0.1)})
    csize = 4
    while csize < imageSize // 2:
        # pyramid ConvTranspose2d(cngf, cngf//2, 4, 2, 1) + BN + ReLU
        cfg.append({"kind": "convt_s2", "act": "relu"})
        params.append({"w": rnd((cngf, cngf // 2, 4, 4)),
                       "gamma": 1.0 + rnd((cngf // 2,), 0.1),
                       "beta": rnd((cngf // 2,), 0.1)})
        cngf //= 2
        csize *= 2
    for _ in range(n_extra_layers):
        # extra Conv2d(cngf, cngf, 3, 1, 1) + BN + ReLU
        cfg.append({"kind": "conv3", "act": "relu"})
        params.append({"w": rnd((cngf, cngf, 3, 3)),
                       "gamma": 1.0 + rnd((cngf,), 0.1),
                       "beta": rnd((cngf,), 0.1)})
    # final ConvTranspose2d(cngf, nc, 4, 2, 1) + Tanh
    cfg.append({"kind": "convt_s2", "act": "tanh"})
    params.append({"w": rnd((cngf, nc, 4, 4))})
    return tuple(cfg), params


def make_decoder_forward(cfg):
    """cfg (layer kinds / activations) is static via closure; only arrays are
    jit arguments, fixing the previous 'str is not an abstract array' error."""
    def forward(params, x_nchw):
        x = jnp.transpose(x_nchw, (0, 2, 3, 1)).astype(jnp.bfloat16)  # NHWC
        for c, p in zip(cfg, params):
            if c["kind"] == "initial":
                x = _layer_initial_convt(p, x)
            elif c["kind"] == "convt_s2":
                x = _layer_convt_s2(p, x, c["act"])
            else:  # "conv3"
                x = _layer_conv3(p, x)
        return jnp.transpose(x, (0, 3, 1, 2)).astype(jnp.float32)     # NCHW
    return jax.jit(forward)


if __name__ == "__main__":
    imageSize, nz, nc, ngf = 16, 8, 3, 8
    key = jax.random.PRNGKey(0)
    k_params, k_x = jax.random.split(key)

    cfg, params = build_decoder(k_params, imageSize, nz, nc, ngf,
                                n_extra_layers=1)
    decoder_forward = make_decoder_forward(cfg)

    x = jax.random.normal(k_x, (2, nz, 1, 1), jnp.float32)   # NCHW latent
    y = decoder_forward(params, x)
    jax.block_until_ready(y)

    assert y.shape == (2, nc, imageSize, imageSize), y.shape
    assert bool(jnp.all(jnp.isfinite(y)))
    assert bool(jnp.all(jnp.abs(y) <= 1.0 + 1e-6))  # tanh output range
    print("KERNEL_OK")
</pallas_src>

<mosaic_0001>
module attributes {stable_mosaic.version = 11 : i64} {
  func.func @_matmul_stats_kernel(%arg0: i32, %arg1: i32, %arg2: memref<1x8x8xbf16, #tpu.memory_space<vmem>>, %arg3: memref<1x8x256xbf16, #tpu.memory_space<vmem>>, %arg4: memref<1x8x256xf32, #tpu.memory_space<vmem>>, %arg5: memref<1x1x2x256xf32, #tpu.memory_space<vmem>>) attributes {dimension_semantics = [#tpu.dimension_semantics<parallel>, #tpu.dimension_semantics<parallel>], iteration_bounds = array<i64: 1, 1>, scalar_prefetch = 0 : i64, scratch_operands = 0 : i64, tpu.core_type = #tpu.core_type<tc>, window_params = [{transform_indices = @transform_0, window_bounds = array<i64: 1, 8, 8>}, {transform_indices = @transform_1, window_bounds = array<i64: 1, 8, 256>}, {transform_indices = @transform_2, window_bounds = array<i64: 1, 8, 256>}, {transform_indices = @transform_3, window_bounds = array<i64: 1, 1, 2, 256>}]} {
    %c0 = arith.constant 0 : index
    %c0_0 = arith.constant 0 : index
    %c0_1 = arith.constant 0 : index
    %0 = vector.load %arg2[%c0, %c0_0, %c0_1] : memref<1x8x8xbf16, #tpu.memory_space<vmem>>, vector<1x8x8xbf16>
    %1 = vector.shape_cast %0 : vector<1x8x8xbf16> to vector<8x8xbf16>
    %c0_2 = arith.constant 0 : index
    %c0_3 = arith.constant 0 : index
    %c0_4 = arith.constant 0 : index
    %2 = vector.load %arg3[%c0_2, %c0_3, %c0_4] : memref<1x8x256xbf16, #tpu.memory_space<vmem>>, vector<1x8x256xbf16>
    %3 = vector.shape_cast %2 : vector<1x8x256xbf16> to vector<8x256xbf16>
    %cst = arith.constant dense<0.000000e+00> : vector<8x256xf32>
    %4 = tpu.matmul %1, %3, %cst {dimension_numbers = #tpu.dot_dimension_numbers<[1], [0], [0], [1], [0, 0, 1, 1], [], []>} : vector<8x8xbf16>, vector<8x256xbf16>, vector<8x256xf32> -> vector<8x256xf32>
    %c0_5 = arith.constant 0 : index
    %c0_6 = arith.constant 0 : index
    %c0_7 = arith.constant 0 : index
    %5 = vector.load %arg4[%c0_5, %c0_6, %c0_7] : memref<1x8x256xf32, #tpu.memory_space<vmem>>, vector<1x8x256xf32>
    %6 = vector.shape_cast %5 : vector<1x8x256xf32> to vector<8x256xf32>
    %7 = vector.shape_cast %4 : vector<8x256xf32> to vector<1x8x256xf32>
    tpu.vector_store %arg4[%c0_5, %c0_6, %c0_7], %7 {strides = array<i32>} : memref<1x8x256xf32, #tpu.memory_space<vmem>>, vector<1x8x256xf32>,
    %cst_8 = arith.constant dense<0.000000e+00> : vector<256xf32>
    %8 = vector.multi_reduction <add>, %4, %cst_8 [0] : vector<8x256xf32> to vector<256xf32>
    %9 = vector.shape_cast %8 : vector<256xf32> to vector<1x256xf32>
    %10 = arith.mulf %4, %4 : vector<8x256xf32>
    %cst_9 = arith.constant dense<0.000000e+00> : vector<256xf32>
    %11 = vector.multi_reduction <add>, %10, %cst_9 [0] : vector<8x256xf32> to vector<256xf32>
    %12 = vector.shape_cast %11 : vector<256xf32> to vector<1x256xf32>
    %13 = tpu.concatenate %9, %12 in 0 : vector<1x256xf32>, vector<1x256xf32> -> vector<2x256xf32>
    %c0_10 = arith.constant 0 : index
    %c0_11 = arith.constant 0 : index
    %c0_12 = arith.constant 0 : index
    %c0_13 = arith.constant 0 : index
    %14 = vector.load %arg5[%c0_10, %c0_11, %c0_12, %c0_13] : memref<1x1x2x256xf32, #tpu.memory_space<vmem>>, vector<1x1x2x256xf32>
    %15 = vector.shape_cast %14 : vector<1x1x2x256xf32> to vector<2x256xf32>
    %16 = vector.shape_cast %13 : vector<2x256xf32> to vector<1x1x2x256xf32>
    tpu.vector_store %arg5[%c0_10, %c0_11, %c0_12, %c0_13], %16 {strides = array<i32>} : memref<1x1x2x256xf32, #tpu.memory_space<vmem>>, vector<1x1x2x256xf32>,
    return
  }
  func.func @transform_0(%arg0: i32, %arg1: i32) -> (i32, i32, i32) {
    %c0_i32 = arith.constant 0 : i32
    %c0_i32_0 = arith.constant 0 : i32
    return %arg0, %arg1, %c0_i32 : i32, i32, i32
  }
  func.func @transform_1(%arg0: i32, %arg1: i32) -> (i32, i32, i32) {
    %c0_i32 = arith.constant 0 : i32
    %c0_i32_0 = arith.constant 0 : i32
    %c0_i32_1 = arith.constant 0 : i32
    return %arg0, %c0_i32, %c0_i32_0 : i32, i32, i32
  }
  func.func @transform_2(%arg0: i32, %arg1: i32) -> (i32, i32, i32) {
    %c0_i32 = arith.constant 0 : i32
    %c0_i32_0 = arith.constant 0 : i32
    return %arg0, %arg1, %c0_i32 : i32, i32, i32
  }
  func.func @transform_3(%arg0: i32, %arg1: i32) -> (i32, i32, i32, i32) {
    %c0_i32 = arith.constant 0 : i32
    %c0_i32_0 = arith.constant 0 : i32
    %c0_i32_1 = arith.constant 0 : i32
    return %arg0, %arg1, %c0_i32, %c0_i32_0 : i32, i32, i32, i32
  }
}

module attributes {stable_mosaic.version = 11 : i64} {
  func.func @kernel(%arg0: i32, %arg1: i32, %arg2: memref<1x8x256xf32, #tpu.memory_space<vmem>>, %arg3: memref<1x256xf32, #tpu.memory_space<vmem>>, %arg4: memref<1x256xf32, #tpu.memory_space<vmem>>, %arg5: memref<1x8x256xbf16, #tpu.memory_space<vmem>>) attributes {dimension_semantics = [#tpu.dimension_semantics<parallel>, #tpu.dimension_semantics<parallel>], iteration_bounds = array<i64: 1, 1>, scalar_prefetch = 0 : i64, scratch_operands = 0 : i64, tpu.core_type = #tpu.core_type<tc>, window_params = [{transform_indices = @transform_0, window_bounds = array<i64: 1, 8, 256>}, {pipeline_mode = #tpu.pipeline_mode<synchronous>, transform_indices = @transform_1, window_bounds = array<i64: 1, 256>}, {pipeline_mode = #tpu.pipeline_mode<synchronous>, transform_indices = @transform_2, window_bounds = array<i64: 1, 256>}, {transform_indices = @transform_3, window_bounds = array<i64: 1, 8, 256>}]} {
    %c0 = arith.constant 0 : index
    %c0_0 = arith.constant 0 : index
    %c0_1 = arith.constant 0 : index
    %0 = vector.load %arg2[%c0, %c0_0, %c0_1] : memref<1x8x256xf32, #tpu.memory_space<vmem>>, vector<1x8x256xf32>
    %1 = vector.shape_cast %0 : vector<1x8x256xf32> to vector<8x256xf32>
    %c0_2 = arith.constant 0 : index
    %c0_3 = arith.constant 0 : index
    %2 = vector.load %arg3[%c0_2, %c0_3] : memref<1x256xf32, #tpu.memory_space<vmem>>, vector<1x256xf32>
    %3 = vector.broadcast %2 : vector<1x256xf32> to vector<8x256xf32>
    %4 = arith.mulf %1, %3 : vector<8x256xf32>
    %c0_4 = arith.constant 0 : index
    %c0_5 = arith.constant 0 : index
    %5 = vector.load %arg4[%c0_4, %c0_5] : memref<1x256xf32, #tpu.memory_space<vmem>>, vector<1x256xf32>
    %6 = vector.broadcast %5 : vector<1x256xf32> to vector<8x256xf32>
    %7 = arith.addf %4, %6 : vector<8x256xf32>
    %cst = arith.constant 0.000000e+00 : f32
    %8 = vector.broadcast %cst : f32 to vector<8x256xf32>
    %9 = arith.maximumf %7, %8 : vector<8x256xf32>
    %10 = arith.truncf %9 : vector<8x256xf32> to vector<8x256xbf16>
    %c0_6 = arith.constant 0 : index
    %c0_7 = arith.constant 0 : index
    %c0_8 = arith.constant 0 : index
    %11 = vector.load %arg5[%c0_6, %c0_7, %c0_8] : memref<1x8x256xbf16, #tpu.memory_space<vmem>>, vector<1x8x256xbf16>
    %12 = vector.shape_cast %11 : vector<1x8x256xbf16> to vector<8x256xbf16>
    %13 = vector.shape_cast %10 : vector<8x256xbf16> to vector<1x8x256xbf16>
    tpu.vector_store %arg5[%c0_6, %c0_7, %c0_8], %13 {strides = array<i32>} : memref<1x8x256xbf16, #tpu.memory_space<vmem>>, vector<1x8x256xbf16>,
    return
  }
  func.func @transform_0(%arg0: i32, %arg1: i32) -> (i32, i32, i32) {
    %c0_i32 = arith.constant 0 : i32
    %c0_i32_0 = arith.constant 0 : i32
    return %arg0, %arg1, %c0_i32 : i32, i32, i32
  }
  func.func @transform_1(%arg0: i32, %arg1: i32) -> (i32, i32) {
    %c0_i32 = arith.constant 0 : i32
    %c0_i32_0 = arith.constant 0 : i32
    %c0_i32_1 = arith.constant 0 : i32
    return %c0_i32, %c0_i32_0 : i32, i32
  }
  func.func @transform_2(%arg0: i32, %arg1: i32) -> (i32, i32) {
    %c0_i32 = arith.constant 0 : i32
    %c0_i32_0 = arith.constant 0 : i32
    %c0_i32_1 = arith.constant 0 : i32
    return %c0_i32, %c0_i32_0 : i32, i32
  }
  func.func @transform_3(%arg0: i32, %arg1: i32) -> (i32, i32, i32) {
    %c0_i32 = arith.constant 0 : i32
    %c0_i32_0 = arith.constant 0 : i32
    return %arg0, %arg1, %c0_i32 : i32, i32, i32
  }
}

module attributes {stable_mosaic.version = 11 : i64} {
  func.func @_matmul_stats_kernel(%arg0: i32, %arg1: i32, %arg2: memref<1x32x64xbf16, #tpu.memory_space<vmem>>, %arg3: memref<1x64x128xbf16, #tpu.memory_space<vmem>>, %arg4: memref<1x32x128xf32, #tpu.memory_space<vmem>>, %arg5: memref<1x1x2x128xf32, #tpu.memory_space<vmem>>) attributes {dimension_semantics = [#tpu.dimension_semantics<parallel>, #tpu.dimension_semantics<parallel>], iteration_bounds = array<i64: 4, 1>, scalar_prefetch = 0 : i64, scratch_operands = 0 : i64, tpu.core_type = #tpu.core_type<tc>, window_params = [{transform_indices = @transform_0, window_bounds = array<i64: 1, 32, 64>}, {transform_indices = @transform_1, window_bounds = array<i64: 1, 64, 128>}, {transform_indices = @transform_2, window_bounds = array<i64: 1, 32, 128>}, {transform_indices = @transform_3, window_bounds = array<i64: 1, 1, 2, 128>}]} {
    %c0 = arith.constant 0 : index
    %c0_0 = arith.constant 0 : index
    %c0_1 = arith.constant 0 : index
    %0 = vector.load %arg2[%c0, %c0_0, %c0_1] : memref<1x32x64xbf16, #tpu.memory_space<vmem>>, vector<1x32x64xbf16>
    %1 = vector.shape_cast %0 : vector<1x32x64xbf16> to vector<32x64xbf16>
    %c0_2 = arith.constant 0 : index
    %c0_3 = arith.constant 0 : index
    %c0_4 = arith.constant 0 : index
    %2 = vector.load %arg3[%c0_2, %c0_3, %c0_4] : memref<1x64x128xbf16, #tpu.memory_space<vmem>>, vector<1x64x128xbf16>
    %3 = vector.shape_cast %2 : vector<1x64x128xbf16> to vector<64x128xbf16>
    %cst = arith.constant dense<0.000000e+00> : vector<32x128xf32>
    %4 = tpu.matmul %1, %3, %cst {dimension_numbers = #tpu.dot_dimension_numbers<[1], [0], [0], [1], [0, 0, 1, 1], [], []>} : vector<32x64xbf16>, vector<64x128xbf16>, vector<32x128xf32> -> vector<32x128xf32>
    %c0_5 = arith.constant 0 : index
    %c0_6 = arith.constant 0 : index
    %c0_7 = arith.constant 0 : index
    %5 = vector.load %arg4[%c0_5, %c0_6, %c0_7] : memref<1x32x128xf32, #tpu.memory_space<vmem>>, vector<1x32x128xf32>
    %6 = vector.shape_cast %5 : vector<1x32x128xf32> to vector<32x128xf32>
    %7 = vector.shape_cast %4 : vector<32x128xf32> to vector<1x32x128xf32>
    tpu.vector_store %arg4[%c0_5, %c0_6, %c0_7], %7 {strides = array<i32>} : memref<1x32x128xf32, #tpu.memory_space<vmem>>, vector<1x32x128xf32>,
    %cst_8 = arith.constant dense<0.000000e+00> : vector<128xf32>
    %8 = vector.multi_reduction <add>, %4, %cst_8 [0] : vector<32x128xf32> to vector<128xf32>
    %9 = vector.shape_cast %8 : vector<128xf32> to vector<1x128xf32>
    %10 = arith.mulf %4, %4 : vector<32x128xf32>
    %cst_9 = arith.constant dense<0.000000e+00> : vector<128xf32>
    %11 = vector.multi_reduction <add>, %10, %cst_9 [0] : vector<32x128xf32> to vector<128xf32>
    %12 = vector.shape_cast %11 : vector<128xf32> to vector<1x128xf32>
    %13 = tpu.concatenate %9, %12 in 0 : vector<1x128xf32>, vector<1x128xf32> -> vector<2x128xf32>
    %c0_10 = arith.constant 0 : index
    %c0_11 = arith.constant 0 : index
    %c0_12 = arith.constant 0 : index
    %c0_13 = arith.constant 0 : index
    %14 = vector.load %arg5[%c0_10, %c0_11, %c0_12, %c0_13] : memref<1x1x2x128xf32, #tpu.memory_space<vmem>>, vector<1x1x2x128xf32>
    %15 = vector.shape_cast %14 : vector<1x1x2x128xf32> to vector<2x128xf32>
    %16 = vector.shape_cast %13 : vector<2x128xf32> to vector<1x1x2x128xf32>
    tpu.vector_store %arg5[%c0_10, %c0_11, %c0_12, %c0_13], %16 {strides = array<i32>} : memref<1x1x2x128xf32, #tpu.memory_space<vmem>>, vector<1x1x2x128xf32>,
    return
  }
  func.func @transform_0(%arg0: i32, %arg1: i32) -> (i32, i32, i32) {
    %c0_i32 = arith.constant 0 : i32
    %c0_i32_0 = arith.constant 0 : i32
    return %arg0, %arg1, %c0_i32 : i32, i32, i32
  }
  func.func @transform_1(%arg0: i32, %arg1: i32) -> (i32, i32, i32) {
    %c0_i32 = arith.constant 0 : i32
    %c0_i32_0 = arith.constant 0 : i32
    %c0_i32_1 = arith.constant 0 : i32
    return %arg0, %c0_i32, %c0_i32_0 : i32, i32, i32
  }
  func.func @transform_2(%arg0: i32, %arg1: i32) -> (i32, i32, i32) {
    %c0_i32 = arith.constant 0 : i32
    %c0_i32_0 = arith.constant 0 : i32
    return %arg0, %arg1, %c0_i32 : i32, i32, i32
  }
  func.func @transform_3(%arg0: i32, %arg1: i32) -> (i32, i32, i32, i32) {
    %c0_i32 = arith.constant 0 : i32
    %c0_i32_0 = arith.constant 0 : i32
    %c0_i32_1 = arith.constant 0 : i32
    return %arg0, %arg1, %c0_i32, %c0_i32_0 : i32, i32, i32, i32
  }
}

module attributes {stable_mosaic.version = 11 : i64} {
  func.func @kernel(%arg0: i32, %arg1: i32, %arg2: memref<1x32x128xf32, #tpu.memory_space<vmem>>, %arg3: memref<1x128xf32, #tpu.memory_space<vmem>>, %arg4: memref<1x128xf32, #tpu.memory_space<vmem>>, %arg5: memref<1x32x128xbf16, #tpu.memory_space<vmem>>) attributes {dimension_semantics = [#tpu.dimension_semantics<parallel>, #tpu.dimension_semantics<parallel>], iteration_bounds = array<i64: 4, 1>, scalar_prefetch = 0 : i64, scratch_operands = 0 : i64, tpu.core_type = #tpu.core_type<tc>, window_params = [{transform_indices = @transform_0, window_bounds = array<i64: 1, 32, 128>}, {pipeline_mode = #tpu.pipeline_mode<synchronous>, transform_indices = @transform_1, window_bounds = array<i64: 1, 128>}, {pipeline_mode = #tpu.pipeline_mode<synchronous>, transform_indices = @transform_2, window_bounds = array<i64: 1, 128>}, {transform_indices = @transform_3, window_bounds = array<i64: 1, 32, 128>}]} {
    %c0 = arith.constant 0 : index
    %c0_0 = arith.constant 0 : index
    %c0_1 = arith.constant 0 : index
    %0 = vector.load %arg2[%c0, %c0_0, %c0_1] : memref<1x32x128xf32, #tpu.memory_space<vmem>>, vector<1x32x128xf32>
    %1 = vector.shape_cast %0 : vector<1x32x128xf32> to vector<32x128xf32>
    %c0_2 = arith.constant 0 : index
    %c0_3 = arith.constant 0 : index
    %2 = vector.load %arg3[%c0_2, %c0_3] : memref<1x128xf32, #tpu.memory_space<vmem>>, vector<1x128xf32>
    %3 = vector.broadcast %2 : vector<1x128xf32> to vector<32x128xf32>
    %4 = arith.mulf %1, %3 : vector<32x128xf32>
    %c0_4 = arith.constant 0 : index
    %c0_5 = arith.constant 0 : index
    %5 = vector.load %arg4[%c0_4, %c0_5] : memref<1x128xf32, #tpu.memory_space<vmem>>, vector<1x128xf32>
    %6 = vector.broadcast %5 : vector<1x128xf32> to vector<32x128xf32>
    %7 = arith.addf %4, %6 : vector<32x128xf32>
    %cst = arith.constant 0.000000e+00 : f32
    %8 = vector.broadcast %cst : f32 to vector<32x128xf32>
    %9 = arith.maximumf %7, %8 : vector<32x128xf32>
    %10 = arith.truncf %9 : vector<32x128xf32> to vector<32x128xbf16>
    %c0_6 = arith.constant 0 : index
    %c0_7 = arith.constant 0 : index
    %c0_8 = arith.constant 0 : index
    %11 = vector.load %arg5[%c0_6, %c0_7, %c0_8] : memref<1x32x128xbf16, #tpu.memory_space<vmem>>, vector<1x32x128xbf16>
    %12 = vector.shape_cast %11 : vector<1x32x128xbf16> to vector<32x128xbf16>
    %13 = vector.shape_cast %10 : vector<32x128xbf16> to vector<1x32x128xbf16>
    tpu.vector_store %arg5[%c0_6, %c0_7, %c0_8], %13 {strides = array<i32>} : memref<1x32x128xbf16, #tpu.memory_space<vmem>>, vector<1x32x128xbf16>,
    return
  }
  func.func @transform_0(%arg0: i32, %arg1: i32) -> (i32, i32, i32) {
    %c0_i32 = arith.constant 0 : i32
    %c0_i32_0 = arith.constant 0 : i32
    return %arg0, %arg1, %c0_i32 : i32, i32, i32
  }
  func.func @transform_1(%arg0: i32, %arg1: i32) -> (i32, i32) {
    %c0_i32 = arith.constant 0 : i32
    %c0_i32_0 = arith.constant 0 : i32
    %c0_i32_1 = arith.constant 0 : i32
    return %c0_i32, %c0_i32_0 : i32, i32
  }
  func.func @transform_2(%arg0: i32, %arg1: i32) -> (i32, i32) {
    %c0_i32 = arith.constant 0 : i32
    %c0_i32_0 = arith.constant 0 : i32
    %c0_i32_1 = arith.constant 0 : i32
    return %c0_i32, %c0_i32_0 : i32, i32
  }
  func.func @transform_3(%arg0: i32, %arg1: i32) -> (i32, i32, i32) {
    %c0_i32 = arith.constant 0 : i32
    %c0_i32_0 = arith.constant 0 : i32
    return %arg0, %arg1, %c0_i32 : i32, i32, i32
  }
}

module attributes {stable_mosaic.version = 11 : i64} {
  func.func @_matmul_stats_kernel(%arg0: i32, %arg1: i32, %arg2: memref<1x128x72xbf16, #tpu.memory_space<vmem>>, %arg3: memref<1x72x128xbf16, #tpu.memory_space<vmem>>, %arg4: memref<1x128x128xf32, #tpu.memory_space<vmem>>, %arg5: memref<1x1x2x128xf32, #tpu.memory_space<vmem>>) attributes {dimension_semantics = [#tpu.dimension_semantics<parallel>, #tpu.dimension_semantics<parallel>], iteration_bounds = array<i64: 1, 1>, scalar_prefetch = 0 : i64, scratch_operands = 0 : i64, tpu.core_type = #tpu.core_type<tc>, window_params = [{transform_indices = @transform_0, window_bounds = array<i64: 1, 128, 72>}, {transform_indices = @transform_1, window_bounds = array<i64: 1, 72, 128>}, {transform_indices = @transform_2, window_bounds = array<i64: 1, 128, 128>}, {transform_indices = @transform_3, window_bounds = array<i64: 1, 1, 2, 128>}]} {
    %c0 = arith.constant 0 : index
    %c0_0 = arith.constant 0 : index
    %c0_1 = arith.constant 0 : index
    %0 = vector.load %arg2[%c0, %c0_0, %c0_1] : memref<1x128x72xbf16, #tpu.memory_space<vmem>>, vector<1x128x72xbf16>
    %1 = vector.shape_cast %0 : vector<1x128x72xbf16> to vector<128x72xbf16>
    %c0_2 = arith.constant 0 : index
    %c0_3 = arith.constant 0 : index
    %c0_4 = arith.constant 0 : index
    %2 = vector.load %arg3[%c0_2, %c0_3, %c0_4] : memref<1x72x128xbf16, #tpu.memory_space<vmem>>, vector<1x72x128xbf16>
    %3 = vector.shape_cast %2 : vector<1x72x128xbf16> to vector<72x128xbf16>
    %cst = arith.constant dense<0.000000e+00> : vector<128x128xf32>
    %4 = tpu.matmul %1, %3, %cst {dimension_numbers = #tpu.dot_dimension_numbers<[1], [0], [0], [1], [0, 0, 1, 1], [], []>} : vector<128x72xbf16>, vector<72x128xbf16>, vector<128x128xf32> -> vector<128x128xf32>
    %c0_5 = arith.constant 0 : index
    %c0_6 = arith.constant 0 : index
    %c0_7 = arith.constant 0 : index
    %5 = vector.load %arg4[%c0_5, %c0_6, %c0_7] : memref<1x128x128xf32, #tpu.memory_space<vmem>>, vector<1x128x128xf32>
    %6 = vector.shape_cast %5 : vector<1x128x128xf32> to vector<128x128xf32>
    %7 = vector.shape_cast %4 : vector<128x128xf32> to vector<1x128x128xf32>
    tpu.vector_store %arg4[%c0_5, %c0_6, %c0_7], %7 {strides = array<i32>} : memref<1x128x128xf32, #tpu.memory_space<vmem>>, vector<1x128x128xf32>,
    %cst_8 = arith.constant dense<0.000000e+00> : vector<128xf32>
    %8 = vector.multi_reduction <add>, %4, %cst_8 [0] : vector<128x128xf32> to vector<128xf32>
    %9 = vector.shape_cast %8 : vector<128xf32> to vector<1x128xf32>
    %10 = arith.mulf %4, %4 : vector<128x128xf32>
    %cst_9 = arith.constant dense<0.000000e+00> : vector<128xf32>
    %11 = vector.multi_reduction <add>, %10, %cst_9 [0] : vector<128x128xf32> to vector<128xf32>
    %12 = vector.shape_cast %11 : vector<128xf32> to vector<1x128xf32>
    %13 = tpu.concatenate %9, %12 in 0 : vector<1x128xf32>, vector<1x128xf32> -> vector<2x128xf32>
    %c0_10 = arith.constant 0 : index
    %c0_11 = arith.constant 0 : index
    %c0_12 = arith.constant 0 : index
    %c0_13 = arith.constant 0 : index
    %14 = vector.load %arg5[%c0_10, %c0_11, %c0_12, %c0_13] : memref<1x1x2x128xf32, #tpu.memory_space<vmem>>, vector<1x1x2x128xf32>
    %15 = vector.shape_cast %14 : vector<1x1x2x128xf32> to vector<2x128xf32>
    %16 = vector.shape_cast %13 : vector<2x128xf32> to vector<1x1x2x128xf32>
    tpu.vector_store %arg5[%c0_10, %c0_11, %c0_12, %c0_13], %16 {strides = array<i32>} : memref<1x1x2x128xf32, #tpu.memory_space<vmem>>, vector<1x1x2x128xf32>,
    return
  }
  func.func @transform_0(%arg0: i32, %arg1: i32) -> (i32, i32, i32) {
    %c0_i32 = arith.constant 0 : i32
    %c0_i32_0 = arith.constant 0 : i32
    return %arg0, %arg1, %c0_i32 : i32, i32, i32
  }
  func.func @transform_1(%arg0: i32, %arg1: i32) -> (i32, i32, i32) {
    %c0_i32 = arith.constant 0 : i32
    %c0_i32_0 = arith.constant 0 : i32
    %c0_i32_1 = arith.constant 0 : i32
    return %arg0, %c0_i32, %c0_i32_0 : i32, i32, i32
  }
  func.func @transform_2(%arg0: i32, %arg1: i32) -> (i32, i32, i32) {
    %c0_i32 = arith.constant 0 : i32
    %c0_i32_0 = arith.constant 0 : i32
    return %arg0, %arg1, %c0_i32 : i32, i32, i32
  }
  func.func @transform_3(%arg0: i32, %arg1: i32) -> (i32, i32, i32, i32) {
    %c0_i32 = arith.constant 0 : i32
    %c0_i32_0 = arith.constant 0 : i32
    %c0_i32_1 = arith.constant 0 : i32
    return %arg0, %arg1, %c0_i32, %c0_i32_0 : i32, i32, i32, i32
  }
}

module attributes {stable_mosaic.version = 11 : i64} {
  func.func @kernel(%arg0: i32, %arg1: i32, %arg2: memref<1x128x128xf32, #tpu.memory_space<vmem>>, %arg3: memref<1x128xf32, #tpu.memory_space<vmem>>, %arg4: memref<1x128xf32, #tpu.memory_space<vmem>>, %arg5: memref<1x128x128xbf16, #tpu.memory_space<vmem>>) attributes {dimension_semantics = [#tpu.dimension_semantics<parallel>, #tpu.dimension_semantics<parallel>], iteration_bounds = array<i64: 1, 1>, scalar_prefetch = 0 : i64, scratch_operands = 0 : i64, tpu.core_type = #tpu.core_type<tc>, window_params = [{transform_indices = @transform_0, window_bounds = array<i64: 1, 128, 128>}, {pipeline_mode = #tpu.pipeline_mode<synchronous>, transform_indices = @transform_1, window_bounds = array<i64: 1, 128>}, {pipeline_mode = #tpu.pipeline_mode<synchronous>, transform_indices = @transform_2, window_bounds = array<i64: 1, 128>}, {transform_indices = @transform_3, window_bounds = array<i64: 1, 128, 128>}]} {
    %c0 = arith.constant 0 : index
    %c0_0 = arith.constant 0 : index
    %c0_1 = arith.constant 0 : index
    %0 = vector.load %arg2[%c0, %c0_0, %c0_1] : memref<1x128x128xf32, #tpu.memory_space<vmem>>, vector<1x128x128xf32>
    %1 = vector.shape_cast %0 : vector<1x128x128xf32> to vector<128x128xf32>
    %c0_2 = arith.constant 0 : index
    %c0_3 = arith.constant 0 : index
    %2 = vector.load %arg3[%c0_2, %c0_3] : memref<1x128xf32, #tpu.memory_space<vmem>>, vector<1x128xf32>
    %3 = vector.broadcast %2 : vector<1x128xf32> to vector<128x128xf32>
    %4 = arith.mulf %1, %3 : vector<128x128xf32>
    %c0_4 = arith.constant 0 : index
    %c0_5 = arith.constant 0 : index
    %5 = vector.load %arg4[%c0_4, %c0_5] : memref<1x128xf32, #tpu.memory_space<vmem>>, vector<1x128xf32>
    %6 = vector.broadcast %5 : vector<1x128xf32> to vector<128x128xf32>
    %7 = arith.addf %4, %6 : vector<128x128xf32>
    %cst = arith.constant 0.000000e+00 : f32
    %8 = vector.broadcast %cst : f32 to vector<128x128xf32>
    %9 = arith.maximumf %7, %8 : vector<128x128xf32>
    %10 = arith.truncf %9 : vector<128x128xf32> to vector<128x128xbf16>
    %c0_6 = arith.constant 0 : index
    %c0_7 = arith.constant 0 : index
    %c0_8 = arith.constant 0 : index
    %11 = vector.load %arg5[%c0_6, %c0_7, %c0_8] : memref<1x128x128xbf16, #tpu.memory_space<vmem>>, vector<1x128x128xbf16>
    %12 = vector.shape_cast %11 : vector<1x128x128xbf16> to vector<128x128xbf16>
    %13 = vector.shape_cast %10 : vector<128x128xbf16> to vector<1x128x128xbf16>
    tpu.vector_store %arg5[%c0_6, %c0_7, %c0_8], %13 {strides = array<i32>} : memref<1x128x128xbf16, #tpu.memory_space<vmem>>, vector<1x128x128xbf16>,
    return
  }
  func.func @transform_0(%arg0: i32, %arg1: i32) -> (i32, i32, i32) {
    %c0_i32 = arith.constant 0 : i32
    %c0_i32_0 = arith.constant 0 : i32
    return %arg0, %arg1, %c0_i32 : i32, i32, i32
  }
  func.func @transform_1(%arg0: i32, %arg1: i32) -> (i32, i32) {
    %c0_i32 = arith.constant 0 : i32
    %c0_i32_0 = arith.constant 0 : i32
    %c0_i32_1 = arith.constant 0 : i32
    return %c0_i32, %c0_i32_0 : i32, i32
  }
  func.func @transform_2(%arg0: i32, %arg1: i32) -> (i32, i32) {
    %c0_i32 = arith.constant 0 : i32
    %c0_i32_0 = arith.constant 0 : i32
    %c0_i32_1 = arith.constant 0 : i32
    return %c0_i32, %c0_i32_0 : i32, i32
  }
  func.func @transform_3(%arg0: i32, %arg1: i32) -> (i32, i32, i32) {
    %c0_i32 = arith.constant 0 : i32
    %c0_i32_0 = arith.constant 0 : i32
    return %arg0, %arg1, %c0_i32 : i32, i32, i32
  }
}

module attributes {stable_mosaic.version = 11 : i64} {
  func.func @_matmul_stats_kernel(%arg0: i32, %arg1: i32, %arg2: memref<1x128x32xbf16, #tpu.memory_space<vmem>>, %arg3: memref<1x32x128xbf16, #tpu.memory_space<vmem>>, %arg4: memref<1x128x128xf32, #tpu.memory_space<vmem>>, %arg5: memref<1x1x2x128xf32, #tpu.memory_space<vmem>>) attributes {dimension_semantics = [#tpu.dimension_semantics<parallel>, #tpu.dimension_semantics<parallel>], iteration_bounds = array<i64: 4, 1>, scalar_prefetch = 0 : i64, scratch_operands = 0 : i64, tpu.core_type = #tpu.core_type<tc>, window_params = [{transform_indices = @transform_0, window_bounds = array<i64: 1, 128, 32>}, {transform_indices = @transform_1, window_bounds = array<i64: 1, 32, 128>}, {transform_indices = @transform_2, window_bounds = array<i64: 1, 128, 128>}, {transform_indices = @transform_3, window_bounds = array<i64: 1, 1, 2, 128>}]} {
    %c0 = arith.constant 0 : index
    %c0_0 = arith.constant 0 : index
    %c0_1 = arith.constant 0 : index
    %0 = vector.load %arg2[%c0, %c0_0, %c0_1] : memref<1x128x32xbf16, #tpu.memory_space<vmem>>, vector<1x128x32xbf16>
    %1 = vector.shape_cast %0 : vector<1x128x32xbf16> to vector<128x32xbf16>
    %c0_2 = arith.constant 0 : index
    %c0_3 = arith.constant 0 : index
    %c0_4 = arith.constant 0 : index
    %2 = vector.load %arg3[%c0_2, %c0_3, %c0_4] : memref<1x32x128xbf16, #tpu.memory_space<vmem>>, vector<1x32x128xbf16>
    %3 = vector.shape_cast %2 : vector<1x32x128xbf16> to vector<32x128xbf16>
    %cst = arith.constant dense<0.000000e+00> : vector<128x128xf32>
    %4 = tpu.matmul %1, %3, %cst {dimension_numbers = #tpu.dot_dimension_numbers<[1], [0], [0], [1], [0, 0, 1, 1], [], []>} : vector<128x32xbf16>, vector<32x128xbf16>, vector<128x128xf32> -> vector<128x128xf32>
    %c0_5 = arith.constant 0 : index
    %c0_6 = arith.constant 0 : index
    %c0_7 = arith.constant 0 : index
    %5 = vector.load %arg4[%c0_5, %c0_6, %c0_7] : memref<1x128x128xf32, #tpu.memory_space<vmem>>, vector<1x128x128xf32>
    %6 = vector.shape_cast %5 : vector<1x128x128xf32> to vector<128x128xf32>
    %7 = vector.shape_cast %4 : vector<128x128xf32> to vector<1x128x128xf32>
    tpu.vector_store %arg4[%c0_5, %c0_6, %c0_7], %7 {strides = array<i32>} : memref<1x128x128xf32, #tpu.memory_space<vmem>>, vector<1x128x128xf32>,
    %cst_8 = arith.constant dense<0.000000e+00> : vector<128xf32>
    %8 = vector.multi_reduction <add>, %4, %cst_8 [0] : vector<128x128xf32> to vector<128xf32>
    %9 = vector.shape_cast %8 : vector<128xf32> to vector<1x128xf32>
    %10 = arith.mulf %4, %4 : vector<128x128xf32>
    %cst_9 = arith.constant dense<0.000000e+00> : vector<128xf32>
    %11 = vector.multi_reduction <add>, %10, %cst_9 [0] : vector<128x128xf32> to vector<128xf32>
    %12 = vector.shape_cast %11 : vector<128xf32> to vector<1x128xf32>
    %13 = tpu.concatenate %9, %12 in 0 : vector<1x128xf32>, vector<1x128xf32> -> vector<2x128xf32>
    %c0_10 = arith.constant 0 : index
    %c0_11 = arith.constant 0 : index
    %c0_12 = arith.constant 0 : index
    %c0_13 = arith.constant 0 : index
    %14 = vector.load %arg5[%c0_10, %c0_11, %c0_12, %c0_13] : memref<1x1x2x128xf32, #tpu.memory_space<vmem>>, vector<1x1x2x128xf32>
    %15 = vector.shape_cast %14 : vector<1x1x2x128xf32> to vector<2x128xf32>
    %16 = vector.shape_cast %13 : vector<2x128xf32> to vector<1x1x2x128xf32>
    tpu.vector_store %arg5[%c0_10, %c0_11, %c0_12, %c0_13], %16 {strides = array<i32>} : memref<1x1x2x128xf32, #tpu.memory_space<vmem>>, vector<1x1x2x128xf32>,
    return
  }
  func.func @transform_0(%arg0: i32, %arg1: i32) -> (i32, i32, i32) {
    %c0_i32 = arith.constant 0 : i32
    %c0_i32_0 = arith.constant 0 : i32
    return %arg0, %arg1, %c0_i32 : i32, i32, i32
  }
  func.func @transform_1(%arg0: i32, %arg1: i32) -> (i32, i32, i32) {
    %c0_i32 = arith.constant 0 : i32
    %c0_i32_0 = arith.constant 0 : i32
    %c0_i32_1 = arith.constant 0 : i32
    return %arg0, %c0_i32, %c0_i32_0 : i32, i32, i32
  }
  func.func @transform_2(%arg0: i32, %arg1: i32) -> (i32, i32, i32) {
    %c0_i32 = arith.constant 0 : i32
    %c0_i32_0 = arith.constant 0 : i32
    return %arg0, %arg1, %c0_i32 : i32, i32, i32
  }
  func.func @transform_3(%arg0: i32, %arg1: i32) -> (i32, i32, i32, i32) {
    %c0_i32 = arith.constant 0 : i32
    %c0_i32_0 = arith.constant 0 : i32
    %c0_i32_1 = arith.constant 0 : i32
    return %arg0, %arg1, %c0_i32, %c0_i32_0 : i32, i32, i32, i32
  }
}

module attributes {stable_mosaic.version = 11 : i64} {
  func.func @kernel(%arg0: i32, %arg1: i32, %arg2: memref<1x128x128xf32, #tpu.memory_space<vmem>>, %arg3: memref<1x128xf32, #tpu.memory_space<vmem>>, %arg4: memref<1x128xf32, #tpu.memory_space<vmem>>, %arg5: memref<1x128x128xf32, #tpu.memory_space<vmem>>) attributes {dimension_semantics = [#tpu.dimension_semantics<parallel>, #tpu.dimension_semantics<parallel>], iteration_bounds = array<i64: 4, 1>, scalar_prefetch = 0 : i64, scratch_operands = 0 : i64, tpu.core_type = #tpu.core_type<tc>, window_params = [{transform_indices = @transform_0, window_bounds = array<i64: 1, 128, 128>}, {pipeline_mode = #tpu.pipeline_mode<synchronous>, transform_indices = @transform_1, window_bounds = array<i64: 1, 128>}, {pipeline_mode = #tpu.pipeline_mode<synchronous>, transform_indices = @transform_2, window_bounds = array<i64: 1, 128>}, {transform_indices = @transform_3, window_bounds = array<i64: 1, 128, 128>}]} {
    %c0 = arith.constant 0 : index
    %c0_0 = arith.constant 0 : index
    %c0_1 = arith.constant 0 : index
    %0 = vector.load %arg2[%c0, %c0_0, %c0_1] : memref<1x128x128xf32, #tpu.memory_space<vmem>>, vector<1x128x128xf32>
    %1 = vector.shape_cast %0 : vector<1x128x128xf32> to vector<128x128xf32>
    %c0_2 = arith.constant 0 : index
    %c0_3 = arith.constant 0 : index
    %2 = vector.load %arg3[%c0_2, %c0_3] : memref<1x128xf32, #tpu.memory_space<vmem>>, vector<1x128xf32>
    %3 = vector.broadcast %2 : vector<1x128xf32> to vector<128x128xf32>
    %4 = arith.mulf %1, %3 : vector<128x128xf32>
    %c0_4 = arith.constant 0 : index
    %c0_5 = arith.constant 0 : index
    %5 = vector.load %arg4[%c0_4, %c0_5] : memref<1x128xf32, #tpu.memory_space<vmem>>, vector<1x128xf32>
    %6 = vector.broadcast %5 : vector<1x128xf32> to vector<128x128xf32>
    %7 = arith.addf %4, %6 : vector<128x128xf32>
    %8 = math.tanh %7 : vector<128x128xf32>
    %c0_6 = arith.constant 0 : index
    %c0_7 = arith.constant 0 : index
    %c0_8 = arith.constant 0 : index
    %9 = vector.load %arg5[%c0_6, %c0_7, %c0_8] : memref<1x128x128xf32, #tpu.memory_space<vmem>>, vector<1x128x128xf32>
    %10 = vector.shape_cast %9 : vector<1x128x128xf32> to vector<128x128xf32>
    %11 = vector.shape_cast %8 : vector<128x128xf32> to vector<1x128x128xf32>
    tpu.vector_store %arg5[%c0_6, %c0_7, %c0_8], %11 {strides = array<i32>} : memref<1x128x128xf32, #tpu.memory_space<vmem>>, vector<1x128x128xf32>,
    return
  }
  func.func @transform_0(%arg0: i32, %arg1: i32) -> (i32, i32, i32) {
    %c0_i32 = arith.constant 0 : i32
    %c0_i32_0 = arith.constant 0 : i32
    return %arg0, %arg1, %c0_i32 : i32, i32, i32
  }
  func.func @transform_1(%arg0: i32, %arg1: i32) -> (i32, i32) {
    %c0_i32 = arith.constant 0 : i32
    %c0_i32_0 = arith.constant 0 : i32
    %c0_i32_1 = arith.constant 0 : i32
    return %c0_i32, %c0_i32_0 : i32, i32
  }
  func.func @transform_2(%arg0: i32, %arg1: i32) -> (i32, i32) {
    %c0_i32 = arith.constant 0 : i32
    %c0_i32_0 = arith.constant 0 : i32
    %c0_i32_1 = arith.constant 0 : i32
    return %c0_i32, %c0_i32_0 : i32, i32
  }
  func.func @transform_3(%arg0: i32, %arg1: i32) -> (i32, i32, i32) {
    %c0_i32 = arith.constant 0 : i32
    %c0_i32_0 = arith.constant 0 : i32
    return %arg0, %arg1, %c0_i32 : i32, i32, i32
  }
}

</mosaic_0001>

<llo_original>
// kernel: tile.18
$region0: #{tile.18}
  #allocation0 [shape = 's32[1]{0}', space=sflag, size = 0x4, scoped, tag = 'scoped memory for tile.18']
  %s0 = inlined_call_operand.vmem [shape: f32[16], index: 0, kind: input, shape index: {}]
  %s1 = inlined_call_operand.vmem [shape: f32[16,16], index: 1, kind: output, shape index: {}]
  // Predicated region
  $region2: #{tile.18} parent=0 // pred_check
    _
  $region3: #{tile.18} parent=0 // pred_check_branch
    %3 = sbr.rel (0) target = $region5
  $region4: #{tile.18} parent=0 // pred_region
    _
  $region5: #{tile.18} parent=0 // pred_fallthru
    _
  %v4 = vld [vmem:[%s0] ss:$0 sm:$0xff]
  %5 = vst [vmem:[%s1] sm:$0xff] %v4
  %s6 = scalar_lea.vmem %s1, 8
  %7 = vst [vmem:[%s6] sm:$0xff] %v4

// kernel: squeeze.10
$region0: #{squeeze.10}
  %s0 = inlined_call_operand.vmem [shape: bf16[1,2,256], index: 0, kind: input, shape index: {}]
  %s1 = inlined_call_operand.vmem [shape: bf16[2,4,4,16], index: 1, kind: output, shape index: {}]
  $region1: #{squeeze.10} parent=0
    #allocation0 [shape = 'u8[32768]{0}', space=vmem, size = 0x8000, scoped, tag = 'scoped mem for output reshape']
    #allocation1 [shape = 'u8[8192]{0}', space=vmem, size = 0x2000, scoped, tag = 'scoped mem for input reshape']
    %s3 = smul.u32 1, 2
    %s4 = sshllo.u32 0, %s3
    %s5 = scalar_lea.vmem %s0, 1
    %s6 = sshrl.u32 %s4, 1
    %s7 = sor.u32 %s4, %s6
    %s8 = sand.u32 %s7, 85
    %s9 = sshrl.u32 %s8, 1
    %s10 = sor.u32 %s8, %s9
    %s11 = sand.u32 51, %s10
    %s12 = sshrl.u32 %s11, 2
    %s13 = sor.u32 %s11, %s12
    %s14 = sand.u32 15, %s13
    %v15 = vld [vmem:[%s5] sm:%s14]
    %v16 = vunpack.c.l.bf16 %v15
    %v17 = vunpack.c.h.bf16 %v15
    %s18 = scalar_lea.vmem [#allocation1], 8
    %19 = vst [vmem:[%s18] sm:%s4] %v16
    %s20 = sshrl.u32 %s4, 1
    %s21 = sor.u32 %s4, %s20
    %s22 = sand.u32 %s21, 85
    %s23 = sshrl.u32 %s22, 1
    %s24 = sor.u32 %s22, %s23
    %s25 = sand.u32 51, %s24
    %s26 = sshrl.u32 %s25, 2
    %s27 = sor.u32 %s25, %s26
    %s28 = sand.u32 15, %s27
    %v29 = vld [vmem:[%s0] sm:%s28]
    %v30 = vunpack.c.l.bf16 %v29
    %v31 = vunpack.c.h.bf16 %v29
    %32 = vst [vmem:[#allocation1] sm:%s4] %v30
    %v33 = vld [vmem:[#allocation1] sm:$0x3]
    %vm34 = vcmask 130048
    %35 = vst.msk [vmem:[#allocation0] sm:$0x1] %vm34, %v33
    %s36 = scalar_lea.vmem [#allocation0], 31
    %37 = vst.msk [vmem:[%s36] sm:$0x2] %vm34, %v33
    %s38 = scalar_lea.vmem [#allocation1], 8
    %v39 = vld [vmem:[%s38] sm:$0x3]
    %vm40 = vcmask 130048
    %s41 = scalar_lea.vmem [#allocation0], 16
    %42 = vst.msk [vmem:[%s41] sm:$0x1] %vm40, %v39
    %s43 = scalar_lea.vmem [#allocation0], 47
    %44 = vst.msk [vmem:[%s43] sm:$0x2] %vm40, %v39
    %v45 = vld.sshfl [vmem:[#allocation1] sm:$0xff pattern:$0x99999180]
    %46 = vrot.lane.b32.xlu0 %v45, 112
    %v47 = vpop.permute.xlu0 %46
    %vm48 = vcmask 130048
    %s49 = scalar_lea.vmem [#allocation0], 1
    %50 = vst.msk [vmem:[%s49] ss:$16 sm:$0x3] %vm48, %v47
    %s51 = scalar_lea.vmem [#allocation0], 1
    %52 = vst.msk [vmem:[%s51] ss:$16 sm:$0xc] %vm48, %v47
    %v53 = vld.sshfl [vmem:[#allocation1] sm:$0xff pattern:$0x99999180]
    %54 = vrot.lane.b32.xlu0 %v53, 96
    %v55 = vpop.permute.xlu0 %54
    %vm56 = vcmask 130048
    %s57 = scalar_lea.vmem [#allocation0], 2
    %58 = vst.msk [vmem:[%s57] ss:$16 sm:$0x3] %vm56, %v55
    %s59 = scalar_lea.vmem [#allocation0], 2
    %60 = vst.msk [vmem:[%s59] ss:$16 sm:$0xc] %vm56, %v55
    %v61 = vld.sshfl [vmem:[#allocation1] sm:$0xff pattern:$0x99999180]
    %62 = vrot.lane.b32.xlu0 %v61, 80
    %v63 = vpop.permute.xlu0 %62
    %vm64 = vcmask 130048
    %s65 = scalar_lea.vmem [#allocation0], 3
    %66 = vst.msk [vmem:[%s65] ss:$16 sm:$0x3] %vm64, %v63
    %s67 = scalar_lea.vmem [#allocation0], 3
    %68 = vst.msk [vmem:[%s67] ss:$16 sm:$0xc] %vm64, %v63
    %v69 = vld.sshfl [vmem:[#allocation1] sm:$0xff pattern:$0x99999180]
    %70 = vrot.lane.b32.xlu0 %v69, 64
    %v71 = vpop.permute.xlu0 %70
    %vm72 = vcmask 130048
    %s73 = scalar_lea.vmem [#allocation0], 8
    %74 = vst.msk [vmem:[%s73] ss:$16 sm:$0x3] %vm72, %v71
    %s75 = scalar_lea.vmem [#allocation0], 8
    %76 = vst.msk [vmem:[%s75] ss:$16 sm:$0xc] %vm72, %v71
    %v77 = vld.sshfl [vmem:[#allocation1] sm:$0xff pattern:$0x99999180]
    %78 = vrot.lane.b32.xlu0 %v77, 48
    %v79 = vpop.permute.xlu0 %78
    %vm80 = vcmask 130048
    %s81 = scalar_lea.vmem [#allocation0], 9
    %82 = vst.msk [vmem:[%s81] ss:$16 sm:$0x3] %vm80, %v79
    %s83 = scalar_lea.vmem [#allocation0], 9
    %84 = vst.msk [vmem:[%s83] ss:$16 sm:$0xc] %vm80, %v79
    %v85 = vld.sshfl [vmem:[#allocation1] sm:$0xff pattern:$0x99999180]
    %86 = vrot.lane.b32.xlu0 %v85, 32
    %v87 = vpop.permute.xlu0 %86
    %vm88 = vcmask 130048
    %s89 = scalar_lea.vmem [#allocation0], 10
    %90 = vst.msk [vmem:[%s89] ss:$16 sm:$0x3] %vm88, %v87
    %s91 = scalar_lea.vmem [#allocation0], 10
    %92 = vst.msk [vmem:[%s91] ss:$16 sm:$0xc] %vm88, %v87
    %v93 = vld.sshfl [vmem:[#allocation1] sm:$0xff pattern:$0x99999180]
    %94 = vrot.lane.b32.xlu0 %v93, 16
    %v95 = vpop.permute.xlu0 %94
    %vm96 = vcmask 130048
    %s97 = scalar_lea.vmem [#allocation0], 11
    %98 = vst.msk [vmem:[%s97] ss:$16 sm:$0x3] %vm96, %v95
    %s99 = scalar_lea.vmem [#allocation0], 11
    %100 = vst.msk [vmem:[%s99] ss:$16 sm:$0xc] %vm96, %v95
    %s102 = smul.u32 2, 2
    %s103 = sshllo.u32 0, %s102
    %s104 = sshrl.u32 %s102, 1
    %v105 = vld [vmem:[#allocation0] sm:%s103]
    %v106 = vpack.c.bf16 0.0, %v105
    %s107 = sshllo.u32 0, %s104
    %108 = vst [vmem:[%s1] sm:%s107] %v106
    %s109 = scalar_lea.vmem [#allocation0], 8
    %v110 = vld [vmem:[%s109] sm:%s103]
    %v111 = vpack.c.bf16 0.0, %v110
    %s112 = sshllo.u32 0, %s104
    %s113 = scalar_lea.vmem %s1, 2
    %114 = vst [vmem:[%s113] sm:%s112] %v111
    %s115 = scalar_lea.vmem [#allocation0], 16
    %v116 = vld [vmem:[%s115] sm:%s103]
    %v117 = vpack.c.bf16 0.0, %v116
    %s118 = sshllo.u32 0, %s104
    %s119 = smul.addr 2, 2
    %s120 = scalar_lea.vmem %s1, %s119
    %121 = vst [vmem:[%s120] sm:%s118] %v117
    %s122 = scalar_lea.vmem [#allocation0], 24
    %v123 = vld [vmem:[%s122] sm:%s103]
    %v124 = vpack.c.bf16 0.0, %v123
    %s125 = sshllo.u32 0, %s104
    %s126 = smul.addr 2, 3
    %s127 = scalar_lea.vmem %s1, %s126
    %128 = vst [vmem:[%s127] sm:%s125] %v124
    %s129 = scalar_lea.vmem [#allocation0], 32
    %v130 = vld [vmem:[%s129] sm:%s103]
    %v131 = vpack.c.bf16 0.0, %v130
    %s132 = sshllo.u32 0, %s104
    %s133 = smul.addr 2, 4
    %s134 = scalar_lea.vmem %s1, %s133
    %135 = vst [vmem:[%s134] sm:%s132] %v131
    %s136 = scalar_lea.vmem [#allocation0], 40
    %v137 = vld [vmem:[%s136] sm:%s103]
    %v138 = vpack.c.bf16 0.0, %v137
    %s139 = sshllo.u32 0, %s104
    %s140 = smul.addr 2, 5
    %s141 = scalar_lea.vmem %s1, %s140
    %142 = vst [vmem:[%s141] sm:%s139] %v138
    %s143 = scalar_lea.vmem [#allocation0], 48
    %v144 = vld [vmem:[%s143] sm:%s103]
    %v145 = vpack.c.bf16 0.0, %v144
    %s146 = sshllo.u32 0, %s104
    %s147 = smul.addr 2, 6
    %s148 = scalar_lea.vmem %s1, %s147
    %149 = vst [vmem:[%s148] sm:%s146] %v145
    %s150 = scalar_lea.vmem [#allocation0], 56
    %v151 = vld [vmem:[%s150] sm:%s103]
    %v152 = vpack.c.bf16 0.0, %v151
    %s153 = sshllo.u32 0, %s104
    %s154 = smul.addr 2, 7
    %s155 = scalar_lea.vmem %s1, %s154
    %156 = vst [vmem:[%s155] sm:%s153] %v152

// kernel: forward.8
$region0: #{forward.8}
  #allocation0 [shape = 'u32[]', space=smem, size = 0x4, offset = 0x4, fixed_abs, tag = 'smem constant byte address 0x4 - core index']
  #allocation1 [shape = 'u32[144,128]{1,0:T(1,128)}', space=vmem, size = 0x12000, scoped, tag = 'internal scratch']
  %s0 = inlined_call_operand.vmem [shape: bf16[1,8,8], index: 0, kind: input, shape index: {}]
  %s1 = inlined_call_operand.vmem [shape: bf16[1,8,256], index: 1, kind: input, shape index: {}]
  %s2 = inlined_call_operand.vmem [shape: f32[1,8,256], index: 2, kind: output, shape index: {0}]
  %s3 = inlined_call_operand.vmem [shape: f32[1,1,2,256], index: 3, kind: output, shape index: {1}]
  %4 = xla_tuple %s2, %s3
  %s5 = sld [smem:[#allocation0]]
  $region26: #{forward.8} parent=0
    _
  %s7 = ssub.s32 1, %s5
  %s8 = scalar_select 0, %s7, %s5
  // Predicated region
  $region2: #{forward.8} parent=0 // pred_check
    _
  $region3: #{forward.8} parent=0 // pred_check_branch
    %10 = sbr.rel (0) target = $region5
  $region4: #{forward.8} parent=0 // pred_region
    _
  $region5: #{forward.8} parent=0 // pred_fallthru
    _
  // Predicated region
  $region6: #{forward.8} parent=0 // pred_check
    _
  $region7: #{forward.8} parent=0 // pred_check_branch
    %12 = sbr.rel (0) target = $region9
  $region8: #{forward.8} parent=0 // pred_region
    _
  $region9: #{forward.8} parent=0 // pred_fallthru
    _
  %v14 = vld [vmem:[%s0] sm:$0xf]
  %v15 = vld [vmem:[%s1] sm:$0xff]
  %v17 = vunpack.c.l.b16 %v15
  %v18 = vunpack.c.h.b16 %v15
  %v19 = vpack.c.b16 %v17, %v17
  %v20 = vpack.c.b16 %v18, %v18
  %vm21 = vcmask 64512
  %v23 = vsel %vm21, %v14, 0
  %vm25 = vcmask 1043456
  %v27 = vsel %vm25, %v19, 0
  %v30 = vsel %vm25, %v20, 0
  %32 = vmatprep.subr.bf16.mxu0 %v30
  %33 = vmatpush1.bf16.msra.mxu0 %v27
  %34 = vmatprep.subr.bf16.mxu0 0
  %35 = vmatpush1.bf16.msra.mxu0 0
  %36 = vmatprep.subr.bf16.mxu0 0
  %37 = vmatpush1.bf16.msra.mxu0 0
  %38 = vmatprep.subr.bf16.mxu0 0
  %39 = vmatpush1.bf16.msra.mxu0 0
  %40 = vmatprep.subr.bf16.mxu0 0
  %41 = vmatpush1.bf16.msra.mxu0 0
  %42 = vmatprep.subr.bf16.mxu0 0
  %43 = vmatpush1.bf16.msra.mxu0 0
  %44 = vmatprep.subr.bf16.mxu0 0
  %45 = vmatpush1.bf16.msra.mxu0 0
  %46 = vmatprep.subr.bf16.mxu0 0
  %47 = vmatpush1.bf16.msra.mxu0 0
  %48 = vmatprep.subr.bf16.mxu0 0
  %49 = vmatpush1.bf16.msra.mxu0 0
  %50 = vmatprep.subr.bf16.mxu0 0
  %51 = vmatpush1.bf16.msra.mxu0 0
  %52 = vmatprep.subr.bf16.mxu0 0
  %53 = vmatpush1.bf16.msra.mxu0 0
  %54 = vmatprep.subr.bf16.mxu0 0
  %55 = vmatpush1.bf16.msra.mxu0 0
  %56 = vmatprep.subr.bf16.mxu0 0
  %57 = vmatpush1.bf16.msra.mxu0 0
  %58 = vmatprep.subr.bf16.mxu0 0
  %59 = vmatpush1.bf16.msra.mxu0 0
  %60 = vmatprep.subr.bf16.mxu0 0
  %61 = vmatpush1.bf16.msra.mxu0 0
  %62 = vmatprep.subr.bf16.mxu0 0
  %63 = vmatpush1.bf16.msra.mxu0 0
  %64 = vmatprep.mubr.bf16.mxu0 0
  %65 = vmatmul.mubr.bf16.gmra.mrb[0].mxu0 %v23
  %v66 = vpop.f32.mrb[0].mxu0
  %v67 = vadd.f32 0.0, %v66
  %v68 = vpop.f32.mrb[0].mxu0
  %v69 = vadd.f32 0.0, %v68
  %v70 = vpop.f32.mrb[0].mxu0
  %v71 = vpop.f32.mrb[0].mxu0
  %72 = vdwg.mxu0
  %73 = vst [vmem:[%s2] sm:$0xff] %v67
  %74 = vst [vmem:[%s2 + $0x8] sm:$0xff] %v69
  %v75 = vrot.slane %v67, 4
  %v76 = vadd.f32 %v67, %v75
  %v77 = vrot.slane %v76, 2
  %v78 = vadd.f32 %v76, %v77
  %v79 = vrot.slane %v78, 1
  %v80 = vadd.f32 %v78, %v79
  %v81 = vrot.slane %v69, 4
  %v82 = vadd.f32 %v69, %v81
  %v83 = vrot.slane %v82, 2
  %v84 = vadd.f32 %v82, %v83
  %v85 = vrot.slane %v84, 1
  %v86 = vadd.f32 %v84, %v85
  %v87 = vmul.f32 %v67, %v67
  %v88 = vmul.f32 %v69, %v69
  %v89 = vrot.slane %v87, 4
  %v90 = vadd.f32 %v87, %v89
  %v91 = vrot.slane %v90, 2
  %v92 = vadd.f32 %v90, %v91
  %v93 = vrot.slane %v92, 1
  %v94 = vadd.f32 %v92, %v93
  %v95 = vrot.slane %v88, 4
  %v96 = vadd.f32 %v88, %v95
  %v97 = vrot.slane %v96, 2
  %v98 = vadd.f32 %v96, %v97
  %v99 = vrot.slane %v98, 1
  %v100 = vadd.f32 %v98, %v99
  %vm101 = vcmask 1040384
  %v102 = vsel %vm101, %v80, %v94
  %v103 = vsel %vm101, %v86, %v100
  %v106 = vcombine.low %v102, %v103
  %v108 = vunpack.c.l.s4 1983009808
  %v109 = vunpack.c.0.s8 %v108
  %v110 = vlaneseq
  %v111 = vshrl.u32 %v110, 7
  %v112 = vsub.s32 %v109, %v111
  %v113 = vrot.slane %v106, %v112
  %115 = vst [vmem:[%s3] sm:$0xf] %v113
  // Predicated region
  $region10: #{forward.8} parent=0 // pred_check
    _
  $region11: #{forward.8} parent=0 // pred_check_branch
    %117 = sbr.rel (0) target = $region13
  $region12: #{forward.8} parent=0 // pred_region
    _
  $region13: #{forward.8} parent=0 // pred_fallthru
    _
  // Predicated region
  $region14: #{forward.8} parent=0 // pred_check
    _
  $region15: #{forward.8} parent=0 // pred_check_branch
    %119 = sbr.rel (0) target = $region17
  $region16: #{forward.8} parent=0 // pred_region
    _
  $region17: #{forward.8} parent=0 // pred_fallthru
    _
  // Predicated region
  $region18: #{forward.8} parent=0 // pred_check
    _
  $region19: #{forward.8} parent=0 // pred_check_branch
    %121 = sbr.rel (0) target = $region21
  $region20: #{forward.8} parent=0 // pred_region
    _
  $region21: #{forward.8} parent=0 // pred_fallthru
    _
  // Predicated region
  $region22: #{forward.8} parent=0 // pred_check
    _
  $region23: #{forward.8} parent=0 // pred_check_branch
    %123 = sbr.rel (0) target = $region25
  $region24: #{forward.8} parent=0 // pred_region
    _
  $region25: #{forward.8} parent=0 // pred_fallthru
    _

// kernel: forward.9
$region0: #{forward.9}
  #allocation0 [shape = 'u32[]', space=smem, size = 0x4, offset = 0x4, fixed_abs, tag = 'smem constant byte address 0x4 - core index']
  #allocation1 [shape = 'u32[144,128]{1,0:T(1,128)}', space=vmem, size = 0x12000, scoped, tag = 'internal scratch']
  %s0 = inlined_call_operand.vmem [shape: f32[1,8,256], index: 0, kind: input, shape index: {}]
  %s1 = inlined_call_operand.vmem [shape: f32[1,256], index: 1, kind: input, shape index: {}]
  %s2 = inlined_call_operand.vmem [shape: f32[1,256], index: 2, kind: input, shape index: {}]
  %s3 = inlined_call_operand.vmem [shape: bf16[1,8,256], index: 3, kind: output, shape index: {}]
  %s4 = sld [smem:[#allocation0]]
  $region22: #{forward.9} parent=0
    _
  %s6 = ssub.s32 1, %s4
  %s7 = scalar_select 0, %s6, %s4
  // Predicated region
  $region2: #{forward.9} parent=0 // pred_check
    _
  $region3: #{forward.9} parent=0 // pred_check_branch
    %9 = sbr.rel (0) target = $region5
  $region4: #{forward.9} parent=0 // pred_region
    _
  $region5: #{forward.9} parent=0 // pred_fallthru
    _
  // Predicated region
  $region6: #{forward.9} parent=0 // pred_check
    _
  $region7: #{forward.9} parent=0 // pred_check_branch
    %11 = sbr.rel (0) target = $region9
  $region8: #{forward.9} parent=0 // pred_region
    _
  $region9: #{forward.9} parent=0 // pred_fallthru
    _
  // Predicated region
  $region10: #{forward.9} parent=0 // pred_check
    _
  $region11: #{forward.9} parent=0 // pred_check_branch
    %13 = sbr.rel (0) target = $region13
  $region12: #{forward.9} parent=0 // pred_region
    _
  $region13: #{forward.9} parent=0 // pred_fallthru
    _
  %v14 = vld [vmem:[%s0] sm:$0xff]
  %v15 = vld [vmem:[%s0 + $0x8] sm:$0xff]
  %v16 = vld [vmem:[%s1] sm:$0x3]
  %v18 = vlaneseq
  %v19 = vshrl.u32 %v18, 7
  %v20 = vsub.s32 0, %v19
  %v21 = vrot.slane %v16, %v20
  %v22 = vlaneseq
  %v23 = vshrl.u32 %v22, 7
  %v24 = vsub.s32 1, %v23
  %v25 = vrot.slane %v16, %v24
  %v28 = vmul.f32 %v14, %v21
  %v29 = vmul.f32 %v15, %v25
  %v30 = vld [vmem:[%s2] sm:$0x3]
  %v32 = vlaneseq
  %v33 = vshrl.u32 %v32, 7
  %v34 = vsub.s32 0, %v33
  %v35 = vrot.slane %v30, %v34
  %v36 = vlaneseq
  %v37 = vshrl.u32 %v36, 7
  %v38 = vsub.s32 1, %v37
  %v39 = vrot.slane %v30, %v38
  %v42 = vadd.f32 %v28, %v35
  %v43 = vadd.f32 %v29, %v39
  %v44 = vmax.f32 %v42, 0.0
  %v45 = vmax.f32 %v43, 0.0
  %v46 = vpack.c.bf16 %v44, %v44
  %v47 = vpack.c.bf16 %v45, %v45
  %v50 = vunpack.c.l.b16 %v46
  %v51 = vunpack.c.l.b16 %v47
  %v52 = vpack.c.b16 %v51, %v50
  %54 = vst [vmem:[%s3] sm:$0xff] %v52
  // Predicated region
  $region14: #{forward.9} parent=0 // pred_check
    _
  $region15: #{forward.9} parent=0 // pred_check_branch
    %56 = sbr.rel (0) target = $region17
  $region16: #{forward.9} parent=0 // pred_region
    _
  $region17: #{forward.9} parent=0 // pred_fallthru
    _
  // Predicated region
  $region18: #{forward.9} parent=0 // pred_check
    _
  $region19: #{forward.9} parent=0 // pred_check_branch
    %58 = sbr.rel (0) target = $region21
  $region20: #{forward.9} parent=0 // pred_region
    _
  $region21: #{forward.9} parent=0 // pred_fallthru
    _

// kernel: forward.10
$region0: #{forward.10}
  #allocation0 [shape = 'u32[]', space=smem, size = 0x4, offset = 0x4, fixed_abs, tag = 'smem constant byte address 0x4 - core index']
  #allocation1 [shape = 'u32[144,128]{1,0:T(1,128)}', space=vmem, size = 0x12000, scoped, tag = 'internal scratch']
  %s0 = inlined_call_operand.vmem [shape: bf16[4,32,64], index: 0, kind: input, shape index: {}]
  %s1 = inlined_call_operand.vmem [shape: bf16[4,64,128], index: 1, kind: input, shape index: {}]
  %s2 = inlined_call_operand.vmem [shape: f32[4,32,128], index: 2, kind: output, shape index: {0}]
  %s3 = inlined_call_operand.vmem [shape: f32[4,1,2,128], index: 3, kind: output, shape index: {1}]
  %4 = xla_tuple %s2, %s3
  %s5 = sld [smem:[#allocation0]]
  $region49: #{forward.10} parent=0
    _
  %s7 = ssub.s32 1, %s5
  %s8 = scalar_select 0, %s7, %s5
  loop: start=0, step=1, limit=6
  $region2: #{forward.10} parent=0 // loop_pre_header
    _
  $region3: #{forward.10} parent=0 // loop_header
    %s10 = sphi 0, %s14
    %p11 = scmp.ge.s32.totalorder %s10, 6
    %s17 = sphi 0, %s29
    %s18 = sphi 0, %s25
    %s19 = sphi 0, %s17
    %s20 = sphi 0, %s18
    %s21 = sphi 0, %s19
    %s22 = sphi 0, %s20
    %s34 = sphi 0, %s36
    %s37 = sphi 0, %s34
    %s38 = sphi 0, %s37
    %s54 = sphi 0, %s38
    %s60 = sphi 0, %s62
    %s63 = sphi 0, %s60
    %s64 = sphi 0, %s63
    %s80 = sphi 0, %s64
    %s88 = sphi 0, %s90
    %s91 = sphi 0, %s88
    %s92 = sphi 0, %s91
    %s108 = sphi 0, %s92
    %s116 = sphi 0, %s118
    %s119 = sphi 0, %s116
    %s120 = sphi 0, %s119
    %s136 = sphi 0, %s120
  $region4: #{forward.10} parent=0 // loop_header_branch
    %13 = sbr.rel (%p11) target = $region8
  $region5: #{forward.10} parent=0 // loop_body
    %s15 = ssub.s32 %s10, 1
    %s16 = ssub.s32 %s10, 2
    %s23 = sadd.s32 1, %s18
    %p24 = scmp.ge.s32.totalorder %s23, 1
    %s25 = scalar_select %p24, 0, %s23
    %s26 = sadd.s32 1, %s17
    %s27 = scalar_select %p24, %s26, %s17
    %p28 = scmp.ge.s32.totalorder %s27, 4
    %s29 = scalar_select %p28, 0, %s27
    %s30 = ssub.s32 %s17, %s29
    %s31 = ssub.s32 %s18, %s25
    %s32 = sor.u32 %s30, %s31
    %p33 = scmp.eq.s32.totalorder %s32, 0
    %s35 = sadd.s32 %s34, 1
    %s36 = scalar_select %p33, %s34, %s35
    %p39 = pneg %p33
    %p40 = scmp.eq.s32.totalorder %s10, 3
    %p41 = por %p39, %p40
    %p42 = scmp.ne.s32.totalorder %s34, %s37
    %p43 = scmp.eq.s32.totalorder %s10, 0
    %p44 = por %p42, %p43
    %p45 = scmp.ne.s32.totalorder %s34, %s37
    %p46 = scmp.eq.s32.totalorder %s15, 3
    %p47 = por %p45, %p46
    %p48 = scmp.ne.s32.totalorder %s37, %s38
    %p49 = scmp.eq.s32.totalorder %s15, 0
    %p50 = por %p48, %p49
    %p51 = scmp.ne.s32.totalorder %s37, %s38
    %p52 = scmp.eq.s32.totalorder %s16, 3
    %p53 = por %p51, %p52
    %p55 = scmp.ne.s32.totalorder %s38, %s54
    %p56 = scmp.eq.s32.totalorder %s16, 0
    %p57 = por %p55, %p56
    %s58 = ssub.s32 %s17, %s29
    %p59 = scmp.eq.s32.totalorder %s58, 0
    %s61 = sadd.s32 %s60, 1
    %s62 = scalar_select %p59, %s60, %s61
    %p65 = pneg %p59
    %p66 = scmp.eq.s32.totalorder %s10, 3
    %p67 = por %p65, %p66
    %p68 = scmp.ne.s32.totalorder %s60, %s63
    %p69 = scmp.eq.s32.totalorder %s10, 0
    %p70 = por %p68, %p69
    %p71 = scmp.ne.s32.totalorder %s60, %s63
    %p72 = scmp.eq.s32.totalorder %s15, 3
    %p73 = por %p71, %p72
    %p74 = scmp.ne.s32.totalorder %s63, %s64
    %p75 = scmp.eq.s32.totalorder %s15, 0
    %p76 = por %p74, %p75
    %p77 = scmp.ne.s32.totalorder %s63, %s64
    %p78 = scmp.eq.s32.totalorder %s16, 3
    %p79 = por %p77, %p78
    %p81 = scmp.ne.s32.totalorder %s64, %s80
    %p82 = scmp.eq.s32.totalorder %s16, 0
    %p83 = por %p81, %p82
    %s84 = ssub.s32 %s17, %s29
    %s85 = ssub.s32 %s18, %s25
    %s86 = sor.u32 %s84, %s85
    %p87 = scmp.eq.s32.totalorder %s86, 0
    %s89 = sadd.s32 %s88, 1
    %s90 = scalar_select %p87, %s88, %s89
    %p93 = pneg %p87
    %p94 = scmp.eq.s32.totalorder %s10, 3
    %p95 = por %p93, %p94
    %p96 = scmp.ne.s32.totalorder %s88, %s91
    %p97 = scmp.eq.s32.totalorder %s10, 0
    %p98 = por %p96, %p97
    %p99 = scmp.ne.s32.totalorder %s88, %s91
    %p100 = scmp.eq.s32.totalorder %s15, 3
    %p101 = por %p99, %p100
    %p102 = scmp.ne.s32.totalorder %s91, %s92
    %p103 = scmp.eq.s32.totalorder %s15, 0
    %p104 = por %p102, %p103
    %p105 = scmp.ne.s32.totalorder %s91, %s92
    %p106 = scmp.eq.s32.totalorder %s16, 3
    %p107 = por %p105, %p106
    %p109 = scmp.ne.s32.totalorder %s92, %s108
    %p110 = scmp.eq.s32.totalorder %s16, 0
    %p111 = por %p109, %p110
    %s112 = ssub.s32 %s17, %s29
    %s113 = ssub.s32 %s18, %s25
    %s114 = sor.u32 %s112, %s113
    %p115 = scmp.eq.s32.totalorder %s114, 0
    %s117 = sadd.s32 %s116, 1
    %s118 = scalar_select %p115, %s116, %s117
    %p121 = pneg %p115
    %p122 = scmp.eq.s32.totalorder %s10, 3
    %p123 = por %p121, %p122
    %p124 = scmp.ne.s32.totalorder %s116, %s119
    %p125 = scmp.eq.s32.totalorder %s10, 0
    %p126 = por %p124, %p125
    %p127 = scmp.ne.s32.totalorder %s116, %s119
    %p128 = scmp.eq.s32.totalorder %s15, 3
    %p129 = por %p127, %p128
    %p130 = scmp.ne.s32.totalorder %s119, %s120
    %p131 = scmp.eq.s32.totalorder %s15, 0
    %p132 = por %p130, %p131
    %p133 = scmp.ne.s32.totalorder %s119, %s120
    %p134 = scmp.eq.s32.totalorder %s16, 3
    %p135 = por %p133, %p134
    %p137 = scmp.ne.s32.totalorder %s120, %s136
    %p138 = scmp.eq.s32.totalorder %s16, 0
    %p139 = por %p137, %p138
    %p140 = scmp.le.s32.totalorder 1, %s10
    %p141 = scmp.lt.s32.totalorder %s10, 5
    %p142 = pnand %p140, %p141
    %p143 = pneg %p142
    // Predicated region
    $region9: #{forward.10} parent=5 // pred_check
      _
    $region10: #{forward.10} parent=5 // pred_check_branch
      %145 = sbr.rel (%p142) target = $region12
    $region11: #{forward.10} parent=5 // pred_region
      %s146 = ssub.s32 %s10, 1
    $region12: #{forward.10} parent=5 // pred_fallthru
      _
    %p147 = scmp.lt.s32.totalorder %s10, 4
    // Predicated region
    $region13: #{forward.10} parent=5 // pred_check
      %p148 = pneg %p147
    $region14: #{forward.10} parent=5 // pred_check_branch
      %150 = sbr.rel (%p148) target = $region16
    $region15: #{forward.10} parent=5 // pred_region
      // Predicated region
      $region17: #{forward.10} parent=15 // pred_check
        %p151 = pneg %p44
      $region18: #{forward.10} parent=15 // pred_check_branch
        %153 = sbr.rel (%p151) target = $region20
      $region19: #{forward.10} parent=15 // pred_region
        %s154 = smul.u32 4, %s18
        %p155 = scmp.lt.s32.totalorder %s17, 3
        %s156 = scalar_select %p155, %s17, 3
        %p157 = scmp.lt.s32.totalorder %s154, 3
        %s158 = scalar_select %p157, %s154, 3
        %s159 = smul.addr %s156, 4
        %s160 = sadd.s32 %s158, %s159
        %s161 = smul.addr %s160, 4
        %s162 = scalar_lea.vmem %s0, %s161
        %s163 = smul.u32 4, %s18
      $region20: #{forward.10} parent=15 // pred_fallthru
        _
      // Predicated region
      $region21: #{forward.10} parent=15 // pred_check
        %p164 = pneg %p70
      $region22: #{forward.10} parent=15 // pred_check_branch
        %166 = sbr.rel (%p164) target = $region24
      $region23: #{forward.10} parent=15 // pred_region
        %p167 = scmp.lt.s32.totalorder %s17, 3
        %s168 = scalar_select %p167, %s17, 3
        %s169 = smul.addr %s168, 8
        %s170 = smul.addr %s169, 4
        %s171 = scalar_lea.vmem %s1, %s170
      $region24: #{forward.10} parent=15 // pred_fallthru
        _
    $region16: #{forward.10} parent=5 // pred_fallthru
      _
    %p172 = scmp.le.s32.totalorder 1, %s10
    %p173 = scmp.lt.s32.totalorder %s10, 5
    %p174 = pnand %p172, %p173
    %p175 = pneg %p174
    // Predicated region
    $region25: #{forward.10} parent=5 // pred_check
      _
    $region26: #{forward.10} parent=5 // pred_check_branch
      %177 = sbr.rel (%p174) target = $region28
    $region27: #{forward.10} parent=5 // pred_region
      %s178 = ssub.s32 %s10, 1
      %s179 = smul.u32 4, %s20
      %p180 = scmp.lt.s32.totalorder %s19, 3
      %s181 = scalar_select %p180, %s19, 3
      %p182 = scmp.lt.s32.totalorder %s179, 3
      %s183 = scalar_select %p182, %s179, 3
      %s184 = smul.addr %s181, 4
      %s185 = sadd.s32 %s183, %s184
      %s186 = smul.addr %s185, 4
      %s187 = scalar_lea.vmem %s0, %s186
      %p188 = pneg %p50
      %p189 = pneg %p47
      %p190 = scmp.lt.s32.totalorder %s19, 3
      %s191 = scalar_select %p190, %s19, 3
      %s192 = smul.addr %s191, 8
      %s193 = smul.addr %s192, 4
      %s194 = scalar_lea.vmem %s1, %s193
      %p195 = pneg %p76
      %p196 = pneg %p73
      %p197 = pneg %p104
      %p198 = pneg %p101
      %s199 = smul.u32 4, %s20
      %p200 = scmp.lt.s32.totalorder %s19, 3
      %s201 = scalar_select %p200, %s19, 3
      %p202 = scmp.lt.s32.totalorder %s199, 3
      %s203 = scalar_select %p202, %s199, 3
      %s204 = smul.addr %s201, 4
      %s205 = sadd.s32 %s203, %s204
      %s206 = smul.addr %s205, 8
      %s207 = scalar_lea.vmem %s2, %s206
      %p208 = pneg %p132
      %p209 = pneg %p129
      %p210 = scmp.lt.s32.totalorder %s19, 3
      %s211 = scalar_select %p210, %s19, 3
      %p212 = scmp.lt.s32.totalorder %s20, 0
      %s213 = scalar_select %p212, %s20, 0
      %s214 = sadd.s32 %s213, %s211
      %s215 = smul.addr %s214, 2
      %s216 = scalar_lea.vmem %s3, %s215
      %s217 = smul.u32 4, %s20
      %p218 = scmp.lt.s32.totalorder %s19, 3
      %s219 = scalar_select %p218, %s19, 3
      %p220 = scmp.lt.s32.totalorder %s217, 3
      %s221 = scalar_select %p220, %s217, 3
      %s222 = smul.addr %s219, 4
      %s223 = sadd.s32 %s221, %s222
      %s224 = smul.addr %s223, 4
      %s225 = scalar_lea.vmem %s0, %s224
      %s226 = smul.u32 4, %s20
      %p227 = scmp.lt.s32.totalorder %s19, 3
      %s228 = scalar_select %p227, %s19, 3
      %s229 = smul.addr %s228, 8
      %s230 = smul.addr %s229, 4
      %s231 = scalar_lea.vmem %s1, %s230
      %s232 = smul.u32 4, %s20
      %p233 = scmp.lt.s32.totalorder %s19, 3
      %s234 = scalar_select %p233, %s19, 3
      %p235 = scmp.lt.s32.totalorder %s232, 3
      %s236 = scalar_select %p235, %s232, 3
      %s237 = smul.addr %s234, 4
      %s238 = sadd.s32 %s236, %s237
      %s239 = smul.addr %s238, 8
      %s240 = scalar_lea.vmem %s2, %s239
      %s241 = smul.u32 4, %s20
      %p242 = scmp.lt.s32.totalorder %s19, 3
      %s243 = scalar_select %p242, %s19, 3
      %p244 = scmp.lt.s32.totalorder %s20, 0
      %s245 = scalar_select %p244, %s20, 0
      %s246 = sadd.s32 %s245, %s243
      %s247 = smul.addr %s246, 2
      %s248 = scalar_lea.vmem %s3, %s247
      %v250 = vld [vmem:[%s225] sm:$0xf]
      %v251 = vld [vmem:[%s225 + $0x4] sm:$0xf]
      %v252 = vld [vmem:[%s225 + $0x8] sm:$0xf]
      %v253 = vld [vmem:[%s225 + $0xc] sm:$0xf]
      %v254 = vld [vmem:[%s231] sm:$0xf]
      %v255 = vld [vmem:[%s231 + $0x4] sm:$0xf]
      %v256 = vld [vmem:[%s231 + $0x8] sm:$0xf]
      %v257 = vld [vmem:[%s231 + $0xc] sm:$0xf]
      %v258 = vld [vmem:[%s231 + $0x10] sm:$0xf]
      %v259 = vld [vmem:[%s231 + $0x14] sm:$0xf]
      %v260 = vld [vmem:[%s231 + $0x18] sm:$0xf]
      %v261 = vld [vmem:[%s231 + $0x1c] sm:$0xf]
      %v266 = vunpack.c.l.b16 %v250
      %v267 = vunpack.c.l.b16 %v251
      %v268 = vunpack.c.l.b16 %v252
      %v269 = vunpack.c.l.b16 %v253
      %v270 = vpack.c.b16 %v267, %v266
      %v271 = vpack.c.b16 %v269, %v268
      %v280 = vunpack.c.l.b16 %v254
      %v281 = vunpack.c.l.b16 %v255
      %v282 = vunpack.c.l.b16 %v256
      %v283 = vunpack.c.l.b16 %v257
      %v284 = vunpack.c.l.b16 %v258
      %v285 = vunpack.c.l.b16 %v259
      %v286 = vunpack.c.l.b16 %v260
      %v287 = vunpack.c.l.b16 %v261
      %v288 = vpack.c.b16 %v281, %v280
      %v289 = vpack.c.b16 %v283, %v282
      %v290 = vpack.c.b16 %v285, %v284
      %v291 = vpack.c.b16 %v287, %v286
      %vm296 = vcmask 523264
      %v298 = vsel %vm296, %v270, 0
      %v301 = vsel %vm296, %v271, 0
      %303 = vmatprep.subr.bf16.mxu0 0
      %304 = vmatpush1.bf16.msra.mxu0 %v288
      %305 = vmatprep.subr.bf16.mxu0 0
      %306 = vmatpush1.bf16.msra.mxu0 %v289
      %307 = vmatprep.subr.bf16.mxu0 0
      %308 = vmatpush1.bf16.msra.mxu0 %v290
      %309 = vmatprep.subr.bf16.mxu0 0
      %310 = vmatpush1.bf16.msra.mxu0 %v291
      %311 = vmatprep.subr.bf16.mxu0 0
      %312 = vmatpush1.bf16.msra.mxu0 0
      %313 = vmatprep.subr.bf16.mxu0 0
      %314 = vmatpush1.bf16.msra.mxu0 0
      %315 = vmatprep.subr.bf16.mxu0 0
      %316 = vmatpush1.bf16.msra.mxu0 0
      %317 = vmatprep.subr.bf16.mxu0 0
      %318 = vmatpush1.bf16.msra.mxu0 0
      %319 = vmatprep.subr.bf16.mxu0 0
      %320 = vmatpush1.bf16.msra.mxu0 0
      %321 = vmatprep.subr.bf16.mxu0 0
      %322 = vmatpush1.bf16.msra.mxu0 0
      %323 = vmatprep.subr.bf16.mxu0 0
      %324 = vmatpush1.bf16.msra.mxu0 0
      %325 = vmatprep.subr.bf16.mxu0 0
      %326 = vmatpush1.bf16.msra.mxu0 0
      %327 = vmatprep.subr.bf16.mxu0 0
      %328 = vmatpush1.bf16.msra.mxu0 0
      %329 = vmatprep.subr.bf16.mxu0 0
      %330 = vmatpush1.bf16.msra.mxu0 0
      %331 = vmatprep.subr.bf16.mxu0 0
      %332 = vmatpush1.bf16.msra.mxu0 0
      %333 = vmatprep.subr.bf16.mxu0 0
      %334 = vmatpush1.bf16.msra.mxu0 0
      %335 = vmatprep.mubr.bf16.mxu0 0
      %336 = vmatmul.mubr.bf16.gmra.mrb[0].mxu0 %v298
      %v337 = vpop.f32.mrb[0].mxu0
      %v338 = vadd.f32 0.0, %v337
      %v339 = vpop.f32.mrb[0].mxu0
      %v340 = vpop.f32.mrb[0].mxu0
      %v341 = vadd.f32 0.0, %v340
      %v342 = vpop.f32.mrb[0].mxu0
      %343 = vmatprep.mubr.bf16.mxu0 0
      %344 = vmatmul.mubr.bf16.gmra.mrb[0].mxu0 %v301
      %v345 = vpop.f32.mrb[0].mxu0
      %v346 = vadd.f32 0.0, %v345
      %v347 = vpop.f32.mrb[0].mxu0
      %v348 = vpop.f32.mrb[0].mxu0
      %v349 = vadd.f32 0.0, %v348
      %v350 = vpop.f32.mrb[0].mxu0
      %351 = vdwg.mxu0
      %352 = vst [vmem:[%s240] sm:$0xff] %v338
      %353 = vst [vmem:[%s240 + $0x8] sm:$0xff] %v341
      %354 = vst [vmem:[%s240 + $0x10] sm:$0xff] %v346
      %355 = vst [vmem:[%s240 + $0x18] sm:$0xff] %v349
      %v356 = vadd.f32 %v338, %v341
      %v357 = vadd.f32 %v356, %v346
      %v358 = vadd.f32 %v357, %v349
      %v359 = vrot.slane %v358, 4
      %v360 = vadd.f32 %v358, %v359
      %v361 = vrot.slane %v360, 2
      %v362 = vadd.f32 %v360, %v361
      %v363 = vrot.slane %v362, 1
      %v364 = vadd.f32 %v362, %v363
      %v365 = vmul.f32 %v338, %v338
      %v366 = vmul.f32 %v341, %v341
      %v367 = vmul.f32 %v346, %v346
      %v368 = vmul.f32 %v349, %v349
      %v369 = vadd.f32 %v365, %v366
      %v370 = vadd.f32 %v369, %v367
      %v371 = vadd.f32 %v370, %v368
      %v372 = vrot.slane %v371, 4
      %v373 = vadd.f32 %v371, %v372
      %v374 = vrot.slane %v373, 2
      %v375 = vadd.f32 %v373, %v374
      %v376 = vrot.slane %v375, 1
      %v377 = vadd.f32 %v375, %v376
      %vm378 = vcmask 1040384
      %v379 = vsel %vm378, %v364, %v377
      %380 = vst [vmem:[%s248] sm:$0x3] %v379
      %s381 = smul.u32 4, %s20
      %p382 = scmp.lt.s32.totalorder %s19, 3
      %s383 = scalar_select %p382, %s19, 3
      %p384 = scmp.lt.s32.totalorder %s381, 3
      %s385 = scalar_select %p384, %s381, 3
      %s386 = smul.addr %s383, 4
      %s387 = sadd.s32 %s385, %s386
      %s388 = smul.addr %s387, 8
      %s389 = scalar_lea.vmem %s2, %s388
      %p390 = scmp.lt.s32.totalorder %s19, 3
      %s391 = scalar_select %p390, %s19, 3
      %p392 = scmp.lt.s32.totalorder %s20, 0
      %s393 = scalar_select %p392, %s20, 0
      %s394 = sadd.s32 %s393, %s391
      %s395 = smul.addr %s394, 2
      %s396 = scalar_lea.vmem %s3, %s395
      // Predicated region
      $region29: #{forward.10} parent=27 // pred_check
        %p397 = pneg %p101
      $region30: #{forward.10} parent=27 // pred_check_branch
        %399 = sbr.rel (%p397) target = $region32
      $region31: #{forward.10} parent=27 // pred_region
        %s400 = smul.u32 4, %s20
      $region32: #{forward.10} parent=27 // pred_fallthru
        _
      // Predicated region
      $region33: #{forward.10} parent=27 // pred_check
        %p401 = pneg %p129
      $region34: #{forward.10} parent=27 // pred_check_branch
        %403 = sbr.rel (%p401) target = $region36
      $region35: #{forward.10} parent=27 // pred_region
        _
      $region36: #{forward.10} parent=27 // pred_fallthru
        _
    $region28: #{forward.10} parent=5 // pred_fallthru
      _
    %p404 = scmp.le.s32.totalorder 2, %s10
    // Predicated region
    $region37: #{forward.10} parent=5 // pred_check
      %p405 = pneg %p404
    $region38: #{forward.10} parent=5 // pred_check_branch
      %407 = sbr.rel (%p405) target = $region40
    $region39: #{forward.10} parent=5 // pred_region
      %s408 = ssub.s32 %s10, 2
      // Predicated region
      $region41: #{forward.10} parent=39 // pred_check
        %p409 = pneg %p107
      $region42: #{forward.10} parent=39 // pred_check_branch
        %411 = sbr.rel (%p409) target = $region44
      $region43: #{forward.10} parent=39 // pred_region
        %s412 = smul.u32 4, %s22
        %p413 = scmp.lt.s32.totalorder %s21, 3
        %s414 = scalar_select %p413, %s21, 3
        %p415 = scmp.lt.s32.totalorder %s412, 3
        %s416 = scalar_select %p415, %s412, 3
        %s417 = smul.addr %s414, 4
        %s418 = sadd.s32 %s416, %s417
        %s419 = smul.addr %s418, 8
        %s420 = scalar_lea.vmem %s2, %s419
      $region44: #{forward.10} parent=39 // pred_fallthru
        _
      // Predicated region
      $region45: #{forward.10} parent=39 // pred_check
        %p421 = pneg %p135
      $region46: #{forward.10} parent=39 // pred_check_branch
        %423 = sbr.rel (%p421) target = $region48
      $region47: #{forward.10} parent=39 // pred_region
        %p424 = scmp.lt.s32.totalorder %s21, 3
        %s425 = scalar_select %p424, %s21, 3
        %p426 = scmp.lt.s32.totalorder %s22, 0
        %s427 = scalar_select %p426, %s22, 0
        %s428 = sadd.s32 %s427, %s425
        %s429 = smul.addr %s428, 2
        %s430 = scalar_lea.vmem %s3, %s429
      $region48: #{forward.10} parent=39 // pred_fallthru
        _
    $region40: #{forward.10} parent=5 // pred_fallthru
      _
  $region6: #{forward.10} parent=0 // loop_footer
    %s14 = sadd.s32 1, %s10
  $region7: #{forward.10} parent=0 // loop_footer_branch
    %9 = sbr.rel target = $region3
  $region8: #{forward.10} parent=0 // loop_exit
    _

// kernel: forward.11
$region0: #{forward.11}
  #allocation0 [shape = 'u32[]', space=smem, size = 0x4, offset = 0x4, fixed_abs, tag = 'smem constant byte address 0x4 - core index']
  #allocation1 [shape = 'u32[144,128]{1,0:T(1,128)}', space=vmem, size = 0x12000, scoped, tag = 'internal scratch']
  %s0 = inlined_call_operand.vmem [shape: f32[4,32,128], index: 0, kind: input, shape index: {}]
  %s1 = inlined_call_operand.vmem [shape: f32[1,128], index: 1, kind: input, shape index: {}]
  %s2 = inlined_call_operand.vmem [shape: f32[1,128], index: 2, kind: input, shape index: {}]
  %s3 = inlined_call_operand.vmem [shape: bf16[4,32,128], index: 3, kind: output, shape index: {}]
  %s4 = sld [smem:[#allocation0]]
  $region45: #{forward.11} parent=0
    _
  %s6 = ssub.s32 1, %s4
  %s7 = scalar_select 0, %s6, %s4
  loop: start=0, step=1, limit=6
  $region2: #{forward.11} parent=0 // loop_pre_header
    _
  $region3: #{forward.11} parent=0 // loop_header
    %s9 = sphi 0, %s13
    %p10 = scmp.ge.s32.totalorder %s9, 6
    %s16 = sphi 0, %s28
    %s17 = sphi 0, %s24
    %s18 = sphi 0, %s16
    %s19 = sphi 0, %s17
    %s20 = sphi 0, %s18
    %s21 = sphi 0, %s19
    %s33 = sphi 0, %s35
    %s36 = sphi 0, %s33
    %s37 = sphi 0, %s36
    %s53 = sphi 0, %s37
    %s57 = sphi 0, %s57
    %s59 = sphi 0, %s57
    %s60 = sphi 0, %s59
    %s74 = sphi 0, %s60
    %s78 = sphi 0, %s78
    %s80 = sphi 0, %s78
    %s81 = sphi 0, %s80
    %s95 = sphi 0, %s81
    %s103 = sphi 0, %s105
    %s106 = sphi 0, %s103
    %s107 = sphi 0, %s106
    %s123 = sphi 0, %s107
  $region4: #{forward.11} parent=0 // loop_header_branch
    %12 = sbr.rel (%p10) target = $region8
  $region5: #{forward.11} parent=0 // loop_body
    %s14 = ssub.s32 %s9, 1
    %s15 = ssub.s32 %s9, 2
    %s22 = sadd.s32 1, %s17
    %p23 = scmp.ge.s32.totalorder %s22, 1
    %s24 = scalar_select %p23, 0, %s22
    %s25 = sadd.s32 1, %s16
    %s26 = scalar_select %p23, %s25, %s16
    %p27 = scmp.ge.s32.totalorder %s26, 4
    %s28 = scalar_select %p27, 0, %s26
    %s29 = ssub.s32 %s16, %s28
    %s30 = ssub.s32 %s17, %s24
    %s31 = sor.u32 %s29, %s30
    %p32 = scmp.eq.s32.totalorder %s31, 0
    %s34 = sadd.s32 %s33, 1
    %s35 = scalar_select %p32, %s33, %s34
    %p38 = pneg %p32
    %p39 = scmp.eq.s32.totalorder %s9, 3
    %p40 = por %p38, %p39
    %p41 = scmp.ne.s32.totalorder %s33, %s36
    %p42 = scmp.eq.s32.totalorder %s9, 0
    %p43 = por %p41, %p42
    %p44 = scmp.ne.s32.totalorder %s33, %s36
    %p45 = scmp.eq.s32.totalorder %s14, 3
    %p46 = por %p44, %p45
    %p47 = scmp.ne.s32.totalorder %s36, %s37
    %p48 = scmp.eq.s32.totalorder %s14, 0
    %p49 = por %p47, %p48
    %p50 = scmp.ne.s32.totalorder %s36, %s37
    %p51 = scmp.eq.s32.totalorder %s15, 3
    %p52 = por %p50, %p51
    %p54 = scmp.ne.s32.totalorder %s37, %s53
    %p55 = scmp.eq.s32.totalorder %s15, 0
    %p56 = por %p54, %p55
    %s58 = sadd.s32 %s57, 1
    %p61 = scmp.eq.s32.totalorder %s9, 3
    %p62 = scmp.ne.s32.totalorder %s57, %s59
    %p63 = scmp.eq.s32.totalorder %s9, 0
    %p64 = por %p62, %p63
    %p65 = scmp.ne.s32.totalorder %s57, %s59
    %p66 = scmp.eq.s32.totalorder %s14, 3
    %p67 = por %p65, %p66
    %p68 = scmp.ne.s32.totalorder %s59, %s60
    %p69 = scmp.eq.s32.totalorder %s14, 0
    %p70 = por %p68, %p69
    %p71 = scmp.ne.s32.totalorder %s59, %s60
    %p72 = scmp.eq.s32.totalorder %s15, 3
    %p73 = por %p71, %p72
    %p75 = scmp.ne.s32.totalorder %s60, %s74
    %p76 = scmp.eq.s32.totalorder %s15, 0
    %p77 = por %p75, %p76
    %s79 = sadd.s32 %s78, 1
    %p82 = scmp.eq.s32.totalorder %s9, 3
    %p83 = scmp.ne.s32.totalorder %s78, %s80
    %p84 = scmp.eq.s32.totalorder %s9, 0
    %p85 = por %p83, %p84
    %p86 = scmp.ne.s32.totalorder %s78, %s80
    %p87 = scmp.eq.s32.totalorder %s14, 3
    %p88 = por %p86, %p87
    %p89 = scmp.ne.s32.totalorder %s80, %s81
    %p90 = scmp.eq.s32.totalorder %s14, 0
    %p91 = por %p89, %p90
    %p92 = scmp.ne.s32.totalorder %s80, %s81
    %p93 = scmp.eq.s32.totalorder %s15, 3
    %p94 = por %p92, %p93
    %p96 = scmp.ne.s32.totalorder %s81, %s95
    %p97 = scmp.eq.s32.totalorder %s15, 0
    %p98 = por %p96, %p97
    %s99 = ssub.s32 %s16, %s28
    %s100 = ssub.s32 %s17, %s24
    %s101 = sor.u32 %s99, %s100
    %p102 = scmp.eq.s32.totalorder %s101, 0
    %s104 = sadd.s32 %s103, 1
    %s105 = scalar_select %p102, %s103, %s104
    %p108 = pneg %p102
    %p109 = scmp.eq.s32.totalorder %s9, 3
    %p110 = por %p108, %p109
    %p111 = scmp.ne.s32.totalorder %s103, %s106
    %p112 = scmp.eq.s32.totalorder %s9, 0
    %p113 = por %p111, %p112
    %p114 = scmp.ne.s32.totalorder %s103, %s106
    %p115 = scmp.eq.s32.totalorder %s14, 3
    %p116 = por %p114, %p115
    %p117 = scmp.ne.s32.totalorder %s106, %s107
    %p118 = scmp.eq.s32.totalorder %s14, 0
    %p119 = por %p117, %p118
    %p120 = scmp.ne.s32.totalorder %s106, %s107
    %p121 = scmp.eq.s32.totalorder %s15, 3
    %p122 = por %p120, %p121
    %p124 = scmp.ne.s32.totalorder %s107, %s123
    %p125 = scmp.eq.s32.totalorder %s15, 0
    %p126 = por %p124, %p125
    %p127 = scmp.le.s32.totalorder 1, %s9
    %p128 = scmp.lt.s32.totalorder %s9, 5
    %p129 = pnand %p127, %p128
    %p130 = pneg %p129
    // Predicated region
    $region9: #{forward.11} parent=5 // pred_check
      _
    $region10: #{forward.11} parent=5 // pred_check_branch
      %132 = sbr.rel (%p129) target = $region12
    $region11: #{forward.11} parent=5 // pred_region
      %s133 = ssub.s32 %s9, 1
      // Predicated region
      $region13: #{forward.11} parent=11 // pred_check
        %p134 = pneg %p70
      $region14: #{forward.11} parent=11 // pred_check_branch
        %136 = sbr.rel (%p134) target = $region16
      $region15: #{forward.11} parent=11 // pred_region
        _
      $region16: #{forward.11} parent=11 // pred_fallthru
        _
      // Predicated region
      $region17: #{forward.11} parent=11 // pred_check
        %p137 = pneg %p91
      $region18: #{forward.11} parent=11 // pred_check_branch
        %139 = sbr.rel (%p137) target = $region20
      $region19: #{forward.11} parent=11 // pred_region
        _
      $region20: #{forward.11} parent=11 // pred_fallthru
        _
    $region12: #{forward.11} parent=5 // pred_fallthru
      _
    %p140 = scmp.lt.s32.totalorder %s9, 4
    // Predicated region
    $region21: #{forward.11} parent=5 // pred_check
      %p141 = pneg %p140
    $region22: #{forward.11} parent=5 // pred_check_branch
      %143 = sbr.rel (%p141) target = $region24
    $region23: #{forward.11} parent=5 // pred_region
      // Predicated region
      $region25: #{forward.11} parent=23 // pred_check
        %p144 = pneg %p43
      $region26: #{forward.11} parent=23 // pred_check_branch
        %146 = sbr.rel (%p144) target = $region28
      $region27: #{forward.11} parent=23 // pred_region
        %s147 = smul.u32 4, %s17
        %p148 = scmp.lt.s32.totalorder %s16, 3
        %s149 = scalar_select %p148, %s16, 3
        %p150 = scmp.lt.s32.totalorder %s147, 3
        %s151 = scalar_select %p150, %s147, 3
        %s152 = smul.addr %s149, 4
        %s153 = sadd.s32 %s151, %s152
        %s154 = smul.addr %s153, 8
        %s155 = scalar_lea.vmem %s0, %s154
        %s156 = smul.u32 4, %s17
      $region28: #{forward.11} parent=23 // pred_fallthru
        _
    $region24: #{forward.11} parent=5 // pred_fallthru
      _
    %p157 = scmp.le.s32.totalorder 1, %s9
    %p158 = scmp.lt.s32.totalorder %s9, 5
    %p159 = pnand %p157, %p158
    %p160 = pneg %p159
    // Predicated region
    $region29: #{forward.11} parent=5 // pred_check
      _
    $region30: #{forward.11} parent=5 // pred_check_branch
      %162 = sbr.rel (%p159) target = $region32
    $region31: #{forward.11} parent=5 // pred_region
      %s163 = ssub.s32 %s9, 1
      %s164 = smul.u32 4, %s19
      %p165 = scmp.lt.s32.totalorder %s18, 3
      %s166 = scalar_select %p165, %s18, 3
      %p167 = scmp.lt.s32.totalorder %s164, 3
      %s168 = scalar_select %p167, %s164, 3
      %s169 = smul.addr %s166, 4
      %s170 = sadd.s32 %s168, %s169
      %s171 = smul.addr %s170, 8
      %s172 = scalar_lea.vmem %s0, %s171
      %p173 = pneg %p49
      %p174 = pneg %p46
      %p175 = pneg %p70
      %p176 = pneg %p67
      %p177 = pneg %p91
      %p178 = pneg %p88
      %p179 = pneg %p119
      %p180 = pneg %p116
      %s181 = smul.u32 4, %s19
      %p182 = scmp.lt.s32.totalorder %s18, 3
      %s183 = scalar_select %p182, %s18, 3
      %p184 = scmp.lt.s32.totalorder %s181, 3
      %s185 = scalar_select %p184, %s181, 3
      %s186 = smul.addr %s183, 4
      %s187 = sadd.s32 %s185, %s186
      %s188 = smul.addr %s187, 4
      %s189 = scalar_lea.vmem %s3, %s188
      %s190 = smul.u32 4, %s19
      %p191 = scmp.lt.s32.totalorder %s18, 3
      %s192 = scalar_select %p191, %s18, 3
      %p193 = scmp.lt.s32.totalorder %s190, 3
      %s194 = scalar_select %p193, %s190, 3
      %s195 = smul.addr %s192, 4
      %s196 = sadd.s32 %s194, %s195
      %s197 = smul.addr %s196, 8
      %s198 = scalar_lea.vmem %s0, %s197
      %s199 = smul.u32 4, %s19
      %s200 = smul.u32 4, %s19
      %p201 = scmp.lt.s32.totalorder %s18, 3
      %s202 = scalar_select %p201, %s18, 3
      %p203 = scmp.lt.s32.totalorder %s200, 3
      %s204 = scalar_select %p203, %s200, 3
      %s205 = smul.addr %s202, 4
      %s206 = sadd.s32 %s204, %s205
      %s207 = smul.addr %s206, 4
      %s208 = scalar_lea.vmem %s3, %s207
      %s209 = smul.u32 4, %s19
      %v210 = vld [vmem:[%s198] sm:$0xff]
      %v211 = vld [vmem:[%s198 + $0x8] sm:$0xff]
      %v212 = vld [vmem:[%s198 + $0x10] sm:$0xff]
      %v213 = vld [vmem:[%s198 + $0x18] sm:$0xff]
      %v214 = vld [vmem:[%s1] sm:$0x1]
      %v216 = vlaneseq
      %v217 = vshrl.u32 %v216, 7
      %v218 = vsub.s32 0, %v217
      %v219 = vrot.slane %v214, %v218
      %v221 = vmul.f32 %v210, %v219
      %v222 = vmul.f32 %v211, %v219
      %v223 = vmul.f32 %v212, %v219
      %v224 = vmul.f32 %v213, %v219
      %v225 = vld [vmem:[%s2] sm:$0x1]
      %v227 = vlaneseq
      %v228 = vshrl.u32 %v227, 7
      %v229 = vsub.s32 0, %v228
      %v230 = vrot.slane %v225, %v229
      %v232 = vadd.f32 %v221, %v230
      %v233 = vadd.f32 %v222, %v230
      %v234 = vadd.f32 %v223, %v230
      %v235 = vadd.f32 %v224, %v230
      %v236 = vmax.f32 %v232, 0.0
      %v237 = vmax.f32 %v233, 0.0
      %v238 = vmax.f32 %v234, 0.0
      %v239 = vmax.f32 %v235, 0.0
      %v240 = vpack.c.bf16 %v237, %v236
      %v241 = vpack.c.bf16 %v239, %v238
      %v244 = vunpack.c.l.b16 %v240
      %v245 = vunpack.c.h.b16 %v240
      %v246 = vunpack.c.l.b16 %v241
      %v247 = vunpack.c.h.b16 %v241
      %v248 = vpack.c.b16 %v244, %v244
      %v249 = vpack.c.b16 %v245, %v245
      %v250 = vpack.c.b16 %v246, %v246
      %v251 = vpack.c.b16 %v247, %v247
      %256 = vst [vmem:[%s208] sm:$0xf] %v248
      %257 = vst [vmem:[%s208 + $0x4] sm:$0xf] %v249
      %258 = vst [vmem:[%s208 + $0x8] sm:$0xf] %v250
      %259 = vst [vmem:[%s208 + $0xc] sm:$0xf] %v251
      %s260 = smul.u32 4, %s19
      %p261 = scmp.lt.s32.totalorder %s18, 3
      %s262 = scalar_select %p261, %s18, 3
      %p263 = scmp.lt.s32.totalorder %s260, 3
      %s264 = scalar_select %p263, %s260, 3
      %s265 = smul.addr %s262, 4
      %s266 = sadd.s32 %s264, %s265
      %s267 = smul.addr %s266, 4
      %s268 = scalar_lea.vmem %s3, %s267
      // Predicated region
      $region33: #{forward.11} parent=31 // pred_check
        %p269 = pneg %p116
      $region34: #{forward.11} parent=31 // pred_check_branch
        %271 = sbr.rel (%p269) target = $region36
      $region35: #{forward.11} parent=31 // pred_region
        %s272 = smul.u32 4, %s19
      $region36: #{forward.11} parent=31 // pred_fallthru
        _
    $region32: #{forward.11} parent=5 // pred_fallthru
      _
    %p273 = scmp.le.s32.totalorder 2, %s9
    // Predicated region
    $region37: #{forward.11} parent=5 // pred_check
      %p274 = pneg %p273
    $region38: #{forward.11} parent=5 // pred_check_branch
      %276 = sbr.rel (%p274) target = $region40
    $region39: #{forward.11} parent=5 // pred_region
      %s277 = ssub.s32 %s9, 2
      // Predicated region
      $region41: #{forward.11} parent=39 // pred_check
        %p278 = pneg %p122
      $region42: #{forward.11} parent=39 // pred_check_branch
        %280 = sbr.rel (%p278) target = $region44
      $region43: #{forward.11} parent=39 // pred_region
        %s281 = smul.u32 4, %s21
        %p282 = scmp.lt.s32.totalorder %s20, 3
        %s283 = scalar_select %p282, %s20, 3
        %p284 = scmp.lt.s32.totalorder %s281, 3
        %s285 = scalar_select %p284, %s281, 3
        %s286 = smul.addr %s283, 4
        %s287 = sadd.s32 %s285, %s286
        %s288 = smul.addr %s287, 4
        %s289 = scalar_lea.vmem %s3, %s288
      $region44: #{forward.11} parent=39 // pred_fallthru
        _
    $region40: #{forward.11} parent=5 // pred_fallthru
      _
  $region6: #{forward.11} parent=0 // loop_footer
    %s13 = sadd.s32 1, %s9
  $region7: #{forward.11} parent=0 // loop_footer_branch
    %8 = sbr.rel target = $region3
  $region8: #{forward.11} parent=0 // loop_exit
    _

// kernel: forward.12
$region0: #{forward.12}
  #allocation0 [shape = 'u32[]', space=smem, size = 0x4, offset = 0x4, fixed_abs, tag = 'smem constant byte address 0x4 - core index']
  #allocation1 [shape = 'u32[144,128]{1,0:T(1,128)}', space=vmem, size = 0x12000, scoped, tag = 'internal scratch']
  %s0 = inlined_call_operand.vmem [shape: bf16[1,128,72], index: 0, kind: input, shape index: {}]
  %s1 = inlined_call_operand.vmem [shape: bf16[1,72,128], index: 1, kind: input, shape index: {}]
  %s2 = inlined_call_operand.vmem [shape: f32[1,128,128], index: 2, kind: output, shape index: {0}]
  %s3 = inlined_call_operand.vmem [shape: f32[1,1,2,128], index: 3, kind: output, shape index: {1}]
  %4 = xla_tuple %s2, %s3
  %s5 = sld [smem:[#allocation0]]
  $region26: #{forward.12} parent=0
    _
  %s7 = ssub.s32 1, %s5
  %s8 = scalar_select 0, %s7, %s5
  // Predicated region
  $region2: #{forward.12} parent=0 // pred_check
    _
  $region3: #{forward.12} parent=0 // pred_check_branch
    %10 = sbr.rel (0) target = $region5
  $region4: #{forward.12} parent=0 // pred_region
    _
  $region5: #{forward.12} parent=0 // pred_fallthru
    _
  // Predicated region
  $region6: #{forward.12} parent=0 // pred_check
    _
  $region7: #{forward.12} parent=0 // pred_check_branch
    %12 = sbr.rel (0) target = $region9
  $region8: #{forward.12} parent=0 // pred_region
    _
  $region9: #{forward.12} parent=0 // pred_fallthru
    _
  %v14 = vld [vmem:[%s0] sm:$0xf]
  %v15 = vld [vmem:[%s0 + $0x4] sm:$0xf]
  %v16 = vld [vmem:[%s0 + $0x8] sm:$0xf]
  %v17 = vld [vmem:[%s0 + $0xc] sm:$0xf]
  %v18 = vld [vmem:[%s0 + $0x10] sm:$0xf]
  %v19 = vld [vmem:[%s0 + $0x14] sm:$0xf]
  %v20 = vld [vmem:[%s0 + $0x18] sm:$0xf]
  %v21 = vld [vmem:[%s0 + $0x1c] sm:$0xf]
  %v22 = vld [vmem:[%s0 + $0x20] sm:$0xf]
  %v23 = vld [vmem:[%s0 + $0x24] sm:$0xf]
  %v24 = vld [vmem:[%s0 + $0x28] sm:$0xf]
  %v25 = vld [vmem:[%s0 + $0x2c] sm:$0xf]
  %v26 = vld [vmem:[%s0 + $0x30] sm:$0xf]
  %v27 = vld [vmem:[%s0 + $0x34] sm:$0xf]
  %v28 = vld [vmem:[%s0 + $0x38] sm:$0xf]
  %v29 = vld [vmem:[%s0 + $0x3c] sm:$0xf]
  %v30 = vld [vmem:[%s1] sm:$0xf]
  %v31 = vld [vmem:[%s1 + $0x4] sm:$0xf]
  %v32 = vld [vmem:[%s1 + $0x8] sm:$0xf]
  %v33 = vld [vmem:[%s1 + $0xc] sm:$0xf]
  %v34 = vld [vmem:[%s1 + $0x10] sm:$0xf]
  %v35 = vld [vmem:[%s1 + $0x14] sm:$0xf]
  %v36 = vld [vmem:[%s1 + $0x18] sm:$0xf]
  %v37 = vld [vmem:[%s1 + $0x1c] sm:$0xf]
  %v38 = vld [vmem:[%s1 + $0x20] sm:$0xf]
  %v55 = vunpack.c.l.b16 %v14
  %v56 = vunpack.c.l.b16 %v15
  %v57 = vunpack.c.l.b16 %v16
  %v58 = vunpack.c.l.b16 %v17
  %v59 = vunpack.c.l.b16 %v18
  %v60 = vunpack.c.l.b16 %v19
  %v61 = vunpack.c.l.b16 %v20
  %v62 = vunpack.c.l.b16 %v21
  %v63 = vunpack.c.l.b16 %v22
  %v64 = vunpack.c.l.b16 %v23
  %v65 = vunpack.c.l.b16 %v24
  %v66 = vunpack.c.l.b16 %v25
  %v67 = vunpack.c.l.b16 %v26
  %v68 = vunpack.c.l.b16 %v27
  %v69 = vunpack.c.l.b16 %v28
  %v70 = vunpack.c.l.b16 %v29
  %v71 = vpack.c.b16 %v56, %v55
  %v72 = vpack.c.b16 %v58, %v57
  %v73 = vpack.c.b16 %v60, %v59
  %v74 = vpack.c.b16 %v62, %v61
  %v75 = vpack.c.b16 %v64, %v63
  %v76 = vpack.c.b16 %v66, %v65
  %v77 = vpack.c.b16 %v68, %v67
  %v78 = vpack.c.b16 %v70, %v69
  %v88 = vunpack.c.l.b16 %v30
  %v89 = vunpack.c.l.b16 %v31
  %v90 = vunpack.c.l.b16 %v32
  %v91 = vunpack.c.l.b16 %v33
  %v92 = vunpack.c.l.b16 %v34
  %v93 = vunpack.c.l.b16 %v35
  %v94 = vunpack.c.l.b16 %v36
  %v95 = vunpack.c.l.b16 %v37
  %v96 = vunpack.c.l.b16 %v38
  %v97 = vpack.c.b16 %v89, %v88
  %v98 = vpack.c.b16 %v91, %v90
  %v99 = vpack.c.b16 %v93, %v92
  %v100 = vpack.c.b16 %v95, %v94
  %v101 = vpack.c.b16 %v96, %v96
  %vm106 = vcmask 588800
  %v108 = vsel %vm106, %v71, 0
  %v111 = vsel %vm106, %v72, 0
  %v114 = vsel %vm106, %v73, 0
  %v117 = vsel %vm106, %v74, 0
  %v120 = vsel %vm106, %v75, 0
  %v123 = vsel %vm106, %v76, 0
  %v126 = vsel %vm106, %v77, 0
  %v129 = vsel %vm106, %v78, 0
  %vm131 = vcmask 1043456
  %v133 = vsel %vm131, %v101, 0
  %135 = vmatprep.subr.bf16.mxu0 0
  %136 = vmatpush1.bf16.msra.mxu0 %v97
  %137 = vmatprep.subr.bf16.mxu0 0
  %138 = vmatpush1.bf16.msra.mxu0 %v98
  %139 = vmatprep.subr.bf16.mxu0 0
  %140 = vmatpush1.bf16.msra.mxu0 %v99
  %141 = vmatprep.subr.bf16.mxu0 0
  %142 = vmatpush1.bf16.msra.mxu0 %v100
  %143 = vmatprep.subr.bf16.mxu0 0
  %144 = vmatpush1.bf16.msra.mxu0 %v133
  %145 = vmatprep.subr.bf16.mxu0 0
  %146 = vmatpush1.bf16.msra.mxu0 0
  %147 = vmatprep.subr.bf16.mxu0 0
  %148 = vmatpush1.bf16.msra.mxu0 0
  %149 = vmatprep.subr.bf16.mxu0 0
  %150 = vmatpush1.bf16.msra.mxu0 0
  %151 = vmatprep.subr.bf16.mxu0 0
  %152 = vmatpush1.bf16.msra.mxu0 0
  %153 = vmatprep.subr.bf16.mxu0 0
  %154 = vmatpush1.bf16.msra.mxu0 0
  %155 = vmatprep.subr.bf16.mxu0 0
  %156 = vmatpush1.bf16.msra.mxu0 0
  %157 = vmatprep.subr.bf16.mxu0 0
  %158 = vmatpush1.bf16.msra.mxu0 0
  %159 = vmatprep.subr.bf16.mxu0 0
  %160 = vmatpush1.bf16.msra.mxu0 0
  %161 = vmatprep.subr.bf16.mxu0 0
  %162 = vmatpush1.bf16.msra.mxu0 0
  %163 = vmatprep.subr.bf16.mxu0 0
  %164 = vmatpush1.bf16.msra.mxu0 0
  %165 = vmatprep.subr.bf16.mxu0 0
  %166 = vmatpush1.bf16.msra.mxu0 0
  %167 = vmatprep.mubr.bf16.mxu0 0
  %168 = vmatmul.mubr.bf16.gmra.mrb[0].mxu0 %v108
  %v169 = vpop.f32.mrb[0].mxu0
  %v170 = vadd.f32 0.0, %v169
  %v171 = vpop.f32.mrb[0].mxu0
  %v172 = vpop.f32.mrb[0].mxu0
  %v173 = vadd.f32 0.0, %v172
  %v174 = vpop.f32.mrb[0].mxu0
  %175 = vmatprep.mubr.bf16.mxu0 0
  %176 = vmatmul.mubr.bf16.gmra.mrb[0].mxu0 %v111
  %v177 = vpop.f32.mrb[0].mxu0
  %v178 = vadd.f32 0.0, %v177
  %v179 = vpop.f32.mrb[0].mxu0
  %v180 = vpop.f32.mrb[0].mxu0
  %v181 = vadd.f32 0.0, %v180
  %v182 = vpop.f32.mrb[0].mxu0
  %183 = vmatprep.mubr.bf16.mxu0 0
  %184 = vmatmul.mubr.bf16.gmra.mrb[0].mxu0 %v114
  %v185 = vpop.f32.mrb[0].mxu0
  %v186 = vadd.f32 0.0, %v185
  %v187 = vpop.f32.mrb[0].mxu0
  %v188 = vpop.f32.mrb[0].mxu0
  %v189 = vadd.f32 0.0, %v188
  %v190 = vpop.f32.mrb[0].mxu0
  %191 = vmatprep.mubr.bf16.mxu0 0
  %192 = vmatmul.mubr.bf16.gmra.mrb[0].mxu0 %v117
  %v193 = vpop.f32.mrb[0].mxu0
  %v194 = vadd.f32 0.0, %v193
  %v195 = vpop.f32.mrb[0].mxu0
  %v196 = vpop.f32.mrb[0].mxu0
  %v197 = vadd.f32 0.0, %v196
  %v198 = vpop.f32.mrb[0].mxu0
  %199 = vmatprep.mubr.bf16.mxu0 0
  %200 = vmatmul.mubr.bf16.gmra.mrb[0].mxu0 %v120
  %v201 = vpop.f32.mrb[0].mxu0
  %v202 = vadd.f32 0.0, %v201
  %v203 = vpop.f32.mrb[0].mxu0
  %v204 = vpop.f32.mrb[0].mxu0
  %v205 = vadd.f32 0.0, %v204
  %v206 = vpop.f32.mrb[0].mxu0
  %207 = vmatprep.mubr.bf16.mxu0 0
  %208 = vmatmul.mubr.bf16.gmra.mrb[0].mxu0 %v123
  %v209 = vpop.f32.mrb[0].mxu0
  %v210 = vadd.f32 0.0, %v209
  %v211 = vpop.f32.mrb[0].mxu0
  %v212 = vpop.f32.mrb[0].mxu0
  %v213 = vadd.f32 0.0, %v212
  %v214 = vpop.f32.mrb[0].mxu0
  %215 = vmatprep.mubr.bf16.mxu0 0
  %216 = vmatmul.mubr.bf16.gmra.mrb[0].mxu0 %v126
  %v217 = vpop.f32.mrb[0].mxu0
  %v218 = vadd.f32 0.0, %v217
  %v219 = vpop.f32.mrb[0].mxu0
  %v220 = vpop.f32.mrb[0].mxu0
  %v221 = vadd.f32 0.0, %v220
  %v222 = vpop.f32.mrb[0].mxu0
  %223 = vmatprep.mubr.bf16.mxu0 0
  %224 = vmatmul.mubr.bf16.gmra.mrb[0].mxu0 %v129
  %v225 = vpop.f32.mrb[0].mxu0
  %v226 = vadd.f32 0.0, %v225
  %v227 = vpop.f32.mrb[0].mxu0
  %v228 = vpop.f32.mrb[0].mxu0
  %v229 = vadd.f32 0.0, %v228
  %v230 = vpop.f32.mrb[0].mxu0
  %231 = vdwg.mxu0
  %232 = vst [vmem:[%s2] sm:$0xff] %v170
  %233 = vst [vmem:[%s2 + $0x8] sm:$0xff] %v173
  %234 = vst [vmem:[%s2 + $0x10] sm:$0xff] %v178
  %235 = vst [vmem:[%s2 + $0x18] sm:$0xff] %v181
  %236 = vst [vmem:[%s2 + $0x20] sm:$0xff] %v186
  %237 = vst [vmem:[%s2 + $0x28] sm:$0xff] %v189
  %238 = vst [vmem:[%s2 + $0x30] sm:$0xff] %v194
  %239 = vst [vmem:[%s2 + $0x38] sm:$0xff] %v197
  %240 = vst [vmem:[%s2 + $0x40] sm:$0xff] %v202
  %241 = vst [vmem:[%s2 + $0x48] sm:$0xff] %v205
  %242 = vst [vmem:[%s2 + $0x50] sm:$0xff] %v210
  %243 = vst [vmem:[%s2 + $0x58] sm:$0xff] %v213
  %244 = vst [vmem:[%s2 + $0x60] sm:$0xff] %v218
  %245 = vst [vmem:[%s2 + $0x68] sm:$0xff] %v221
  %246 = vst [vmem:[%s2 + $0x70] sm:$0xff] %v226
  %247 = vst [vmem:[%s2 + $0x78] sm:$0xff] %v229
  %v248 = vadd.f32 %v170, %v173
  %v249 = vadd.f32 %v248, %v178
  %v250 = vadd.f32 %v249, %v181
  %v251 = vadd.f32 %v250, %v186
  %v252 = vadd.f32 %v251, %v189
  %v253 = vadd.f32 %v252, %v194
  %v254 = vadd.f32 %v253, %v197
  %v255 = vadd.f32 %v254, %v202
  %v256 = vadd.f32 %v255, %v205
  %v257 = vadd.f32 %v256, %v210
  %v258 = vadd.f32 %v257, %v213
  %v259 = vadd.f32 %v258, %v218
  %v260 = vadd.f32 %v259, %v221
  %v261 = vadd.f32 %v260, %v226
  %v262 = vadd.f32 %v261, %v229
  %v263 = vrot.slane %v262, 4
  %v264 = vadd.f32 %v262, %v263
  %v265 = vrot.slane %v264, 2
  %v266 = vadd.f32 %v264, %v265
  %v267 = vrot.slane %v266, 1
  %v268 = vadd.f32 %v266, %v267
  %v269 = vmul.f32 %v170, %v170
  %v270 = vmul.f32 %v173, %v173
  %v271 = vmul.f32 %v178, %v178
  %v272 = vmul.f32 %v181, %v181
  %v273 = vmul.f32 %v186, %v186
  %v274 = vmul.f32 %v189, %v189
  %v275 = vmul.f32 %v194, %v194
  %v276 = vmul.f32 %v197, %v197
  %v277 = vmul.f32 %v202, %v202
  %v278 = vmul.f32 %v205, %v205
  %v279 = vmul.f32 %v210, %v210
  %v280 = vmul.f32 %v213, %v213
  %v281 = vmul.f32 %v218, %v218
  %v282 = vmul.f32 %v221, %v221
  %v283 = vmul.f32 %v226, %v226
  %v284 = vmul.f32 %v229, %v229
  %v285 = vadd.f32 %v269, %v270
  %v286 = vadd.f32 %v285, %v271
  %v287 = vadd.f32 %v286, %v272
  %v288 = vadd.f32 %v287, %v273
  %v289 = vadd.f32 %v288, %v274
  %v290 = vadd.f32 %v289, %v275
  %v291 = vadd.f32 %v290, %v276
  %v292 = vadd.f32 %v291, %v277
  %v293 = vadd.f32 %v292, %v278
  %v294 = vadd.f32 %v293, %v279
  %v295 = vadd.f32 %v294, %v280
  %v296 = vadd.f32 %v295, %v281
  %v297 = vadd.f32 %v296, %v282
  %v298 = vadd.f32 %v297, %v283
  %v299 = vadd.f32 %v298, %v284
  %v300 = vrot.slane %v299, 4
  %v301 = vadd.f32 %v299, %v300
  %v302 = vrot.slane %v301, 2
  %v303 = vadd.f32 %v301, %v302
  %v304 = vrot.slane %v303, 1
  %v305 = vadd.f32 %v303, %v304
  %vm306 = vcmask 1040384
  %v307 = vsel %vm306, %v268, %v305
  %308 = vst [vmem:[%s3] sm:$0x3] %v307
  // Predicated region
  $region10: #{forward.12} parent=0 // pred_check
    _
  $region11: #{forward.12} parent=0 // pred_check_branch
    %310 = sbr.rel (0) target = $region13
  $region12: #{forward.12} parent=0 // pred_region
    _
  $region13: #{forward.12} parent=0 // pred_fallthru
    _
  // Predicated region
  $region14: #{forward.12} parent=0 // pred_check
    _
  $region15: #{forward.12} parent=0 // pred_check_branch
    %312 = sbr.rel (0) target = $region17
  $region16: #{forward.12} parent=0 // pred_region
    _
  $region17: #{forward.12} parent=0 // pred_fallthru
    _
  // Predicated region
  $region18: #{forward.12} parent=0 // pred_check
    _
  $region19: #{forward.12} parent=0 // pred_check_branch
    %314 = sbr.rel (0) target = $region21
  $region20: #{forward.12} parent=0 // pred_region
    _
  $region21: #{forward.12} parent=0 // pred_fallthru
    _
  // Predicated region
  $region22: #{forward.12} parent=0 // pred_check
    _
  $region23: #{forward.12} parent=0 // pred_check_branch
    %316 = sbr.rel (0) target = $region25
  $region24: #{forward.12} parent=0 // pred_region
    _
  $region25: #{forward.12} parent=0 // pred_fallthru
    _

// kernel: forward.13
$region0: #{forward.13}
  #allocation0 [shape = 'u32[]', space=smem, size = 0x4, offset = 0x4, fixed_abs, tag = 'smem constant byte address 0x4 - core index']
  #allocation1 [shape = 'u32[144,128]{1,0:T(1,128)}', space=vmem, size = 0x12000, scoped, tag = 'internal scratch']
  %s0 = inlined_call_operand.vmem [shape: f32[1,128,128], index: 0, kind: input, shape index: {}]
  %s1 = inlined_call_operand.vmem [shape: f32[1,128], index: 1, kind: input, shape index: {}]
  %s2 = inlined_call_operand.vmem [shape: f32[1,128], index: 2, kind: input, shape index: {}]
  %s3 = inlined_call_operand.vmem [shape: bf16[1,128,128], index: 3, kind: output, shape index: {}]
  %s4 = sld [smem:[#allocation0]]
  $region22: #{forward.13} parent=0
    _
  %s6 = ssub.s32 1, %s4
  %s7 = scalar_select 0, %s6, %s4
  // Predicated region
  $region2: #{forward.13} parent=0 // pred_check
    _
  $region3: #{forward.13} parent=0 // pred_check_branch
    %9 = sbr.rel (0) target = $region5
  $region4: #{forward.13} parent=0 // pred_region
    _
  $region5: #{forward.13} parent=0 // pred_fallthru
    _
  // Predicated region
  $region6: #{forward.13} parent=0 // pred_check
    _
  $region7: #{forward.13} parent=0 // pred_check_branch
    %11 = sbr.rel (0) target = $region9
  $region8: #{forward.13} parent=0 // pred_region
    _
  $region9: #{forward.13} parent=0 // pred_fallthru
    _
  // Predicated region
  $region10: #{forward.13} parent=0 // pred_check
    _
  $region11: #{forward.13} parent=0 // pred_check_branch
    %13 = sbr.rel (0) target = $region13
  $region12: #{forward.13} parent=0 // pred_region
    _
  $region13: #{forward.13} parent=0 // pred_fallthru
    _
  %v14 = vld [vmem:[%s0] sm:$0xff]
  %v15 = vld [vmem:[%s0 + $0x8] sm:$0xff]
  %v16 = vld [vmem:[%s0 + $0x10] sm:$0xff]
  %v17 = vld [vmem:[%s0 + $0x18] sm:$0xff]
  %v18 = vld [vmem:[%s0 + $0x20] sm:$0xff]
  %v19 = vld [vmem:[%s0 + $0x28] sm:$0xff]
  %v20 = vld [vmem:[%s0 + $0x30] sm:$0xff]
  %v21 = vld [vmem:[%s0 + $0x38] sm:$0xff]
  %v22 = vld [vmem:[%s0 + $0x40] sm:$0xff]
  %v23 = vld [vmem:[%s0 + $0x48] sm:$0xff]
  %v24 = vld [vmem:[%s0 + $0x50] sm:$0xff]
  %v25 = vld [vmem:[%s0 + $0x58] sm:$0xff]
  %v26 = vld [vmem:[%s0 + $0x60] sm:$0xff]
  %v27 = vld [vmem:[%s0 + $0x68] sm:$0xff]
  %v28 = vld [vmem:[%s0 + $0x70] sm:$0xff]
  %v29 = vld [vmem:[%s0 + $0x78] sm:$0xff]
  %v30 = vld [vmem:[%s1] sm:$0x1]
  %v32 = vlaneseq
  %v33 = vshrl.u32 %v32, 7
  %v34 = vsub.s32 0, %v33
  %v35 = vrot.slane %v30, %v34
  %v37 = vmul.f32 %v14, %v35
  %v38 = vmul.f32 %v15, %v35
  %v39 = vmul.f32 %v16, %v35
  %v40 = vmul.f32 %v17, %v35
  %v41 = vmul.f32 %v18, %v35
  %v42 = vmul.f32 %v19, %v35
  %v43 = vmul.f32 %v20, %v35
  %v44 = vmul.f32 %v21, %v35
  %v45 = vmul.f32 %v22, %v35
  %v46 = vmul.f32 %v23, %v35
  %v47 = vmul.f32 %v24, %v35
  %v48 = vmul.f32 %v25, %v35
  %v49 = vmul.f32 %v26, %v35
  %v50 = vmul.f32 %v27, %v35
  %v51 = vmul.f32 %v28, %v35
  %v52 = vmul.f32 %v29, %v35
  %v53 = vld [vmem:[%s2] sm:$0x1]
  %v55 = vlaneseq
  %v56 = vshrl.u32 %v55, 7
  %v57 = vsub.s32 0, %v56
  %v58 = vrot.slane %v53, %v57
  %v60 = vadd.f32 %v37, %v58
  %v61 = vadd.f32 %v38, %v58
  %v62 = vadd.f32 %v39, %v58
  %v63 = vadd.f32 %v40, %v58
  %v64 = vadd.f32 %v41, %v58
  %v65 = vadd.f32 %v42, %v58
  %v66 = vadd.f32 %v43, %v58
  %v67 = vadd.f32 %v44, %v58
  %v68 = vadd.f32 %v45, %v58
  %v69 = vadd.f32 %v46, %v58
  %v70 = vadd.f32 %v47, %v58
  %v71 = vadd.f32 %v48, %v58
  %v72 = vadd.f32 %v49, %v58
  %v73 = vadd.f32 %v50, %v58
  %v74 = vadd.f32 %v51, %v58
  %v75 = vadd.f32 %v52, %v58
  %v76 = vmax.f32 %v60, 0.0
  %v77 = vmax.f32 %v61, 0.0
  %v78 = vmax.f32 %v62, 0.0
  %v79 = vmax.f32 %v63, 0.0
  %v80 = vmax.f32 %v64, 0.0
  %v81 = vmax.f32 %v65, 0.0
  %v82 = vmax.f32 %v66, 0.0
  %v83 = vmax.f32 %v67, 0.0
  %v84 = vmax.f32 %v68, 0.0
  %v85 = vmax.f32 %v69, 0.0
  %v86 = vmax.f32 %v70, 0.0
  %v87 = vmax.f32 %v71, 0.0
  %v88 = vmax.f32 %v72, 0.0
  %v89 = vmax.f32 %v73, 0.0
  %v90 = vmax.f32 %v74, 0.0
  %v91 = vmax.f32 %v75, 0.0
  %v92 = vpack.c.bf16 %v77, %v76
  %v93 = vpack.c.bf16 %v79, %v78
  %v94 = vpack.c.bf16 %v81, %v80
  %v95 = vpack.c.bf16 %v83, %v82
  %v96 = vpack.c.bf16 %v85, %v84
  %v97 = vpack.c.bf16 %v87, %v86
  %v98 = vpack.c.bf16 %v89, %v88
  %v99 = vpack.c.bf16 %v91, %v90
  %v108 = vunpack.c.l.b16 %v92
  %v109 = vunpack.c.h.b16 %v92
  %v110 = vunpack.c.l.b16 %v93
  %v111 = vunpack.c.h.b16 %v93
  %v112 = vunpack.c.l.b16 %v94
  %v113 = vunpack.c.h.b16 %v94
  %v114 = vunpack.c.l.b16 %v95
  %v115 = vunpack.c.h.b16 %v95
  %v116 = vunpack.c.l.b16 %v96
  %v117 = vunpack.c.h.b16 %v96
  %v118 = vunpack.c.l.b16 %v97
  %v119 = vunpack.c.h.b16 %v97
  %v120 = vunpack.c.l.b16 %v98
  %v121 = vunpack.c.h.b16 %v98
  %v122 = vunpack.c.l.b16 %v99
  %v123 = vunpack.c.h.b16 %v99
  %v124 = vpack.c.b16 %v108, %v108
  %v125 = vpack.c.b16 %v109, %v109
  %v126 = vpack.c.b16 %v110, %v110
  %v127 = vpack.c.b16 %v111, %v111
  %v128 = vpack.c.b16 %v112, %v112
  %v129 = vpack.c.b16 %v113, %v113
  %v130 = vpack.c.b16 %v114, %v114
  %v131 = vpack.c.b16 %v115, %v115
  %v132 = vpack.c.b16 %v116, %v116
  %v133 = vpack.c.b16 %v117, %v117
  %v134 = vpack.c.b16 %v118, %v118
  %v135 = vpack.c.b16 %v119, %v119
  %v136 = vpack.c.b16 %v120, %v120
  %v137 = vpack.c.b16 %v121, %v121
  %v138 = vpack.c.b16 %v122, %v122
  %v139 = vpack.c.b16 %v123, %v123
  %156 = vst [vmem:[%s3] sm:$0xf] %v124
  %157 = vst [vmem:[%s3 + $0x4] sm:$0xf] %v125
  %158 = vst [vmem:[%s3 + $0x8] sm:$0xf] %v126
  %159 = vst [vmem:[%s3 + $0xc] sm:$0xf] %v127
  %160 = vst [vmem:[%s3 + $0x10] sm:$0xf] %v128
  %161 = vst [vmem:[%s3 + $0x14] sm:$0xf] %v129
  %162 = vst [vmem:[%s3 + $0x18] sm:$0xf] %v130
  %163 = vst [vmem:[%s3 + $0x1c] sm:$0xf] %v131
  %164 = vst [vmem:[%s3 + $0x20] sm:$0xf] %v132
  %165 = vst [vmem:[%s3 + $0x24] sm:$0xf] %v133
  %166 = vst [vmem:[%s3 + $0x28] sm:$0xf] %v134
  %167 = vst [vmem:[%s3 + $0x2c] sm:$0xf] %v135
  %168 = vst [vmem:[%s3 + $0x30] sm:$0xf] %v136
  %169 = vst [vmem:[%s3 + $0x34] sm:$0xf] %v137
  %170 = vst [vmem:[%s3 + $0x38] sm:$0xf] %v138
  %171 = vst [vmem:[%s3 + $0x3c] sm:$0xf] %v139
  // Predicated region
  $region14: #{forward.13} parent=0 // pred_check
    _
  $region15: #{forward.13} parent=0 // pred_check_branch
    %173 = sbr.rel (0) target = $region17
  $region16: #{forward.13} parent=0 // pred_region
    _
  $region17: #{forward.13} parent=0 // pred_fallthru
    _
  // Predicated region
  $region18: #{forward.13} parent=0 // pred_check
    _
  $region19: #{forward.13} parent=0 // pred_check_branch
    %175 = sbr.rel (0) target = $region21
  $region20: #{forward.13} parent=0 // pred_region
    _
  $region21: #{forward.13} parent=0 // pred_fallthru
    _

// kernel: forward.14
$region0: #{forward.14}
  #allocation0 [shape = 'u32[]', space=smem, size = 0x4, offset = 0x4, fixed_abs, tag = 'smem constant byte address 0x4 - core index']
  #allocation1 [shape = 'u32[144,128]{1,0:T(1,128)}', space=vmem, size = 0x12000, scoped, tag = 'internal scratch']
  %s0 = inlined_call_operand.vmem [shape: bf16[4,128,32], index: 0, kind: input, shape index: {}]
  %s1 = inlined_call_operand.vmem [shape: bf16[4,32,128], index: 1, kind: input, shape index: {}]
  %s2 = inlined_call_operand.vmem [shape: f32[4,128,128], index: 2, kind: output, shape index: {0}]
  %s3 = inlined_call_operand.hbm [shape: f32[4,1,2,128], index: 3, kind: output, shape index: {1}]
  %4 = xla_tuple %s2, %s3
  %s5 = sld [smem:[#allocation0]]
  $region49: #{forward.14} parent=0
    _
  %s7 = ssub.s32 1, %s5
  %s8 = scalar_select 0, %s7, %s5
  $region1: #{forward.14} parent=0
    #allocation2 [shape = 'u8[2048]{0}', space=vmem, size = 0x800, scoped, tag = 'output window, operand 1']
    #allocation3 [shape = 's32[2]{0}', space=sflag, size = 0x8, scoped, tag = 'scoped memory for forward.14']
    %9 = vsyncpa [#allocation3], 0
    %s10 = scalar_lea.sflag [#allocation3], 1
    %11 = vsyncpa %s10, 0
    loop: start=0, step=1, limit=6
    $region2: #{forward.14} parent=1 // loop_pre_header
      _
    $region3: #{forward.14} parent=1 // loop_header
      %s13 = sphi 0, %s17
      %p14 = scmp.ge.s32.totalorder %s13, 6
      %s20 = sphi 0, %s32
      %s21 = sphi 0, %s28
      %s22 = sphi 0, %s20
      %s23 = sphi 0, %s21
      %s24 = sphi 0, %s22
      %s25 = sphi 0, %s23
      %s37 = sphi 0, %s39
      %s40 = sphi 0, %s37
      %s41 = sphi 0, %s40
      %s57 = sphi 0, %s41
      %s63 = sphi 0, %s65
      %s66 = sphi 0, %s63
      %s67 = sphi 0, %s66
      %s83 = sphi 0, %s67
      %s91 = sphi 0, %s93
      %s94 = sphi 0, %s91
      %s95 = sphi 0, %s94
      %s111 = sphi 0, %s95
      %s119 = sphi 0, %s121
      %s122 = sphi 0, %s119
      %s123 = sphi 0, %s122
      %s139 = sphi 0, %s123
    $region4: #{forward.14} parent=1 // loop_header_branch
      %16 = sbr.rel (%p14) target = $region8
    $region5: #{forward.14} parent=1 // loop_body
      %s18 = ssub.s32 %s13, 1
      %s19 = ssub.s32 %s13, 2
      %s26 = sadd.s32 1, %s21
      %p27 = scmp.ge.s32.totalorder %s26, 1
      %s28 = scalar_select %p27, 0, %s26
      %s29 = sadd.s32 1, %s20
      %s30 = scalar_select %p27, %s29, %s20
      %p31 = scmp.ge.s32.totalorder %s30, 4
      %s32 = scalar_select %p31, 0, %s30
      %s33 = ssub.s32 %s20, %s32
      %s34 = ssub.s32 %s21, %s28
      %s35 = sor.u32 %s33, %s34
      %p36 = scmp.eq.s32.totalorder %s35, 0
      %s38 = sadd.s32 %s37, 1
      %s39 = scalar_select %p36, %s37, %s38
      %p42 = pneg %p36
      %p43 = scmp.eq.s32.totalorder %s13, 3
      %p44 = por %p42, %p43
      %p45 = scmp.ne.s32.totalorder %s37, %s40
      %p46 = scmp.eq.s32.totalorder %s13, 0
      %p47 = por %p45, %p46
      %p48 = scmp.ne.s32.totalorder %s37, %s40
      %p49 = scmp.eq.s32.totalorder %s18, 3
      %p50 = por %p48, %p49
      %p51 = scmp.ne.s32.totalorder %s40, %s41
      %p52 = scmp.eq.s32.totalorder %s18, 0
      %p53 = por %p51, %p52
      %p54 = scmp.ne.s32.totalorder %s40, %s41
      %p55 = scmp.eq.s32.totalorder %s19, 3
      %p56 = por %p54, %p55
      %p58 = scmp.ne.s32.totalorder %s41, %s57
      %p59 = scmp.eq.s32.totalorder %s19, 0
      %p60 = por %p58, %p59
      %s61 = ssub.s32 %s20, %s32
      %p62 = scmp.eq.s32.totalorder %s61, 0
      %s64 = sadd.s32 %s63, 1
      %s65 = scalar_select %p62, %s63, %s64
      %p68 = pneg %p62
      %p69 = scmp.eq.s32.totalorder %s13, 3
      %p70 = por %p68, %p69
      %p71 = scmp.ne.s32.totalorder %s63, %s66
      %p72 = scmp.eq.s32.totalorder %s13, 0
      %p73 = por %p71, %p72
      %p74 = scmp.ne.s32.totalorder %s63, %s66
      %p75 = scmp.eq.s32.totalorder %s18, 3
      %p76 = por %p74, %p75
      %p77 = scmp.ne.s32.totalorder %s66, %s67
      %p78 = scmp.eq.s32.totalorder %s18, 0
      %p79 = por %p77, %p78
      %p80 = scmp.ne.s32.totalorder %s66, %s67
      %p81 = scmp.eq.s32.totalorder %s19, 3
      %p82 = por %p80, %p81
      %p84 = scmp.ne.s32.totalorder %s67, %s83
      %p85 = scmp.eq.s32.totalorder %s19, 0
      %p86 = por %p84, %p85
      %s87 = ssub.s32 %s20, %s32
      %s88 = ssub.s32 %s21, %s28
      %s89 = sor.u32 %s87, %s88
      %p90 = scmp.eq.s32.totalorder %s89, 0
      %s92 = sadd.s32 %s91, 1
      %s93 = scalar_select %p90, %s91, %s92
      %p96 = pneg %p90
      %p97 = scmp.eq.s32.totalorder %s13, 3
      %p98 = por %p96, %p97
      %p99 = scmp.ne.s32.totalorder %s91, %s94
      %p100 = scmp.eq.s32.totalorder %s13, 0
      %p101 = por %p99, %p100
      %p102 = scmp.ne.s32.totalorder %s91, %s94
      %p103 = scmp.eq.s32.totalorder %s18, 3
      %p104 = por %p102, %p103
      %p105 = scmp.ne.s32.totalorder %s94, %s95
      %p106 = scmp.eq.s32.totalorder %s18, 0
      %p107 = por %p105, %p106
      %p108 = scmp.ne.s32.totalorder %s94, %s95
      %p109 = scmp.eq.s32.totalorder %s19, 3
      %p110 = por %p108, %p109
      %p112 = scmp.ne.s32.totalorder %s95, %s111
      %p113 = scmp.eq.s32.totalorder %s19, 0
      %p114 = por %p112, %p113
      %s115 = ssub.s32 %s20, %s32
      %s116 = ssub.s32 %s21, %s28
      %s117 = sor.u32 %s115, %s116
      %p118 = scmp.eq.s32.totalorder %s117, 0
      %s120 = sadd.s32 %s119, 1
      %s121 = scalar_select %p118, %s119, %s120
      %p124 = pneg %p118
      %p125 = scmp.eq.s32.totalorder %s13, 3
      %p126 = por %p124, %p125
      %p127 = scmp.ne.s32.totalorder %s119, %s122
      %p128 = scmp.eq.s32.totalorder %s13, 0
      %p129 = por %p127, %p128
      %p130 = scmp.ne.s32.totalorder %s119, %s122
      %p131 = scmp.eq.s32.totalorder %s18, 3
      %p132 = por %p130, %p131
      %p133 = scmp.ne.s32.totalorder %s122, %s123
      %p134 = scmp.eq.s32.totalorder %s18, 0
      %p135 = por %p133, %p134
      %p136 = scmp.ne.s32.totalorder %s122, %s123
      %p137 = scmp.eq.s32.totalorder %s19, 3
      %p138 = por %p136, %p137
      %p140 = scmp.ne.s32.totalorder %s123, %s139
      %p141 = scmp.eq.s32.totalorder %s19, 0
      %p142 = por %p140, %p141
      %p143 = scmp.le.s32.totalorder 1, %s13
      %p144 = scmp.lt.s32.totalorder %s13, 5
      %p145 = pnand %p143, %p144
      %p146 = pneg %p145
      // Predicated region
      $region9: #{forward.14} parent=5 // pred_check
        _
      $region10: #{forward.14} parent=5 // pred_check_branch
        %148 = sbr.rel (%p145) target = $region12
      $region11: #{forward.14} parent=5 // pred_region
        %s149 = ssub.s32 %s13, 1
      $region12: #{forward.14} parent=5 // pred_fallthru
        _
      %p150 = scmp.lt.s32.totalorder %s13, 4
      // Predicated region
      $region13: #{forward.14} parent=5 // pred_check
        %p151 = pneg %p150
      $region14: #{forward.14} parent=5 // pred_check_branch
        %153 = sbr.rel (%p151) target = $region16
      $region15: #{forward.14} parent=5 // pred_region
        // Predicated region
        $region17: #{forward.14} parent=15 // pred_check
          %p154 = pneg %p47
        $region18: #{forward.14} parent=15 // pred_check_branch
          %156 = sbr.rel (%p154) target = $region20
        $region19: #{forward.14} parent=15 // pred_region
          %s157 = smul.u32 16, %s21
          %p158 = scmp.lt.s32.totalorder %s20, 3
          %s159 = scalar_select %p158, %s20, 3
          %p160 = scmp.lt.s32.totalorder %s157, 15
          %s161 = scalar_select %p160, %s157, 15
          %s162 = smul.addr %s159, 16
          %s163 = sadd.s32 %s161, %s162
          %s164 = smul.addr %s163, 4
          %s165 = scalar_lea.vmem %s0, %s164
          %s166 = smul.u32 16, %s21
        $region20: #{forward.14} parent=15 // pred_fallthru
          _
        // Predicated region
        $region21: #{forward.14} parent=15 // pred_check
          %p167 = pneg %p73
        $region22: #{forward.14} parent=15 // pred_check_branch
          %169 = sbr.rel (%p167) target = $region24
        $region23: #{forward.14} parent=15 // pred_region
          %p170 = scmp.lt.s32.totalorder %s20, 3
          %s171 = scalar_select %p170, %s20, 3
          %s172 = smul.addr %s171, 4
          %s173 = smul.addr %s172, 4
          %s174 = scalar_lea.vmem %s1, %s173
        $region24: #{forward.14} parent=15 // pred_fallthru
          _
      $region16: #{forward.14} parent=5 // pred_fallthru
        _
      %p175 = scmp.le.s32.totalorder 1, %s13
      %p176 = scmp.lt.s32.totalorder %s13, 5
      %p177 = pnand %p175, %p176
      %p178 = pneg %p177
      // Predicated region
      $region25: #{forward.14} parent=5 // pred_check
        _
      $region26: #{forward.14} parent=5 // pred_check_branch
        %180 = sbr.rel (%p177) target = $region28
      $region27: #{forward.14} parent=5 // pred_region
        %s181 = ssub.s32 %s13, 1
        %s182 = smul.u32 16, %s23
        %p183 = scmp.lt.s32.totalorder %s22, 3
        %s184 = scalar_select %p183, %s22, 3
        %p185 = scmp.lt.s32.totalorder %s182, 15
        %s186 = scalar_select %p185, %s182, 15
        %s187 = smul.addr %s184, 16
        %s188 = sadd.s32 %s186, %s187
        %s189 = smul.addr %s188, 4
        %s190 = scalar_lea.vmem %s0, %s189
        %p191 = pneg %p53
        %p192 = pneg %p50
        %p193 = scmp.lt.s32.totalorder %s22, 3
        %s194 = scalar_select %p193, %s22, 3
        %s195 = smul.addr %s194, 4
        %s196 = smul.addr %s195, 4
        %s197 = scalar_lea.vmem %s1, %s196
        %p198 = pneg %p79
        %p199 = pneg %p76
        %p200 = pneg %p107
        %p201 = pneg %p104
        %s202 = smul.u32 16, %s23
        %p203 = scmp.lt.s32.totalorder %s22, 3
        %s204 = scalar_select %p203, %s22, 3
        %p205 = scmp.lt.s32.totalorder %s202, 15
        %s206 = scalar_select %p205, %s202, 15
        %s207 = smul.addr %s204, 16
        %s208 = sadd.s32 %s206, %s207
        %s209 = smul.addr %s208, 8
        %s210 = scalar_lea.vmem %s2, %s209
        %p211 = pneg %p135
        %p212 = pneg %p132
        %s213 = sand.u32 %s122, 1
        %s214 = scalar_lea.sflag [#allocation3], %s213
        %s215 = sand.u32 %s122, 1
        %s216 = smul.addr %s215, 2
        %s217 = scalar_lea.vmem [#allocation2], %s216
        %s218 = smul.u32 16, %s23
        %p219 = scmp.lt.s32.totalorder %s22, 3
        %s220 = scalar_select %p219, %s22, 3
        %p221 = scmp.lt.s32.totalorder %s218, 15
        %s222 = scalar_select %p221, %s218, 15
        %s223 = smul.addr %s220, 16
        %s224 = sadd.s32 %s222, %s223
        %s225 = smul.addr %s224, 4
        %s226 = scalar_lea.vmem %s0, %s225
        %s227 = smul.u32 16, %s23
        %p228 = scmp.lt.s32.totalorder %s22, 3
        %s229 = scalar_select %p228, %s22, 3
        %s230 = smul.addr %s229, 4
        %s231 = smul.addr %s230, 4
        %s232 = scalar_lea.vmem %s1, %s231
        %s233 = smul.u32 16, %s23
        %p234 = scmp.lt.s32.totalorder %s22, 3
        %s235 = scalar_select %p234, %s22, 3
        %p236 = scmp.lt.s32.totalorder %s233, 15
        %s237 = scalar_select %p236, %s233, 15
        %s238 = smul.addr %s235, 16
        %s239 = sadd.s32 %s237, %s238
        %s240 = smul.addr %s239, 8
        %s241 = scalar_lea.vmem %s2, %s240
        %s242 = smul.u32 16, %s23
        %v244 = vld [vmem:[%s226] sm:$0xf]
        %v245 = vld [vmem:[%s226 + $0x4] sm:$0xf]
        %v246 = vld [vmem:[%s226 + $0x8] sm:$0xf]
        %v247 = vld [vmem:[%s226 + $0xc] sm:$0xf]
        %v248 = vld [vmem:[%s226 + $0x10] sm:$0xf]
        %v249 = vld [vmem:[%s226 + $0x14] sm:$0xf]
        %v250 = vld [vmem:[%s226 + $0x18] sm:$0xf]
        %v251 = vld [vmem:[%s226 + $0x1c] sm:$0xf]
        %v252 = vld [vmem:[%s226 + $0x20] sm:$0xf]
        %v253 = vld [vmem:[%s226 + $0x24] sm:$0xf]
        %v254 = vld [vmem:[%s226 + $0x28] sm:$0xf]
        %v255 = vld [vmem:[%s226 + $0x2c] sm:$0xf]
        %v256 = vld [vmem:[%s226 + $0x30] sm:$0xf]
        %v257 = vld [vmem:[%s226 + $0x34] sm:$0xf]
        %v258 = vld [vmem:[%s226 + $0x38] sm:$0xf]
        %v259 = vld [vmem:[%s226 + $0x3c] sm:$0xf]
        %v260 = vld [vmem:[%s232] sm:$0xf]
        %v261 = vld [vmem:[%s232 + $0x4] sm:$0xf]
        %v262 = vld [vmem:[%s232 + $0x8] sm:$0xf]
        %v263 = vld [vmem:[%s232 + $0xc] sm:$0xf]
        %v280 = vunpack.c.l.b16 %v244
        %v281 = vunpack.c.l.b16 %v245
        %v282 = vunpack.c.l.b16 %v246
        %v283 = vunpack.c.l.b16 %v247
        %v284 = vunpack.c.l.b16 %v248
        %v285 = vunpack.c.l.b16 %v249
        %v286 = vunpack.c.l.b16 %v250
        %v287 = vunpack.c.l.b16 %v251
        %v288 = vunpack.c.l.b16 %v252
        %v289 = vunpack.c.l.b16 %v253
        %v290 = vunpack.c.l.b16 %v254
        %v291 = vunpack.c.l.b16 %v255
        %v292 = vunpack.c.l.b16 %v256
        %v293 = vunpack.c.l.b16 %v257
        %v294 = vunpack.c.l.b16 %v258
        %v295 = vunpack.c.l.b16 %v259
        %v296 = vpack.c.b16 %v281, %v280
        %v297 = vpack.c.b16 %v283, %v282
        %v298 = vpack.c.b16 %v285, %v284
        %v299 = vpack.c.b16 %v287, %v286
        %v300 = vpack.c.b16 %v289, %v288
        %v301 = vpack.c.b16 %v291, %v290
        %v302 = vpack.c.b16 %v293, %v292
        %v303 = vpack.c.b16 %v295, %v294
        %v308 = vunpack.c.l.b16 %v260
        %v309 = vunpack.c.l.b16 %v261
        %v310 = vunpack.c.l.b16 %v262
        %v311 = vunpack.c.l.b16 %v263
        %v312 = vpack.c.b16 %v309, %v308
        %v313 = vpack.c.b16 %v311, %v310
        %vm316 = vcmask 261120
        %v318 = vsel %vm316, %v296, 0
        %v321 = vsel %vm316, %v297, 0
        %v324 = vsel %vm316, %v298, 0
        %v327 = vsel %vm316, %v299, 0
        %v330 = vsel %vm316, %v300, 0
        %v333 = vsel %vm316, %v301, 0
        %v336 = vsel %vm316, %v302, 0
        %v339 = vsel %vm316, %v303, 0
        %341 = vmatprep.subr.bf16.mxu0 0
        %342 = vmatpush1.bf16.msra.mxu0 %v312
        %343 = vmatprep.subr.bf16.mxu0 0
        %344 = vmatpush1.bf16.msra.mxu0 %v313
        %345 = vmatprep.subr.bf16.mxu0 0
        %346 = vmatpush1.bf16.msra.mxu0 0
        %347 = vmatprep.subr.bf16.mxu0 0
        %348 = vmatpush1.bf16.msra.mxu0 0
        %349 = vmatprep.subr.bf16.mxu0 0
        %350 = vmatpush1.bf16.msra.mxu0 0
        %351 = vmatprep.subr.bf16.mxu0 0
        %352 = vmatpush1.bf16.msra.mxu0 0
        %353 = vmatprep.subr.bf16.mxu0 0
        %354 = vmatpush1.bf16.msra.mxu0 0
        %355 = vmatprep.subr.bf16.mxu0 0
        %356 = vmatpush1.bf16.msra.mxu0 0
        %357 = vmatprep.subr.bf16.mxu0 0
        %358 = vmatpush1.bf16.msra.mxu0 0
        %359 = vmatprep.subr.bf16.mxu0 0
        %360 = vmatpush1.bf16.msra.mxu0 0
        %361 = vmatprep.subr.bf16.mxu0 0
        %362 = vmatpush1.bf16.msra.mxu0 0
        %363 = vmatprep.subr.bf16.mxu0 0
        %364 = vmatpush1.bf16.msra.mxu0 0
        %365 = vmatprep.subr.bf16.mxu0 0
        %366 = vmatpush1.bf16.msra.mxu0 0
        %367 = vmatprep.subr.bf16.mxu0 0
        %368 = vmatpush1.bf16.msra.mxu0 0
        %369 = vmatprep.subr.bf16.mxu0 0
        %370 = vmatpush1.bf16.msra.mxu0 0
        %371 = vmatprep.subr.bf16.mxu0 0
        %372 = vmatpush1.bf16.msra.mxu0 0
        %373 = vmatprep.mubr.bf16.mxu0 0
        %374 = vmatmul.mubr.bf16.gmra.mrb[0].mxu0 %v318
        %v375 = vpop.f32.mrb[0].mxu0
        %v376 = vadd.f32 0.0, %v375
        %v377 = vpop.f32.mrb[0].mxu0
        %v378 = vpop.f32.mrb[0].mxu0
        %v379 = vadd.f32 0.0, %v378
        %v380 = vpop.f32.mrb[0].mxu0
        %381 = vmatprep.mubr.bf16.mxu0 0
        %382 = vmatmul.mubr.bf16.gmra.mrb[0].mxu0 %v321
        %v383 = vpop.f32.mrb[0].mxu0
        %v384 = vadd.f32 0.0, %v383
        %v385 = vpop.f32.mrb[0].mxu0
        %v386 = vpop.f32.mrb[0].mxu0
        %v387 = vadd.f32 0.0, %v386
        %v388 = vpop.f32.mrb[0].mxu0
        %389 = vmatprep.mubr.bf16.mxu0 0
        %390 = vmatmul.mubr.bf16.gmra.mrb[0].mxu0 %v324
        %v391 = vpop.f32.mrb[0].mxu0
        %v392 = vadd.f32 0.0, %v391
        %v393 = vpop.f32.mrb[0].mxu0
        %v394 = vpop.f32.mrb[0].mxu0
        %v395 = vadd.f32 0.0, %v394
        %v396 = vpop.f32.mrb[0].mxu0
        %397 = vmatprep.mubr.bf16.mxu0 0
        %398 = vmatmul.mubr.bf16.gmra.mrb[0].mxu0 %v327
        %v399 = vpop.f32.mrb[0].mxu0
        %v400 = vadd.f32 0.0, %v399
        %v401 = vpop.f32.mrb[0].mxu0
        %v402 = vpop.f32.mrb[0].mxu0
        %v403 = vadd.f32 0.0, %v402
        %v404 = vpop.f32.mrb[0].mxu0
        %405 = vmatprep.mubr.bf16.mxu0 0
        %406 = vmatmul.mubr.bf16.gmra.mrb[0].mxu0 %v330
        %v407 = vpop.f32.mrb[0].mxu0
        %v408 = vadd.f32 0.0, %v407
        %v409 = vpop.f32.mrb[0].mxu0
        %v410 = vpop.f32.mrb[0].mxu0
        %v411 = vadd.f32 0.0, %v410
        %v412 = vpop.f32.mrb[0].mxu0
        %413 = vmatprep.mubr.bf16.mxu0 0
        %414 = vmatmul.mubr.bf16.gmra.mrb[0].mxu0 %v333
        %v415 = vpop.f32.mrb[0].mxu0
        %v416 = vadd.f32 0.0, %v415
        %v417 = vpop.f32.mrb[0].mxu0
        %v418 = vpop.f32.mrb[0].mxu0
        %v419 = vadd.f32 0.0, %v418
        %v420 = vpop.f32.mrb[0].mxu0
        %421 = vmatprep.mubr.bf16.mxu0 0
        %422 = vmatmul.mubr.bf16.gmra.mrb[0].mxu0 %v336
        %v423 = vpop.f32.mrb[0].mxu0
        %v424 = vadd.f32 0.0, %v423
        %v425 = vpop.f32.mrb[0].mxu0
        %v426 = vpop.f32.mrb[0].mxu0
        %v427 = vadd.f32 0.0, %v426
        %v428 = vpop.f32.mrb[0].mxu0
        %429 = vmatprep.mubr.bf16.mxu0 0
        %430 = vmatmul.mubr.bf16.gmra.mrb[0].mxu0 %v339
        %v431 = vpop.f32.mrb[0].mxu0
        %v432 = vadd.f32 0.0, %v431
        %v433 = vpop.f32.mrb[0].mxu0
        %v434 = vpop.f32.mrb[0].mxu0
        %v435 = vadd.f32 0.0, %v434
        %v436 = vpop.f32.mrb[0].mxu0
        %437 = vdwg.mxu0
        %438 = vst [vmem:[%s241] sm:$0xff] %v376
        %439 = vst [vmem:[%s241 + $0x8] sm:$0xff] %v379
        %440 = vst [vmem:[%s241 + $0x10] sm:$0xff] %v384
        %441 = vst [vmem:[%s241 + $0x18] sm:$0xff] %v387
        %442 = vst [vmem:[%s241 + $0x20] sm:$0xff] %v392
        %443 = vst [vmem:[%s241 + $0x28] sm:$0xff] %v395
        %444 = vst [vmem:[%s241 + $0x30] sm:$0xff] %v400
        %445 = vst [vmem:[%s241 + $0x38] sm:$0xff] %v403
        %446 = vst [vmem:[%s241 + $0x40] sm:$0xff] %v408
        %447 = vst [vmem:[%s241 + $0x48] sm:$0xff] %v411
        %448 = vst [vmem:[%s241 + $0x50] sm:$0xff] %v416
        %449 = vst [vmem:[%s241 + $0x58] sm:$0xff] %v419
        %450 = vst [vmem:[%s241 + $0x60] sm:$0xff] %v424
        %451 = vst [vmem:[%s241 + $0x68] sm:$0xff] %v427
        %452 = vst [vmem:[%s241 + $0x70] sm:$0xff] %v432
        %453 = vst [vmem:[%s241 + $0x78] sm:$0xff] %v435
        %v454 = vadd.f32 %v376, %v379
        %v455 = vadd.f32 %v454, %v384
        %v456 = vadd.f32 %v455, %v387
        %v457 = vadd.f32 %v456, %v392
        %v458 = vadd.f32 %v457, %v395
        %v459 = vadd.f32 %v458, %v400
        %v460 = vadd.f32 %v459, %v403
        %v461 = vadd.f32 %v460, %v408
        %v462 = vadd.f32 %v461, %v411
        %v463 = vadd.f32 %v462, %v416
        %v464 = vadd.f32 %v463, %v419
        %v465 = vadd.f32 %v464, %v424
        %v466 = vadd.f32 %v465, %v427
        %v467 = vadd.f32 %v466, %v432
        %v468 = vadd.f32 %v467, %v435
        %v469 = vrot.slane %v468, 4
        %v470 = vadd.f32 %v468, %v469
        %v471 = vrot.slane %v470, 2
        %v472 = vadd.f32 %v470, %v471
        %v473 = vrot.slane %v472, 1
        %v474 = vadd.f32 %v472, %v473
        %v475 = vmul.f32 %v376, %v376
        %v476 = vmul.f32 %v379, %v379
        %v477 = vmul.f32 %v384, %v384
        %v478 = vmul.f32 %v387, %v387
        %v479 = vmul.f32 %v392, %v392
        %v480 = vmul.f32 %v395, %v395
        %v481 = vmul.f32 %v400, %v400
        %v482 = vmul.f32 %v403, %v403
        %v483 = vmul.f32 %v408, %v408
        %v484 = vmul.f32 %v411, %v411
        %v485 = vmul.f32 %v416, %v416
        %v486 = vmul.f32 %v419, %v419
        %v487 = vmul.f32 %v424, %v424
        %v488 = vmul.f32 %v427, %v427
        %v489 = vmul.f32 %v432, %v432
        %v490 = vmul.f32 %v435, %v435
        %v491 = vadd.f32 %v475, %v476
        %v492 = vadd.f32 %v491, %v477
        %v493 = vadd.f32 %v492, %v478
        %v494 = vadd.f32 %v493, %v479
        %v495 = vadd.f32 %v494, %v480
        %v496 = vadd.f32 %v495, %v481
        %v497 = vadd.f32 %v496, %v482
        %v498 = vadd.f32 %v497, %v483
        %v499 = vadd.f32 %v498, %v484
        %v500 = vadd.f32 %v499, %v485
        %v501 = vadd.f32 %v500, %v486
        %v502 = vadd.f32 %v501, %v487
        %v503 = vadd.f32 %v502, %v488
        %v504 = vadd.f32 %v503, %v489
        %v505 = vadd.f32 %v504, %v490
        %v506 = vrot.slane %v505, 4
        %v507 = vadd.f32 %v505, %v506
        %v508 = vrot.slane %v507, 2
        %v509 = vadd.f32 %v507, %v508
        %v510 = vrot.slane %v509, 1
        %v511 = vadd.f32 %v509, %v510
        %vm512 = vcmask 1040384
        %v513 = vsel %vm512, %v474, %v511
        %514 = vst [vmem:[%s217] sm:$0x3] %v513
        %s515 = smul.u32 16, %s23
        %p516 = scmp.lt.s32.totalorder %s22, 3
        %s517 = scalar_select %p516, %s22, 3
        %p518 = scmp.lt.s32.totalorder %s515, 15
        %s519 = scalar_select %p518, %s515, 15
        %s520 = smul.addr %s517, 16
        %s521 = sadd.s32 %s519, %s520
        %s522 = smul.addr %s521, 8
        %s523 = scalar_lea.vmem %s2, %s522
        %s524 = sand.u32 %s122, 1
        %s525 = scalar_lea.sflag [#allocation3], %s524
        %s526 = sand.u32 %s122, 1
        %s527 = smul.addr %s526, 2
        %s528 = scalar_lea.vmem [#allocation2], %s527
        // Predicated region
        $region29: #{forward.14} parent=27 // pred_check
          %p529 = pneg %p104
        $region30: #{forward.14} parent=27 // pred_check_branch
          %531 = sbr.rel (%p529) target = $region32
        $region31: #{forward.14} parent=27 // pred_region
          %s532 = smul.u32 16, %s23
        $region32: #{forward.14} parent=27 // pred_fallthru
          _
        // Predicated region
        $region33: #{forward.14} parent=27 // pred_check
          %p533 = pneg %p132
        $region34: #{forward.14} parent=27 // pred_check_branch
          %535 = sbr.rel (%p533) target = $region36
        $region35: #{forward.14} parent=27 // pred_region
          %s537 = ssub.s32 32, 32
          %538 = vsyncadd %s525, %s537
          %s539 = sadd.s32 %s23, %s22
          %s540 = smul.addr %s539, 32
          %s541 = scalar_lea.hbm %s3, %s540
          %s543 = sshll.u32 %s528, 4
          %s544 = int_to_ptr.vmem [resolvable:$true] %s543
          %546 = dma.vmem_to_hbm [thread:$0]  %s544, 32, %s541, %s525
        $region36: #{forward.14} parent=27 // pred_fallthru
          _
      $region28: #{forward.14} parent=5 // pred_fallthru
        _
      %p547 = scmp.le.s32.totalorder 2, %s13
      // Predicated region
      $region37: #{forward.14} parent=5 // pred_check
        %p548 = pneg %p547
      $region38: #{forward.14} parent=5 // pred_check_branch
        %550 = sbr.rel (%p548) target = $region40
      $region39: #{forward.14} parent=5 // pred_region
        %s551 = ssub.s32 %s13, 2
        // Predicated region
        $region41: #{forward.14} parent=39 // pred_check
          %p552 = pneg %p110
        $region42: #{forward.14} parent=39 // pred_check_branch
          %554 = sbr.rel (%p552) target = $region44
        $region43: #{forward.14} parent=39 // pred_region
          %s555 = smul.u32 16, %s25
          %p556 = scmp.lt.s32.totalorder %s24, 3
          %s557 = scalar_select %p556, %s24, 3
          %p558 = scmp.lt.s32.totalorder %s555, 15
          %s559 = scalar_select %p558, %s555, 15
          %s560 = smul.addr %s557, 16
          %s561 = sadd.s32 %s559, %s560
          %s562 = smul.addr %s561, 8
          %s563 = scalar_lea.vmem %s2, %s562
        $region44: #{forward.14} parent=39 // pred_fallthru
          _
        // Predicated region
        $region45: #{forward.14} parent=39 // pred_check
          %p564 = pneg %p138
        $region46: #{forward.14} parent=39 // pred_check_branch
          %566 = sbr.rel (%p564) target = $region48
        $region47: #{forward.14} parent=39 // pred_region
          %s567 = sand.u32 %s123, 1
          %s568 = scalar_lea.sflag [#allocation3], %s567
          %s569 = sand.u32 %s123, 1
          %s570 = smul.addr %s569, 2
          %s571 = scalar_lea.vmem [#allocation2], %s570
          %572 = dma.done %s568, 32
        $region48: #{forward.14} parent=39 // pred_fallthru
          _
      $region40: #{forward.14} parent=5 // pred_fallthru
        _
    $region6: #{forward.14} parent=1 // loop_footer
      %s17 = sadd.s32 1, %s13
    $region7: #{forward.14} parent=1 // loop_footer_branch
      %12 = sbr.rel target = $region3
    $region8: #{forward.14} parent=1 // loop_exit
      _
    %573 = vsyncpa [#allocation3], 1
    %s574 = scalar_lea.sflag [#allocation3], 1
    %575 = vsyncpa %s574, 1

// kernel: forward.15
$region0: #{forward.15}
  #allocation0 [shape = 'u32[]', space=smem, size = 0x4, offset = 0x4, fixed_abs, tag = 'smem constant byte address 0x4 - core index']
  #allocation1 [shape = 'u32[144,128]{1,0:T(1,128)}', space=vmem, size = 0x12000, scoped, tag = 'internal scratch']
  %s0 = inlined_call_operand.vmem [shape: f32[4,128,128], index: 0, kind: input, shape index: {}]
  %s1 = inlined_call_operand.vmem [shape: f32[1,128], index: 1, kind: input, shape index: {}]
  %s2 = inlined_call_operand.vmem [shape: f32[1,128], index: 2, kind: input, shape index: {}]
  %s3 = inlined_call_operand.vmem [shape: f32[4,128,128], index: 3, kind: output, shape index: {}]
  %s4 = sld [smem:[#allocation0]]
  $region45: #{forward.15} parent=0
    _
  %s6 = ssub.s32 1, %s4
  %s7 = scalar_select 0, %s6, %s4
  loop: start=0, step=1, limit=6
  $region2: #{forward.15} parent=0 // loop_pre_header
    _
  $region3: #{forward.15} parent=0 // loop_header
    %s9 = sphi 0, %s13
    %p10 = scmp.ge.s32.totalorder %s9, 6
    %s16 = sphi 0, %s28
    %s17 = sphi 0, %s24
    %s18 = sphi 0, %s16
    %s19 = sphi 0, %s17
    %s20 = sphi 0, %s18
    %s21 = sphi 0, %s19
    %s33 = sphi 0, %s35
    %s36 = sphi 0, %s33
    %s37 = sphi 0, %s36
    %s53 = sphi 0, %s37
    %s57 = sphi 0, %s57
    %s59 = sphi 0, %s57
    %s60 = sphi 0, %s59
    %s74 = sphi 0, %s60
    %s78 = sphi 0, %s78
    %s80 = sphi 0, %s78
    %s81 = sphi 0, %s80
    %s95 = sphi 0, %s81
    %s103 = sphi 0, %s105
    %s106 = sphi 0, %s103
    %s107 = sphi 0, %s106
    %s123 = sphi 0, %s107
  $region4: #{forward.15} parent=0 // loop_header_branch
    %12 = sbr.rel (%p10) target = $region8
  $region5: #{forward.15} parent=0 // loop_body
    %s14 = ssub.s32 %s9, 1
    %s15 = ssub.s32 %s9, 2
    %s22 = sadd.s32 1, %s17
    %p23 = scmp.ge.s32.totalorder %s22, 1
    %s24 = scalar_select %p23, 0, %s22
    %s25 = sadd.s32 1, %s16
    %s26 = scalar_select %p23, %s25, %s16
    %p27 = scmp.ge.s32.totalorder %s26, 4
    %s28 = scalar_select %p27, 0, %s26
    %s29 = ssub.s32 %s16, %s28
    %s30 = ssub.s32 %s17, %s24
    %s31 = sor.u32 %s29, %s30
    %p32 = scmp.eq.s32.totalorder %s31, 0
    %s34 = sadd.s32 %s33, 1
    %s35 = scalar_select %p32, %s33, %s34
    %p38 = pneg %p32
    %p39 = scmp.eq.s32.totalorder %s9, 3
    %p40 = por %p38, %p39
    %p41 = scmp.ne.s32.totalorder %s33, %s36
    %p42 = scmp.eq.s32.totalorder %s9, 0
    %p43 = por %p41, %p42
    %p44 = scmp.ne.s32.totalorder %s33, %s36
    %p45 = scmp.eq.s32.totalorder %s14, 3
    %p46 = por %p44, %p45
    %p47 = scmp.ne.s32.totalorder %s36, %s37
    %p48 = scmp.eq.s32.totalorder %s14, 0
    %p49 = por %p47, %p48
    %p50 = scmp.ne.s32.totalorder %s36, %s37
    %p51 = scmp.eq.s32.totalorder %s15, 3
    %p52 = por %p50, %p51
    %p54 = scmp.ne.s32.totalorder %s37, %s53
    %p55 = scmp.eq.s32.totalorder %s15, 0
    %p56 = por %p54, %p55
    %s58 = sadd.s32 %s57, 1
    %p61 = scmp.eq.s32.totalorder %s9, 3
    %p62 = scmp.ne.s32.totalorder %s57, %s59
    %p63 = scmp.eq.s32.totalorder %s9, 0
    %p64 = por %p62, %p63
    %p65 = scmp.ne.s32.totalorder %s57, %s59
    %p66 = scmp.eq.s32.totalorder %s14, 3
    %p67 = por %p65, %p66
    %p68 = scmp.ne.s32.totalorder %s59, %s60
    %p69 = scmp.eq.s32.totalorder %s14, 0
    %p70 = por %p68, %p69
    %p71 = scmp.ne.s32.totalorder %s59, %s60
    %p72 = scmp.eq.s32.totalorder %s15, 3
    %p73 = por %p71, %p72
    %p75 = scmp.ne.s32.totalorder %s60, %s74
    %p76 = scmp.eq.s32.totalorder %s15, 0
    %p77 = por %p75, %p76
    %s79 = sadd.s32 %s78, 1
    %p82 = scmp.eq.s32.totalorder %s9, 3
    %p83 = scmp.ne.s32.totalorder %s78, %s80
    %p84 = scmp.eq.s32.totalorder %s9, 0
    %p85 = por %p83, %p84
    %p86 = scmp.ne.s32.totalorder %s78, %s80
    %p87 = scmp.eq.s32.totalorder %s14, 3
    %p88 = por %p86, %p87
    %p89 = scmp.ne.s32.totalorder %s80, %s81
    %p90 = scmp.eq.s32.totalorder %s14, 0
    %p91 = por %p89, %p90
    %p92 = scmp.ne.s32.totalorder %s80, %s81
    %p93 = scmp.eq.s32.totalorder %s15, 3
    %p94 = por %p92, %p93
    %p96 = scmp.ne.s32.totalorder %s81, %s95
    %p97 = scmp.eq.s32.totalorder %s15, 0
    %p98 = por %p96, %p97
    %s99 = ssub.s32 %s16, %s28
    %s100 = ssub.s32 %s17, %s24
    %s101 = sor.u32 %s99, %s100
    %p102 = scmp.eq.s32.totalorder %s101, 0
    %s104 = sadd.s32 %s103, 1
    %s105 = scalar_select %p102, %s103, %s104
    %p108 = pneg %p102
    %p109 = scmp.eq.s32.totalorder %s9, 3
    %p110 = por %p108, %p109
    %p111 = scmp.ne.s32.totalorder %s103, %s106
    %p112 = scmp.eq.s32.totalorder %s9, 0
    %p113 = por %p111, %p112
    %p114 = scmp.ne.s32.totalorder %s103, %s106
    %p115 = scmp.eq.s32.totalorder %s14, 3
    %p116 = por %p114, %p115
    %p117 = scmp.ne.s32.totalorder %s106, %s107
    %p118 = scmp.eq.s32.totalorder %s14, 0
    %p119 = por %p117, %p118
    %p120 = scmp.ne.s32.totalorder %s106, %s107
    %p121 = scmp.eq.s32.totalorder %s15, 3
    %p122 = por %p120, %p121
    %p124 = scmp.ne.s32.totalorder %s107, %s123
    %p125 = scmp.eq.s32.totalorder %s15, 0
    %p126 = por %p124, %p125
    %p127 = scmp.le.s32.totalorder 1, %s9
    %p128 = scmp.lt.s32.totalorder %s9, 5
    %p129 = pnand %p127, %p128
    %p130 = pneg %p129
    // Predicated region
    $region9: #{forward.15} parent=5 // pred_check
      _
    $region10: #{forward.15} parent=5 // pred_check_branch
      %132 = sbr.rel (%p129) target = $region12
    $region11: #{forward.15} parent=5 // pred_region
      %s133 = ssub.s32 %s9, 1
      // Predicated region
      $region13: #{forward.15} parent=11 // pred_check
        %p134 = pneg %p70
      $region14: #{forward.15} parent=11 // pred_check_branch
        %136 = sbr.rel (%p134) target = $region16
      $region15: #{forward.15} parent=11 // pred_region
        _
      $region16: #{forward.15} parent=11 // pred_fallthru
        _
      // Predicated region
      $region17: #{forward.15} parent=11 // pred_check
        %p137 = pneg %p91
      $region18: #{forward.15} parent=11 // pred_check_branch
        %139 = sbr.rel (%p137) target = $region20
      $region19: #{forward.15} parent=11 // pred_region
        _
      $region20: #{forward.15} parent=11 // pred_fallthru
        _
    $region12: #{forward.15} parent=5 // pred_fallthru
      _
    %p140 = scmp.lt.s32.totalorder %s9, 4
    // Predicated region
    $region21: #{forward.15} parent=5 // pred_check
      %p141 = pneg %p140
    $region22: #{forward.15} parent=5 // pred_check_branch
      %143 = sbr.rel (%p141) target = $region24
    $region23: #{forward.15} parent=5 // pred_region
      // Predicated region
      $region25: #{forward.15} parent=23 // pred_check
        %p144 = pneg %p43
      $region26: #{forward.15} parent=23 // pred_check_branch
        %146 = sbr.rel (%p144) target = $region28
      $region27: #{forward.15} parent=23 // pred_region
        %s147 = smul.u32 16, %s17
        %p148 = scmp.lt.s32.totalorder %s16, 3
        %s149 = scalar_select %p148, %s16, 3
        %p150 = scmp.lt.s32.totalorder %s147, 15
        %s151 = scalar_select %p150, %s147, 15
        %s152 = smul.addr %s149, 16
        %s153 = sadd.s32 %s151, %s152
        %s154 = smul.addr %s153, 8
        %s155 = scalar_lea.vmem %s0, %s154
        %s156 = smul.u32 16, %s17
      $region28: #{forward.15} parent=23 // pred_fallthru
        _
    $region24: #{forward.15} parent=5 // pred_fallthru
      _
    %p157 = scmp.le.s32.totalorder 1, %s9
    %p158 = scmp.lt.s32.totalorder %s9, 5
    %p159 = pnand %p157, %p158
    %p160 = pneg %p159
    // Predicated region
    $region29: #{forward.15} parent=5 // pred_check
      _
    $region30: #{forward.15} parent=5 // pred_check_branch
      %162 = sbr.rel (%p159) target = $region32
    $region31: #{forward.15} parent=5 // pred_region
      %s163 = ssub.s32 %s9, 1
      %s164 = smul.u32 16, %s19
      %p165 = scmp.lt.s32.totalorder %s18, 3
      %s166 = scalar_select %p165, %s18, 3
      %p167 = scmp.lt.s32.totalorder %s164, 15
      %s168 = scalar_select %p167, %s164, 15
      %s169 = smul.addr %s166, 16
      %s170 = sadd.s32 %s168, %s169
      %s171 = smul.addr %s170, 8
      %s172 = scalar_lea.vmem %s0, %s171
      %p173 = pneg %p49
      %p174 = pneg %p46
      %p175 = pneg %p70
      %p176 = pneg %p67
      %p177 = pneg %p91
      %p178 = pneg %p88
      %p179 = pneg %p119
      %p180 = pneg %p116
      %s181 = smul.u32 16, %s19
      %p182 = scmp.lt.s32.totalorder %s18, 3
      %s183 = scalar_select %p182, %s18, 3
      %p184 = scmp.lt.s32.totalorder %s181, 15
      %s185 = scalar_select %p184, %s181, 15
      %s186 = smul.addr %s183, 16
      %s187 = sadd.s32 %s185, %s186
      %s188 = smul.addr %s187, 8
      %s189 = scalar_lea.vmem %s3, %s188
      %s190 = smul.u32 16, %s19
      %p191 = scmp.lt.s32.totalorder %s18, 3
      %s192 = scalar_select %p191, %s18, 3
      %p193 = scmp.lt.s32.totalorder %s190, 15
      %s194 = scalar_select %p193, %s190, 15
      %s195 = smul.addr %s192, 16
      %s196 = sadd.s32 %s194, %s195
      %s197 = smul.addr %s196, 8
      %s198 = scalar_lea.vmem %s0, %s197
      %s199 = smul.u32 16, %s19
      %s200 = smul.u32 16, %s19
      %p201 = scmp.lt.s32.totalorder %s18, 3
      %s202 = scalar_select %p201, %s18, 3
      %p203 = scmp.lt.s32.totalorder %s200, 15
      %s204 = scalar_select %p203, %s200, 15
      %s205 = smul.addr %s202, 16
      %s206 = sadd.s32 %s204, %s205
      %s207 = smul.addr %s206, 8
      %s208 = scalar_lea.vmem %s3, %s207
      %s209 = smul.u32 16, %s19
      %v210 = vld [vmem:[%s198] sm:$0xff]
      %v211 = vld [vmem:[%s198 + $0x8] sm:$0xff]
      %v212 = vld [vmem:[%s198 + $0x10] sm:$0xff]
      %v213 = vld [vmem:[%s198 + $0x18] sm:$0xff]
      %v214 = vld [vmem:[%s198 + $0x20] sm:$0xff]
      %v215 = vld [vmem:[%s198 + $0x28] sm:$0xff]
      %v216 = vld [vmem:[%s198 + $0x30] sm:$0xff]
      %v217 = vld [vmem:[%s198 + $0x38] sm:$0xff]
      %v218 = vld [vmem:[%s198 + $0x40] sm:$0xff]
      %v219 = vld [vmem:[%s198 + $0x48] sm:$0xff]
      %v220 = vld [vmem:[%s198 + $0x50] sm:$0xff]
      %v221 = vld [vmem:[%s198 + $0x58] sm:$0xff]
      %v222 = vld [vmem:[%s198 + $0x60] sm:$0xff]
      %v223 = vld [vmem:[%s198 + $0x68] sm:$0xff]
      %v224 = vld [vmem:[%s198 + $0x70] sm:$0xff]
      %v225 = vld [vmem:[%s198 + $0x78] sm:$0xff]
      %v226 = vld [vmem:[%s1] sm:$0x1]
      %v228 = vlaneseq
      %v229 = vshrl.u32 %v228, 7
      %v230 = vsub.s32 0, %v229
      %v231 = vrot.slane %v226, %v230
      %v233 = vmul.f32 %v210, %v231
      %v234 = vmul.f32 %v211, %v231
      %v235 = vmul.f32 %v212, %v231
      %v236 = vmul.f32 %v213, %v231
      %v237 = vmul.f32 %v214, %v231
      %v238 = vmul.f32 %v215, %v231
      %v239 = vmul.f32 %v216, %v231
      %v240 = vmul.f32 %v217, %v231
      %v241 = vmul.f32 %v218, %v231
      %v242 = vmul.f32 %v219, %v231
      %v243 = vmul.f32 %v220, %v231
      %v244 = vmul.f32 %v221, %v231
      %v245 = vmul.f32 %v222, %v231
      %v246 = vmul.f32 %v223, %v231
      %v247 = vmul.f32 %v224, %v231
      %v248 = vmul.f32 %v225, %v231
      %v249 = vld [vmem:[%s2] sm:$0x1]
      %v251 = vlaneseq
      %v252 = vshrl.u32 %v251, 7
      %v253 = vsub.s32 0, %v252
      %v254 = vrot.slane %v249, %v253
      %v256 = vadd.f32 %v233, %v254
      %v257 = vadd.f32 %v234, %v254
      %v258 = vadd.f32 %v235, %v254
      %v259 = vadd.f32 %v236, %v254
      %v260 = vadd.f32 %v237, %v254
      %v261 = vadd.f32 %v238, %v254
      %v262 = vadd.f32 %v239, %v254
      %v263 = vadd.f32 %v240, %v254
      %v264 = vadd.f32 %v241, %v254
      %v265 = vadd.f32 %v242, %v254
      %v266 = vadd.f32 %v243, %v254
      %v267 = vadd.f32 %v244, %v254
      %v268 = vadd.f32 %v245, %v254
      %v269 = vadd.f32 %v246, %v254
      %v270 = vadd.f32 %v247, %v254
      %v271 = vadd.f32 %v248, %v254
      %v272 = vtanh.pop %v256
      %v273 = vtanh.pop %v257
      %v274 = vtanh.pop %v258
      %v275 = vtanh.pop %v259
      %v276 = vtanh.pop %v260
      %v277 = vtanh.pop %v261
      %v278 = vtanh.pop %v262
      %v279 = vtanh.pop %v263
      %v280 = vtanh.pop %v264
      %v281 = vtanh.pop %v265
      %v282 = vtanh.pop %v266
      %v283 = vtanh.pop %v267
      %v284 = vtanh.pop %v268
      %v285 = vtanh.pop %v269
      %v286 = vtanh.pop %v270
      %v287 = vtanh.pop %v271
      %288 = vst [vmem:[%s208] sm:$0xff] %v272
      %289 = vst [vmem:[%s208 + $0x8] sm:$0xff] %v273
      %290 = vst [vmem:[%s208 + $0x10] sm:$0xff] %v274
      %291 = vst [vmem:[%s208 + $0x18] sm:$0xff] %v275
      %292 = vst [vmem:[%s208 + $0x20] sm:$0xff] %v276
      %293 = vst [vmem:[%s208 + $0x28] sm:$0xff] %v277
      %294 = vst [vmem:[%s208 + $0x30] sm:$0xff] %v278
      %295 = vst [vmem:[%s208 + $0x38] sm:$0xff] %v279
      %296 = vst [vmem:[%s208 + $0x40] sm:$0xff] %v280
      %297 = vst [vmem:[%s208 + $0x48] sm:$0xff] %v281
      %298 = vst [vmem:[%s208 + $0x50] sm:$0xff] %v282
      %299 = vst [vmem:[%s208 + $0x58] sm:$0xff] %v283
      %300 = vst [vmem:[%s208 + $0x60] sm:$0xff] %v284
      %301 = vst [vmem:[%s208 + $0x68] sm:$0xff] %v285
      %302 = vst [vmem:[%s208 + $0x70] sm:$0xff] %v286
      %303 = vst [vmem:[%s208 + $0x78] sm:$0xff] %v287
      %s304 = smul.u32 16, %s19
      %p305 = scmp.lt.s32.totalorder %s18, 3
      %s306 = scalar_select %p305, %s18, 3
      %p307 = scmp.lt.s32.totalorder %s304, 15
      %s308 = scalar_select %p307, %s304, 15
      %s309 = smul.addr %s306, 16
      %s310 = sadd.s32 %s308, %s309
      %s311 = smul.addr %s310, 8
      %s312 = scalar_lea.vmem %s3, %s311
      // Predicated region
      $region33: #{forward.15} parent=31 // pred_check
        %p313 = pneg %p116
      $region34: #{forward.15} parent=31 // pred_check_branch
        %315 = sbr.rel (%p313) target = $region36
      $region35: #{forward.15} parent=31 // pred_region
        %s316 = smul.u32 16, %s19
      $region36: #{forward.15} parent=31 // pred_fallthru
        _
    $region32: #{forward.15} parent=5 // pred_fallthru
      _
    %p317 = scmp.le.s32.totalorder 2, %s9
    // Predicated region
    $region37: #{forward.15} parent=5 // pred_check
      %p318 = pneg %p317
    $region38: #{forward.15} parent=5 // pred_check_branch
      %320 = sbr.rel (%p318) target = $region40
    $region39: #{forward.15} parent=5 // pred_region
      %s321 = ssub.s32 %s9, 2
      // Predicated region
      $region41: #{forward.15} parent=39 // pred_check
        %p322 = pneg %p122
      $region42: #{forward.15} parent=39 // pred_check_branch
        %324 = sbr.rel (%p322) target = $region44
      $region43: #{forward.15} parent=39 // pred_region
        %s325 = smul.u32 16, %s21
        %p326 = scmp.lt.s32.totalorder %s20, 3
        %s327 = scalar_select %p326, %s20, 3
        %p328 = scmp.lt.s32.totalorder %s325, 15
        %s329 = scalar_select %p328, %s325, 15
        %s330 = smul.addr %s327, 16
        %s331 = sadd.s32 %s329, %s330
        %s332 = smul.addr %s331, 8
        %s333 = scalar_lea.vmem %s3, %s332
      $region44: #{forward.15} parent=39 // pred_fallthru
        _
    $region40: #{forward.15} parent=5 // pred_fallthru
      _
  $region6: #{forward.15} parent=0 // loop_footer
    %s13 = sadd.s32 1, %s9
  $region7: #{forward.15} parent=0 // loop_footer_branch
    %8 = sbr.rel target = $region3
  $region8: #{forward.15} parent=0 // loop_exit
    _

</llo_original>
